<compile_context>
chip_gen: v6e
topology: v6e:2x2x1
jax: 0.10.0
libtpu: 0.0.40
codegen_flags: <defaults>
</compile_context>

<pallas_src>
import functools

import jax
import jax.numpy as jnp
from jax.experimental import pallas as pl
from jax.experimental.pallas import tpu as pltpu

D_IN = 2
H1, H2, H3 = 256, 1024, 256
D_OUT = 4
OUT_PAD = 128          # lane-dense padded output width
TILE_B = 256           # multiple of 128 (v5e MXU rows) and of 256 (v6e/v7x MXU rows... 256 ok)


def _dora_mlp_kernel(x_ref,
                     w1_ref, b1_ref,
                     w2_ref, b2_ref,
                     w3_ref, b3_ref,
                     w4_ref, b4_ref,
                     o_ref):
    # x: (TILE_B, 2) f32
    x = x_ref[...]

    # --- Layer 1 (K=2): VPU broadcast-FMA, skip the MXU entirely (f32). ---
    h = (x[:, 0:1] * w1_ref[0:1, :]
         + x[:, 1:2] * w1_ref[1:2, :]
         + b1_ref[...])
    h = jnp.maximum(h, 0.0)

    # --- Layers 2-4: bf16 operands on the MXU, f32 accumulate, f32 bias/ReLU. ---
    h = jnp.dot(h.astype(jnp.bfloat16), w2_ref[...],
                preferred_element_type=jnp.float32) + b2_ref[...]
    h = jnp.maximum(h, 0.0)

    h = jnp.dot(h.astype(jnp.bfloat16), w3_ref[...],
                preferred_element_type=jnp.float32) + b3_ref[...]
    h = jnp.maximum(h, 0.0)

    out = jnp.dot(h.astype(jnp.bfloat16), w4_ref[...],
                  preferred_element_type=jnp.float32) + b4_ref[...]

    # Lane-dense (128-wide) unmasked store.
    o_ref[...] = out.astype(o_ref.dtype)


@functools.partial(jax.jit, static_argnames=("tile_b",))
def dora_net_forward(pos, params, *, tile_b=TILE_B):
    """pos: (B, 2) float32. Returns pathloss: (B, 4) float32."""
    (w1, b1), (w2, b2), (w3, b3), (w4, b4) = params
    B = pos.shape[0]

    # Zero-pad the last layer to 128 output features (lane-dense store), bf16 weights for MXU.
    w4p = jnp.zeros((H3, OUT_PAD), jnp.float32).at[:, :D_OUT].set(w4)
    b4p = jnp.zeros((1, OUT_PAD), jnp.float32).at[:, :D_OUT].set(b4)
    w2b = w2.astype(jnp.bfloat16)
    w3b = w3.astype(jnp.bfloat16)
    w4b = w4p.astype(jnp.bfloat16)

    # Pad batch up to a multiple of the tile; padded rows are discarded afterwards.
    n_tiles = pl.cdiv(B, tile_b)
    b_pad = n_tiles * tile_b
    if b_pad != B:
        pos = jnp.pad(pos, ((0, b_pad - B), (0, 0)))

    const2d = lambda i: (0, 0)   # weights/biases: same block every step -> VMEM resident

    flops = 2 * b_pad * (D_IN * H1 + H1 * H2 + H2 * H3 + H3 * OUT_PAD)
    bytes_accessed = (pos.size * 4
                      + w1.size * 4 + b1.size * 4
                      + w2b.size * 2 + b2.size * 4
                      + w3b.size * 2 + b3.size * 4
                      + w4b.size * 2 + b4p.size * 4
                      + b_pad * OUT_PAD * 4)

    out = pl.pallas_call(
        _dora_mlp_kernel,
        out_shape=jax.ShapeDtypeStruct((b_pad, OUT_PAD), jnp.float32),
        grid=(n_tiles,),
        in_specs=[
            pl.BlockSpec((tile_b, D_IN), lambda i: (i, 0)),        # x tile (pipelined)
            pl.BlockSpec((D_IN, H1), const2d),                     # w1 (f32, VPU path)
            pl.BlockSpec((1, H1), const2d),                        # b1
            pl.BlockSpec((H1, H2), const2d),                       # w2 (bf16)
            pl.BlockSpec((1, H2), const2d),                        # b2
            pl.BlockSpec((H2, H3), const2d),                       # w3 (bf16)
            pl.BlockSpec((1, H3), const2d),                        # b3
            pl.BlockSpec((H3, OUT_PAD), const2d),                  # w4 (bf16, padded)
            pl.BlockSpec((1, OUT_PAD), const2d),                   # b4 (padded)
        ],
        out_specs=pl.BlockSpec((tile_b, OUT_PAD), lambda i: (i, 0)),
        compiler_params=pltpu.CompilerParams(
            dimension_semantics=("parallel",),                      # 2x on v7x's two TCs
        ),
        cost_estimate=pl.CostEstimate(
            flops=flops, transcendentals=0, bytes_accessed=bytes_accessed),
    )(pos, w1, b1, w2b, b2, w3b, b3, w4b, b4p)

    return out[:B, :D_OUT]


def init_params(key):
    """Deterministic init matching nn.Linear shapes (weights stored transposed: (in, out))."""
    dims = [(D_IN, H1), (H1, H2), (H2, H3), (H3, D_OUT)]
    params = []
    for i, (fan_in, fan_out) in enumerate(dims):
        kw, kb = jax.random.split(jax.random.fold_in(key, i))
        bound = 1.0 / jnp.sqrt(fan_in)
        w = jax.random.uniform(kw, (fan_in, fan_out), jnp.float32, -bound, bound)
        b = jax.random.uniform(kb, (1, fan_out), jnp.float32, -bound, bound)
        params.append((w, b))
    return params


def dora_net_reference_f32(pos, params):
    """Pure f32 reference (matches the original PyTorch module numerics)."""
    h = pos
    for i, (w, b) in enumerate(params):
        h = h @ w + b
        if i < len(params) - 1:
            h = jnp.maximum(h, 0.0)
    return h


def dora_net_reference_matched(pos, params):
    """Reference with the same precision recipe as the kernel (bf16 MXU, f32 accumulate)."""
    (w1, b1), (w2, b2), (w3, b3), (w4, b4) = params
    h = pos[:, 0:1] * w1[0:1, :] + pos[:, 1:2] * w1[1:2, :] + b1
    h = jnp.maximum(h, 0.0)
    h = jnp.dot(h.astype(jnp.bfloat16), w2.astype(jnp.bfloat16),
                preferred_element_type=jnp.float32) + b2
    h = jnp.maximum(h, 0.0)
    h = jnp.dot(h.astype(jnp.bfloat16), w3.astype(jnp.bfloat16),
                preferred_element_type=jnp.float32) + b3
    h = jnp.maximum(h, 0.0)
    return jnp.dot(h.astype(jnp.bfloat16), w4.astype(jnp.bfloat16),
                   preferred_element_type=jnp.float32) + b4


if __name__ == "__main__":
    key = jax.random.PRNGKey(0)
    params = init_params(key)

    # Small batch of 2-D positions, as implied by Linear(2, ...).
    pos = jax.random.normal(jax.random.fold_in(key, 99), (8, 2), jnp.float32)

    out = dora_net_forward(pos, params)
    out = jax.block_until_ready(out)
    assert out.shape == (8, 4), out.shape

    # Tight check vs a precision-matched reference (bf16 MXU / f32 accumulate).
    ref_matched = dora_net_reference_matched(pos, params)
    assert jnp.allclose(out, ref_matched, atol=2e-3, rtol=2e-3), "mismatch vs matched reference"

    # Loose check vs the pure-f32 reference (bf16 weights -> ~1e-2 relative error budget).
    ref_f32 = dora_net_reference_f32(pos, params)
    assert jnp.allclose(out, ref_f32, atol=1e-1, rtol=1e-1), "mismatch vs f32 reference"

    print("KERNEL_OK")
</pallas_src>

<mosaic_0001>
module attributes {stable_mosaic.version = 11 : i64} {
  func.func @_dora_mlp_kernel(%arg0: i32, %arg1: memref<256x2xf32, #tpu.memory_space<vmem>>, %arg2: memref<2x256xf32, #tpu.memory_space<vmem>>, %arg3: memref<1x256xf32, #tpu.memory_space<vmem>>, %arg4: memref<256x1024xbf16, #tpu.memory_space<vmem>>, %arg5: memref<1x1024xf32, #tpu.memory_space<vmem>>, %arg6: memref<1024x256xbf16, #tpu.memory_space<vmem>>, %arg7: memref<1x256xf32, #tpu.memory_space<vmem>>, %arg8: memref<256x128xbf16, #tpu.memory_space<vmem>>, %arg9: memref<1x128xf32, #tpu.memory_space<vmem>>, %arg10: memref<256x128xf32, #tpu.memory_space<vmem>>) attributes {dimension_semantics = [#tpu.dimension_semantics<parallel>], iteration_bounds = array<i64: 1>, scalar_prefetch = 0 : i64, scratch_operands = 0 : i64, tpu.core_type = #tpu.core_type<tc>, window_params = [{transform_indices = @transform_0, window_bounds = array<i64: 256, 2>}, {pipeline_mode = #tpu.pipeline_mode<synchronous>, transform_indices = @transform_1, window_bounds = array<i64: 2, 256>}, {pipeline_mode = #tpu.pipeline_mode<synchronous>, transform_indices = @transform_2, window_bounds = array<i64: 1, 256>}, {pipeline_mode = #tpu.pipeline_mode<synchronous>, transform_indices = @transform_3, window_bounds = array<i64: 256, 1024>}, {pipeline_mode = #tpu.pipeline_mode<synchronous>, transform_indices = @transform_4, window_bounds = array<i64: 1, 1024>}, {pipeline_mode = #tpu.pipeline_mode<synchronous>, transform_indices = @transform_5, window_bounds = array<i64: 1024, 256>}, {pipeline_mode = #tpu.pipeline_mode<synchronous>, transform_indices = @transform_6, window_bounds = array<i64: 1, 256>}, {pipeline_mode = #tpu.pipeline_mode<synchronous>, transform_indices = @transform_7, window_bounds = array<i64: 256, 128>}, {pipeline_mode = #tpu.pipeline_mode<synchronous>, transform_indices = @transform_8, window_bounds = array<i64: 1, 128>}, {transform_indices = @transform_9, window_bounds = array<i64: 256, 128>}]} {
    %c0 = arith.constant 0 : index
    %c0_0 = arith.constant 0 : index
    %0 = vector.load %arg1[%c0, %c0_0] : memref<256x2xf32, #tpu.memory_space<vmem>>, vector<256x2xf32>
    %1 = vector.extract_strided_slice %0 {offsets = [0, 0], sizes = [256, 1], strides = [1, 1]} : vector<256x2xf32> to vector<256x1xf32>
    %c0_1 = arith.constant 0 : index
    %c0_2 = arith.constant 0 : index
    %2 = vector.load %arg2[%c0_1, %c0_2] : memref<2x256xf32, #tpu.memory_space<vmem>>, vector<1x256xf32>
    %3 = vector.broadcast %1 : vector<256x1xf32> to vector<256x256xf32>
    %4 = vector.broadcast %2 : vector<1x256xf32> to vector<256x256xf32>
    %5 = arith.mulf %3, %4 : vector<256x256xf32>
    %6 = vector.extract_strided_slice %0 {offsets = [0, 1], sizes = [256, 1], strides = [1, 1]} : vector<256x2xf32> to vector<256x1xf32>
    %c1 = arith.constant 1 : index
    %c0_3 = arith.constant 0 : index
    %7 = vector.load %arg2[%c1, %c0_3] : memref<2x256xf32, #tpu.memory_space<vmem>>, vector<1x256xf32>
    %8 = vector.broadcast %6 : vector<256x1xf32> to vector<256x256xf32>
    %9 = vector.broadcast %7 : vector<1x256xf32> to vector<256x256xf32>
    %10 = arith.mulf %8, %9 : vector<256x256xf32>
    %11 = arith.addf %5, %10 : vector<256x256xf32>
    %c0_4 = arith.constant 0 : index
    %c0_5 = arith.constant 0 : index
    %12 = vector.load %arg3[%c0_4, %c0_5] : memref<1x256xf32, #tpu.memory_space<vmem>>, vector<1x256xf32>
    %13 = vector.broadcast %12 : vector<1x256xf32> to vector<256x256xf32>
    %14 = arith.addf %11, %13 : vector<256x256xf32>
    %cst = arith.constant 0.000000e+00 : f32
    %15 = vector.broadcast %cst : f32 to vector<256x256xf32>
    %16 = arith.maximumf %14, %15 : vector<256x256xf32>
    %17 = arith.truncf %16 : vector<256x256xf32> to vector<256x256xbf16>
    %c0_6 = arith.constant 0 : index
    %c0_7 = arith.constant 0 : index
    %18 = vector.load %arg4[%c0_6, %c0_7] : memref<256x1024xbf16, #tpu.memory_space<vmem>>, vector<256x1024xbf16>
    %cst_8 = arith.constant dense<0.000000e+00> : vector<256x1024xf32>
    %19 = tpu.matmul %17, %18, %cst_8 {dimension_numbers = #tpu.dot_dimension_numbers<[1], [0], [0], [1], [0, 0, 1, 1], [], []>} : vector<256x256xbf16>, vector<256x1024xbf16>, vector<256x1024xf32> -> vector<256x1024xf32>
    %c0_9 = arith.constant 0 : index
    %c0_10 = arith.constant 0 : index
    %20 = vector.load %arg5[%c0_9, %c0_10] : memref<1x1024xf32, #tpu.memory_space<vmem>>, vector<1x1024xf32>
    %21 = vector.broadcast %20 : vector<1x1024xf32> to vector<256x1024xf32>
    %22 = arith.addf %19, %21 : vector<256x1024xf32>
    %cst_11 = arith.constant 0.000000e+00 : f32
    %23 = vector.broadcast %cst_11 : f32 to vector<256x1024xf32>
    %24 = arith.maximumf %22, %23 : vector<256x1024xf32>
    %25 = arith.truncf %24 : vector<256x1024xf32> to vector<256x1024xbf16>
    %c0_12 = arith.constant 0 : index
    %c0_13 = arith.constant 0 : index
    %26 = vector.load %arg6[%c0_12, %c0_13] : memref<1024x256xbf16, #tpu.memory_space<vmem>>, vector<1024x256xbf16>
    %cst_14 = arith.constant dense<0.000000e+00> : vector<256x256xf32>
    %27 = tpu.matmul %25, %26, %cst_14 {dimension_numbers = #tpu.dot_dimension_numbers<[1], [0], [0], [1], [0, 0, 1, 1], [], []>} : vector<256x1024xbf16>, vector<1024x256xbf16>, vector<256x256xf32> -> vector<256x256xf32>
    %c0_15 = arith.constant 0 : index
    %c0_16 = arith.constant 0 : index
    %28 = vector.load %arg7[%c0_15, %c0_16] : memref<1x256xf32, #tpu.memory_space<vmem>>, vector<1x256xf32>
    %29 = vector.broadcast %28 : vector<1x256xf32> to vector<256x256xf32>
    %30 = arith.addf %27, %29 : vector<256x256xf32>
    %cst_17 = arith.constant 0.000000e+00 : f32
    %31 = vector.broadcast %cst_17 : f32 to vector<256x256xf32>
    %32 = arith.maximumf %30, %31 : vector<256x256xf32>
    %33 = arith.truncf %32 : vector<256x256xf32> to vector<256x256xbf16>
    %c0_18 = arith.constant 0 : index
    %c0_19 = arith.constant 0 : index
    %34 = vector.load %arg8[%c0_18, %c0_19] : memref<256x128xbf16, #tpu.memory_space<vmem>>, vector<256x128xbf16>
    %cst_20 = arith.constant dense<0.000000e+00> : vector<256x128xf32>
    %35 = tpu.matmul %33, %34, %cst_20 {dimension_numbers = #tpu.dot_dimension_numbers<[1], [0], [0], [1], [0, 0, 1, 1], [], []>} : vector<256x256xbf16>, vector<256x128xbf16>, vector<256x128xf32> -> vector<256x128xf32>
    %c0_21 = arith.constant 0 : index
    %c0_22 = arith.constant 0 : index
    %36 = vector.load %arg9[%c0_21, %c0_22] : memref<1x128xf32, #tpu.memory_space<vmem>>, vector<1x128xf32>
    %37 = vector.broadcast %36 : vector<1x128xf32> to vector<256x128xf32>
    %38 = arith.addf %35, %37 : vector<256x128xf32>
    %c0_23 = arith.constant 0 : index
    %c0_24 = arith.constant 0 : index
    %39 = vector.load %arg10[%c0_23, %c0_24] : memref<256x128xf32, #tpu.memory_space<vmem>>, vector<256x128xf32>
    tpu.vector_store %arg10[%c0_23, %c0_24], %38 {strides = array<i32>} : memref<256x128xf32, #tpu.memory_space<vmem>>, vector<256x128xf32>,
    return
  }
  func.func @transform_0(%arg0: i32) -> (i32, i32) {
    %c0_i32 = arith.constant 0 : i32
    %c0_i32_0 = arith.constant 0 : i32
    return %arg0, %c0_i32 : i32, i32
  }
  func.func @transform_1(%arg0: i32) -> (i32, i32) {
    %c0_i32 = arith.constant 0 : i32
    %c0_i32_0 = arith.constant 0 : i32
    %c0_i32_1 = arith.constant 0 : i32
    return %c0_i32, %c0_i32_0 : i32, i32
  }
  func.func @transform_2(%arg0: i32) -> (i32, i32) {
    %c0_i32 = arith.constant 0 : i32
    %c0_i32_0 = arith.constant 0 : i32
    %c0_i32_1 = arith.constant 0 : i32
    return %c0_i32, %c0_i32_0 : i32, i32
  }
  func.func @transform_3(%arg0: i32) -> (i32, i32) {
    %c0_i32 = arith.constant 0 : i32
    %c0_i32_0 = arith.constant 0 : i32
    %c0_i32_1 = arith.constant 0 : i32
    return %c0_i32, %c0_i32_0 : i32, i32
  }
  func.func @transform_4(%arg0: i32) -> (i32, i32) {
    %c0_i32 = arith.constant 0 : i32
    %c0_i32_0 = arith.constant 0 : i32
    %c0_i32_1 = arith.constant 0 : i32
    return %c0_i32, %c0_i32_0 : i32, i32
  }
  func.func @transform_5(%arg0: i32) -> (i32, i32) {
    %c0_i32 = arith.constant 0 : i32
    %c0_i32_0 = arith.constant 0 : i32
    %c0_i32_1 = arith.constant 0 : i32
    return %c0_i32, %c0_i32_0 : i32, i32
  }
  func.func @transform_6(%arg0: i32) -> (i32, i32) {
    %c0_i32 = arith.constant 0 : i32
    %c0_i32_0 = arith.constant 0 : i32
    %c0_i32_1 = arith.constant 0 : i32
    return %c0_i32, %c0_i32_0 : i32, i32
  }
  func.func @transform_7(%arg0: i32) -> (i32, i32) {
    %c0_i32 = arith.constant 0 : i32
    %c0_i32_0 = arith.constant 0 : i32
    %c0_i32_1 = arith.constant 0 : i32
    return %c0_i32, %c0_i32_0 : i32, i32
  }
  func.func @transform_8(%arg0: i32) -> (i32, i32) {
    %c0_i32 = arith.constant 0 : i32
    %c0_i32_0 = arith.constant 0 : i32
    %c0_i32_1 = arith.constant 0 : i32
    return %c0_i32, %c0_i32_0 : i32, i32
  }
  func.func @transform_9(%arg0: i32) -> (i32, i32) {
    %c0_i32 = arith.constant 0 : i32
    %c0_i32_0 = arith.constant 0 : i32
    return %arg0, %c0_i32 : i32, i32
  }
}

</mosaic_0001>

<llo_original>
// kernel: dora_net_forward.1
$region0: #{dora_net_forward.1}
  #allocation0 [shape = 'u32[]', space=smem, size = 0x4, offset = 0x4, fixed_abs, tag = 'smem constant byte address 0x4 - core index']
  #allocation1 [shape = 'u32[144,128]{1,0:T(1,128)}', space=vmem, size = 0x12000, scoped, tag = 'internal scratch']
  %s0 = inlined_call_operand.vmem [shape: f32[256,2], index: 0, kind: input, shape index: {}]
  %s1 = inlined_call_operand.vmem [shape: f32[2,256], index: 1, kind: input, shape index: {}]
  %s2 = inlined_call_operand.vmem [shape: f32[1,256], index: 2, kind: input, shape index: {}]
  %s3 = inlined_call_operand.vmem [shape: bf16[256,1024], index: 3, kind: input, shape index: {}]
  %s4 = inlined_call_operand.vmem [shape: f32[1,1024], index: 4, kind: input, shape index: {}]
  %s5 = inlined_call_operand.vmem [shape: bf16[1024,256], index: 5, kind: input, shape index: {}]
  %s6 = inlined_call_operand.vmem [shape: f32[1,256], index: 6, kind: input, shape index: {}]
  %s7 = inlined_call_operand.vmem [shape: bf16[256,128], index: 7, kind: input, shape index: {}]
  %s8 = inlined_call_operand.vmem [shape: f32[1,128], index: 8, kind: input, shape index: {}]
  %s9 = inlined_call_operand.vmem [shape: f32[256,128], index: 9, kind: output, shape index: {}]
  %s10 = sld [smem:[#allocation0]]
  $region46: #{dora_net_forward.1} parent=0
    _
  %s12 = ssub.s32 1, %s10
  %s13 = scalar_select 0, %s12, %s10
  // Predicated region
  $region2: #{dora_net_forward.1} parent=0 // pred_check
    _
  $region3: #{dora_net_forward.1} parent=0 // pred_check_branch
    %15 = sbr.rel (0) target = $region5
  $region4: #{dora_net_forward.1} parent=0 // pred_region
    _
  $region5: #{dora_net_forward.1} parent=0 // pred_fallthru
    _
  // Predicated region
  $region6: #{dora_net_forward.1} parent=0 // pred_check
    _
  $region7: #{dora_net_forward.1} parent=0 // pred_check_branch
    %17 = sbr.rel (0) target = $region9
  $region8: #{dora_net_forward.1} parent=0 // pred_region
    _
  $region9: #{dora_net_forward.1} parent=0 // pred_fallthru
    _
  // Predicated region
  $region10: #{dora_net_forward.1} parent=0 // pred_check
    _
  $region11: #{dora_net_forward.1} parent=0 // pred_check_branch
    %19 = sbr.rel (0) target = $region13
  $region12: #{dora_net_forward.1} parent=0 // pred_region
    _
  $region13: #{dora_net_forward.1} parent=0 // pred_fallthru
    _
  // Predicated region
  $region14: #{dora_net_forward.1} parent=0 // pred_check
    _
  $region15: #{dora_net_forward.1} parent=0 // pred_check_branch
    %21 = sbr.rel (0) target = $region17
  $region16: #{dora_net_forward.1} parent=0 // pred_region
    _
  $region17: #{dora_net_forward.1} parent=0 // pred_fallthru
    _
  // Predicated region
  $region18: #{dora_net_forward.1} parent=0 // pred_check
    _
  $region19: #{dora_net_forward.1} parent=0 // pred_check_branch
    %23 = sbr.rel (0) target = $region21
  $region20: #{dora_net_forward.1} parent=0 // pred_region
    _
  $region21: #{dora_net_forward.1} parent=0 // pred_fallthru
    _
  // Predicated region
  $region22: #{dora_net_forward.1} parent=0 // pred_check
    _
  $region23: #{dora_net_forward.1} parent=0 // pred_check_branch
    %25 = sbr.rel (0) target = $region25
  $region24: #{dora_net_forward.1} parent=0 // pred_region
    _
  $region25: #{dora_net_forward.1} parent=0 // pred_fallthru
    _
  // Predicated region
  $region26: #{dora_net_forward.1} parent=0 // pred_check
    _
  $region27: #{dora_net_forward.1} parent=0 // pred_check_branch
    %27 = sbr.rel (0) target = $region29
  $region28: #{dora_net_forward.1} parent=0 // pred_region
    _
  $region29: #{dora_net_forward.1} parent=0 // pred_fallthru
    _
  // Predicated region
  $region30: #{dora_net_forward.1} parent=0 // pred_check
    _
  $region31: #{dora_net_forward.1} parent=0 // pred_check_branch
    %29 = sbr.rel (0) target = $region33
  $region32: #{dora_net_forward.1} parent=0 // pred_region
    _
  $region33: #{dora_net_forward.1} parent=0 // pred_fallthru
    _
  // Predicated region
  $region34: #{dora_net_forward.1} parent=0 // pred_check
    _
  $region35: #{dora_net_forward.1} parent=0 // pred_check_branch
    %31 = sbr.rel (0) target = $region37
  $region36: #{dora_net_forward.1} parent=0 // pred_region
    _
  $region37: #{dora_net_forward.1} parent=0 // pred_fallthru
    _
  %v33 = vld [vmem:[%s0] sm:$0xff]
  %v34 = vld [vmem:[%s0 + $0x8] sm:$0xff]
  %v35 = vld [vmem:[%s0 + $0x10] sm:$0xff]
  %v36 = vld [vmem:[%s0 + $0x18] sm:$0xff]
  %v37 = vld [vmem:[%s0 + $0x20] sm:$0xff]
  %v38 = vld [vmem:[%s0 + $0x28] sm:$0xff]
  %v39 = vld [vmem:[%s0 + $0x30] sm:$0xff]
  %v40 = vld [vmem:[%s0 + $0x38] sm:$0xff]
  %v41 = vld [vmem:[%s0 + $0x40] sm:$0xff]
  %v42 = vld [vmem:[%s0 + $0x48] sm:$0xff]
  %v43 = vld [vmem:[%s0 + $0x50] sm:$0xff]
  %v44 = vld [vmem:[%s0 + $0x58] sm:$0xff]
  %v45 = vld [vmem:[%s0 + $0x60] sm:$0xff]
  %v46 = vld [vmem:[%s0 + $0x68] sm:$0xff]
  %v47 = vld [vmem:[%s0 + $0x70] sm:$0xff]
  %v48 = vld [vmem:[%s0 + $0x78] sm:$0xff]
  %v49 = vld [vmem:[%s0 + $0x80] sm:$0xff]
  %v50 = vld [vmem:[%s0 + $0x88] sm:$0xff]
  %v51 = vld [vmem:[%s0 + $0x90] sm:$0xff]
  %v52 = vld [vmem:[%s0 + $0x98] sm:$0xff]
  %v53 = vld [vmem:[%s0 + $0xa0] sm:$0xff]
  %v54 = vld [vmem:[%s0 + $0xa8] sm:$0xff]
  %v55 = vld [vmem:[%s0 + $0xb0] sm:$0xff]
  %v56 = vld [vmem:[%s0 + $0xb8] sm:$0xff]
  %v57 = vld [vmem:[%s0 + $0xc0] sm:$0xff]
  %v58 = vld [vmem:[%s0 + $0xc8] sm:$0xff]
  %v59 = vld [vmem:[%s0 + $0xd0] sm:$0xff]
  %v60 = vld [vmem:[%s0 + $0xd8] sm:$0xff]
  %v61 = vld [vmem:[%s0 + $0xe0] sm:$0xff]
  %v62 = vld [vmem:[%s0 + $0xe8] sm:$0xff]
  %v63 = vld [vmem:[%s0 + $0xf0] sm:$0xff]
  %v64 = vld [vmem:[%s0 + $0xf8] sm:$0xff]
  %v65 = vld [vmem:[%s1] ss:$2 sm:$0x3]
  %67 = vset.pattern.permute.xlu0 0
  %68 = vperm.xlu0 %67, %v33
  %v69 = vpop.permute.xlu0 %68
  %72 = vset.pattern.permute.xlu0 0
  %73 = vperm.xlu0 %72, %v34
  %v74 = vpop.permute.xlu0 %73
  %77 = vset.pattern.permute.xlu0 0
  %78 = vperm.xlu0 %77, %v35
  %v79 = vpop.permute.xlu0 %78
  %82 = vset.pattern.permute.xlu0 0
  %83 = vperm.xlu0 %82, %v36
  %v84 = vpop.permute.xlu0 %83
  %87 = vset.pattern.permute.xlu0 0
  %88 = vperm.xlu0 %87, %v37
  %v89 = vpop.permute.xlu0 %88
  %92 = vset.pattern.permute.xlu0 0
  %93 = vperm.xlu0 %92, %v38
  %v94 = vpop.permute.xlu0 %93
  %97 = vset.pattern.permute.xlu0 0
  %98 = vperm.xlu0 %97, %v39
  %v99 = vpop.permute.xlu0 %98
  %102 = vset.pattern.permute.xlu0 0
  %103 = vperm.xlu0 %102, %v40
  %v104 = vpop.permute.xlu0 %103
  %107 = vset.pattern.permute.xlu0 0
  %108 = vperm.xlu0 %107, %v41
  %v109 = vpop.permute.xlu0 %108
  %112 = vset.pattern.permute.xlu0 0
  %113 = vperm.xlu0 %112, %v42
  %v114 = vpop.permute.xlu0 %113
  %117 = vset.pattern.permute.xlu0 0
  %118 = vperm.xlu0 %117, %v43
  %v119 = vpop.permute.xlu0 %118
  %122 = vset.pattern.permute.xlu0 0
  %123 = vperm.xlu0 %122, %v44
  %v124 = vpop.permute.xlu0 %123
  %127 = vset.pattern.permute.xlu0 0
  %128 = vperm.xlu0 %127, %v45
  %v129 = vpop.permute.xlu0 %128
  %132 = vset.pattern.permute.xlu0 0
  %133 = vperm.xlu0 %132, %v46
  %v134 = vpop.permute.xlu0 %133
  %137 = vset.pattern.permute.xlu0 0
  %138 = vperm.xlu0 %137, %v47
  %v139 = vpop.permute.xlu0 %138
  %142 = vset.pattern.permute.xlu0 0
  %143 = vperm.xlu0 %142, %v48
  %v144 = vpop.permute.xlu0 %143
  %147 = vset.pattern.permute.xlu0 0
  %148 = vperm.xlu0 %147, %v49
  %v149 = vpop.permute.xlu0 %148
  %152 = vset.pattern.permute.xlu0 0
  %153 = vperm.xlu0 %152, %v50
  %v154 = vpop.permute.xlu0 %153
  %157 = vset.pattern.permute.xlu0 0
  %158 = vperm.xlu0 %157, %v51
  %v159 = vpop.permute.xlu0 %158
  %162 = vset.pattern.permute.xlu0 0
  %163 = vperm.xlu0 %162, %v52
  %v164 = vpop.permute.xlu0 %163
  %167 = vset.pattern.permute.xlu0 0
  %168 = vperm.xlu0 %167, %v53
  %v169 = vpop.permute.xlu0 %168
  %172 = vset.pattern.permute.xlu0 0
  %173 = vperm.xlu0 %172, %v54
  %v174 = vpop.permute.xlu0 %173
  %177 = vset.pattern.permute.xlu0 0
  %178 = vperm.xlu0 %177, %v55
  %v179 = vpop.permute.xlu0 %178
  %182 = vset.pattern.permute.xlu0 0
  %183 = vperm.xlu0 %182, %v56
  %v184 = vpop.permute.xlu0 %183
  %187 = vset.pattern.permute.xlu0 0
  %188 = vperm.xlu0 %187, %v57
  %v189 = vpop.permute.xlu0 %188
  %192 = vset.pattern.permute.xlu0 0
  %193 = vperm.xlu0 %192, %v58
  %v194 = vpop.permute.xlu0 %193
  %197 = vset.pattern.permute.xlu0 0
  %198 = vperm.xlu0 %197, %v59
  %v199 = vpop.permute.xlu0 %198
  %202 = vset.pattern.permute.xlu0 0
  %203 = vperm.xlu0 %202, %v60
  %v204 = vpop.permute.xlu0 %203
  %207 = vset.pattern.permute.xlu0 0
  %208 = vperm.xlu0 %207, %v61
  %v209 = vpop.permute.xlu0 %208
  %212 = vset.pattern.permute.xlu0 0
  %213 = vperm.xlu0 %212, %v62
  %v214 = vpop.permute.xlu0 %213
  %217 = vset.pattern.permute.xlu0 0
  %218 = vperm.xlu0 %217, %v63
  %v219 = vpop.permute.xlu0 %218
  %222 = vset.pattern.permute.xlu0 0
  %223 = vperm.xlu0 %222, %v64
  %v224 = vpop.permute.xlu0 %223
  %v227 = vlaneseq
  %v228 = vshrl.u32 %v227, 7
  %v229 = vsub.s32 0, %v228
  %v230 = vrot.slane %v65, %v229
  %v231 = vlaneseq
  %v232 = vshrl.u32 %v231, 7
  %v233 = vsub.s32 1, %v232
  %v234 = vrot.slane %v65, %v233
  %v237 = vmul.f32 %v69, %v230
  %v238 = vmul.f32 %v69, %v234
  %v239 = vmul.f32 %v74, %v230
  %v240 = vmul.f32 %v74, %v234
  %v241 = vmul.f32 %v79, %v230
  %v242 = vmul.f32 %v79, %v234
  %v243 = vmul.f32 %v84, %v230
  %v244 = vmul.f32 %v84, %v234
  %v245 = vmul.f32 %v89, %v230
  %v246 = vmul.f32 %v89, %v234
  %v247 = vmul.f32 %v94, %v230
  %v248 = vmul.f32 %v94, %v234
  %v249 = vmul.f32 %v99, %v230
  %v250 = vmul.f32 %v99, %v234
  %v251 = vmul.f32 %v104, %v230
  %v252 = vmul.f32 %v104, %v234
  %v253 = vmul.f32 %v109, %v230
  %v254 = vmul.f32 %v109, %v234
  %v255 = vmul.f32 %v114, %v230
  %v256 = vmul.f32 %v114, %v234
  %v257 = vmul.f32 %v119, %v230
  %v258 = vmul.f32 %v119, %v234
  %v259 = vmul.f32 %v124, %v230
  %v260 = vmul.f32 %v124, %v234
  %v261 = vmul.f32 %v129, %v230
  %v262 = vmul.f32 %v129, %v234
  %v263 = vmul.f32 %v134, %v230
  %v264 = vmul.f32 %v134, %v234
  %v265 = vmul.f32 %v139, %v230
  %v266 = vmul.f32 %v139, %v234
  %v267 = vmul.f32 %v144, %v230
  %v268 = vmul.f32 %v144, %v234
  %v269 = vmul.f32 %v149, %v230
  %v270 = vmul.f32 %v149, %v234
  %v271 = vmul.f32 %v154, %v230
  %v272 = vmul.f32 %v154, %v234
  %v273 = vmul.f32 %v159, %v230
  %v274 = vmul.f32 %v159, %v234
  %v275 = vmul.f32 %v164, %v230
  %v276 = vmul.f32 %v164, %v234
  %v277 = vmul.f32 %v169, %v230
  %v278 = vmul.f32 %v169, %v234
  %v279 = vmul.f32 %v174, %v230
  %v280 = vmul.f32 %v174, %v234
  %v281 = vmul.f32 %v179, %v230
  %v282 = vmul.f32 %v179, %v234
  %v283 = vmul.f32 %v184, %v230
  %v284 = vmul.f32 %v184, %v234
  %v285 = vmul.f32 %v189, %v230
  %v286 = vmul.f32 %v189, %v234
  %v287 = vmul.f32 %v194, %v230
  %v288 = vmul.f32 %v194, %v234
  %v289 = vmul.f32 %v199, %v230
  %v290 = vmul.f32 %v199, %v234
  %v291 = vmul.f32 %v204, %v230
  %v292 = vmul.f32 %v204, %v234
  %v293 = vmul.f32 %v209, %v230
  %v294 = vmul.f32 %v209, %v234
  %v295 = vmul.f32 %v214, %v230
  %v296 = vmul.f32 %v214, %v234
  %v297 = vmul.f32 %v219, %v230
  %v298 = vmul.f32 %v219, %v234
  %v299 = vmul.f32 %v224, %v230
  %v300 = vmul.f32 %v224, %v234
  %s301 = scalar_lea.vmem %s1, 1
  %v302 = vld [vmem:[%s301] ss:$2 sm:$0x3]
  %303 = vset.pattern.permute.xlu0 1
  %304 = vperm.xlu0 %303, %v33
  %v305 = vpop.permute.xlu0 %304
  %307 = vset.pattern.permute.xlu0 1
  %308 = vperm.xlu0 %307, %v34
  %v309 = vpop.permute.xlu0 %308
  %311 = vset.pattern.permute.xlu0 1
  %312 = vperm.xlu0 %311, %v35
  %v313 = vpop.permute.xlu0 %312
  %315 = vset.pattern.permute.xlu0 1
  %316 = vperm.xlu0 %315, %v36
  %v317 = vpop.permute.xlu0 %316
  %319 = vset.pattern.permute.xlu0 1
  %320 = vperm.xlu0 %319, %v37
  %v321 = vpop.permute.xlu0 %320
  %323 = vset.pattern.permute.xlu0 1
  %324 = vperm.xlu0 %323, %v38
  %v325 = vpop.permute.xlu0 %324
  %327 = vset.pattern.permute.xlu0 1
  %328 = vperm.xlu0 %327, %v39
  %v329 = vpop.permute.xlu0 %328
  %331 = vset.pattern.permute.xlu0 1
  %332 = vperm.xlu0 %331, %v40
  %v333 = vpop.permute.xlu0 %332
  %335 = vset.pattern.permute.xlu0 1
  %336 = vperm.xlu0 %335, %v41
  %v337 = vpop.permute.xlu0 %336
  %339 = vset.pattern.permute.xlu0 1
  %340 = vperm.xlu0 %339, %v42
  %v341 = vpop.permute.xlu0 %340
  %343 = vset.pattern.permute.xlu0 1
  %344 = vperm.xlu0 %343, %v43
  %v345 = vpop.permute.xlu0 %344
  %347 = vset.pattern.permute.xlu0 1
  %348 = vperm.xlu0 %347, %v44
  %v349 = vpop.permute.xlu0 %348
  %351 = vset.pattern.permute.xlu0 1
  %352 = vperm.xlu0 %351, %v45
  %v353 = vpop.permute.xlu0 %352
  %355 = vset.pattern.permute.xlu0 1
  %356 = vperm.xlu0 %355, %v46
  %v357 = vpop.permute.xlu0 %356
  %359 = vset.pattern.permute.xlu0 1
  %360 = vperm.xlu0 %359, %v47
  %v361 = vpop.permute.xlu0 %360
  %363 = vset.pattern.permute.xlu0 1
  %364 = vperm.xlu0 %363, %v48
  %v365 = vpop.permute.xlu0 %364
  %367 = vset.pattern.permute.xlu0 1
  %368 = vperm.xlu0 %367, %v49
  %v369 = vpop.permute.xlu0 %368
  %371 = vset.pattern.permute.xlu0 1
  %372 = vperm.xlu0 %371, %v50
  %v373 = vpop.permute.xlu0 %372
  %375 = vset.pattern.permute.xlu0 1
  %376 = vperm.xlu0 %375, %v51
  %v377 = vpop.permute.xlu0 %376
  %379 = vset.pattern.permute.xlu0 1
  %380 = vperm.xlu0 %379, %v52
  %v381 = vpop.permute.xlu0 %380
  %383 = vset.pattern.permute.xlu0 1
  %384 = vperm.xlu0 %383, %v53
  %v385 = vpop.permute.xlu0 %384
  %387 = vset.pattern.permute.xlu0 1
  %388 = vperm.xlu0 %387, %v54
  %v389 = vpop.permute.xlu0 %388
  %391 = vset.pattern.permute.xlu0 1
  %392 = vperm.xlu0 %391, %v55
  %v393 = vpop.permute.xlu0 %392
  %395 = vset.pattern.permute.xlu0 1
  %396 = vperm.xlu0 %395, %v56
  %v397 = vpop.permute.xlu0 %396
  %399 = vset.pattern.permute.xlu0 1
  %400 = vperm.xlu0 %399, %v57
  %v401 = vpop.permute.xlu0 %400
  %403 = vset.pattern.permute.xlu0 1
  %404 = vperm.xlu0 %403, %v58
  %v405 = vpop.permute.xlu0 %404
  %407 = vset.pattern.permute.xlu0 1
  %408 = vperm.xlu0 %407, %v59
  %v409 = vpop.permute.xlu0 %408
  %411 = vset.pattern.permute.xlu0 1
  %412 = vperm.xlu0 %411, %v60
  %v413 = vpop.permute.xlu0 %412
  %415 = vset.pattern.permute.xlu0 1
  %416 = vperm.xlu0 %415, %v61
  %v417 = vpop.permute.xlu0 %416
  %419 = vset.pattern.permute.xlu0 1
  %420 = vperm.xlu0 %419, %v62
  %v421 = vpop.permute.xlu0 %420
  %423 = vset.pattern.permute.xlu0 1
  %424 = vperm.xlu0 %423, %v63
  %v425 = vpop.permute.xlu0 %424
  %427 = vset.pattern.permute.xlu0 1
  %428 = vperm.xlu0 %427, %v64
  %v429 = vpop.permute.xlu0 %428
  %v432 = vlaneseq
  %v433 = vshrl.u32 %v432, 7
  %v434 = vsub.s32 0, %v433
  %v435 = vrot.slane %v302, %v434
  %v436 = vlaneseq
  %v437 = vshrl.u32 %v436, 7
  %v438 = vsub.s32 1, %v437
  %v439 = vrot.slane %v302, %v438
  %v442 = vmul.f32 %v305, %v435
  %v443 = vmul.f32 %v305, %v439
  %v444 = vmul.f32 %v309, %v435
  %v445 = vmul.f32 %v309, %v439
  %v446 = vmul.f32 %v313, %v435
  %v447 = vmul.f32 %v313, %v439
  %v448 = vmul.f32 %v317, %v435
  %v449 = vmul.f32 %v317, %v439
  %v450 = vmul.f32 %v321, %v435
  %v451 = vmul.f32 %v321, %v439
  %v452 = vmul.f32 %v325, %v435
  %v453 = vmul.f32 %v325, %v439
  %v454 = vmul.f32 %v329, %v435
  %v455 = vmul.f32 %v329, %v439
  %v456 = vmul.f32 %v333, %v435
  %v457 = vmul.f32 %v333, %v439
  %v458 = vmul.f32 %v337, %v435
  %v459 = vmul.f32 %v337, %v439
  %v460 = vmul.f32 %v341, %v435
  %v461 = vmul.f32 %v341, %v439
  %v462 = vmul.f32 %v345, %v435
  %v463 = vmul.f32 %v345, %v439
  %v464 = vmul.f32 %v349, %v435
  %v465 = vmul.f32 %v349, %v439
  %v466 = vmul.f32 %v353, %v435
  %v467 = vmul.f32 %v353, %v439
  %v468 = vmul.f32 %v357, %v435
  %v469 = vmul.f32 %v357, %v439
  %v470 = vmul.f32 %v361, %v435
  %v471 = vmul.f32 %v361, %v439
  %v472 = vmul.f32 %v365, %v435
  %v473 = vmul.f32 %v365, %v439
  %v474 = vmul.f32 %v369, %v435
  %v475 = vmul.f32 %v369, %v439
  %v476 = vmul.f32 %v373, %v435
  %v477 = vmul.f32 %v373, %v439
  %v478 = vmul.f32 %v377, %v435
  %v479 = vmul.f32 %v377, %v439
  %v480 = vmul.f32 %v381, %v435
  %v481 = vmul.f32 %v381, %v439
  %v482 = vmul.f32 %v385, %v435
  %v483 = vmul.f32 %v385, %v439
  %v484 = vmul.f32 %v389, %v435
  %v485 = vmul.f32 %v389, %v439
  %v486 = vmul.f32 %v393, %v435
  %v487 = vmul.f32 %v393, %v439
  %v488 = vmul.f32 %v397, %v435
  %v489 = vmul.f32 %v397, %v439
  %v490 = vmul.f32 %v401, %v435
  %v491 = vmul.f32 %v401, %v439
  %v492 = vmul.f32 %v405, %v435
  %v493 = vmul.f32 %v405, %v439
  %v494 = vmul.f32 %v409, %v435
  %v495 = vmul.f32 %v409, %v439
  %v496 = vmul.f32 %v413, %v435
  %v497 = vmul.f32 %v413, %v439
  %v498 = vmul.f32 %v417, %v435
  %v499 = vmul.f32 %v417, %v439
  %v500 = vmul.f32 %v421, %v435
  %v501 = vmul.f32 %v421, %v439
  %v502 = vmul.f32 %v425, %v435
  %v503 = vmul.f32 %v425, %v439
  %v504 = vmul.f32 %v429, %v435
  %v505 = vmul.f32 %v429, %v439
  %v506 = vadd.f32 %v237, %v442
  %v507 = vadd.f32 %v238, %v443
  %v508 = vadd.f32 %v239, %v444
  %v509 = vadd.f32 %v240, %v445
  %v510 = vadd.f32 %v241, %v446
  %v511 = vadd.f32 %v242, %v447
  %v512 = vadd.f32 %v243, %v448
  %v513 = vadd.f32 %v244, %v449
  %v514 = vadd.f32 %v245, %v450
  %v515 = vadd.f32 %v246, %v451
  %v516 = vadd.f32 %v247, %v452
  %v517 = vadd.f32 %v248, %v453
  %v518 = vadd.f32 %v249, %v454
  %v519 = vadd.f32 %v250, %v455
  %v520 = vadd.f32 %v251, %v456
  %v521 = vadd.f32 %v252, %v457
  %v522 = vadd.f32 %v253, %v458
  %v523 = vadd.f32 %v254, %v459
  %v524 = vadd.f32 %v255, %v460
  %v525 = vadd.f32 %v256, %v461
  %v526 = vadd.f32 %v257, %v462
  %v527 = vadd.f32 %v258, %v463
  %v528 = vadd.f32 %v259, %v464
  %v529 = vadd.f32 %v260, %v465
  %v530 = vadd.f32 %v261, %v466
  %v531 = vadd.f32 %v262, %v467
  %v532 = vadd.f32 %v263, %v468
  %v533 = vadd.f32 %v264, %v469
  %v534 = vadd.f32 %v265, %v470
  %v535 = vadd.f32 %v266, %v471
  %v536 = vadd.f32 %v267, %v472
  %v537 = vadd.f32 %v268, %v473
  %v538 = vadd.f32 %v269, %v474
  %v539 = vadd.f32 %v270, %v475
  %v540 = vadd.f32 %v271, %v476
  %v541 = vadd.f32 %v272, %v477
  %v542 = vadd.f32 %v273, %v478
  %v543 = vadd.f32 %v274, %v479
  %v544 = vadd.f32 %v275, %v480
  %v545 = vadd.f32 %v276, %v481
  %v546 = vadd.f32 %v277, %v482
  %v547 = vadd.f32 %v278, %v483
  %v548 = vadd.f32 %v279, %v484
  %v549 = vadd.f32 %v280, %v485
  %v550 = vadd.f32 %v281, %v486
  %v551 = vadd.f32 %v282, %v487
  %v552 = vadd.f32 %v283, %v488
  %v553 = vadd.f32 %v284, %v489
  %v554 = vadd.f32 %v285, %v490
  %v555 = vadd.f32 %v286, %v491
  %v556 = vadd.f32 %v287, %v492
  %v557 = vadd.f32 %v288, %v493
  %v558 = vadd.f32 %v289, %v494
  %v559 = vadd.f32 %v290, %v495
  %v560 = vadd.f32 %v291, %v496
  %v561 = vadd.f32 %v292, %v497
  %v562 = vadd.f32 %v293, %v498
  %v563 = vadd.f32 %v294, %v499
  %v564 = vadd.f32 %v295, %v500
  %v565 = vadd.f32 %v296, %v501
  %v566 = vadd.f32 %v297, %v502
  %v567 = vadd.f32 %v298, %v503
  %v568 = vadd.f32 %v299, %v504
  %v569 = vadd.f32 %v300, %v505
  %v570 = vld [vmem:[%s2] sm:$0x3]
  %v572 = vlaneseq
  %v573 = vshrl.u32 %v572, 7
  %v574 = vsub.s32 0, %v573
  %v575 = vrot.slane %v570, %v574
  %v576 = vlaneseq
  %v577 = vshrl.u32 %v576, 7
  %v578 = vsub.s32 1, %v577
  %v579 = vrot.slane %v570, %v578
  %v582 = vadd.f32 %v506, %v575
  %v583 = vadd.f32 %v507, %v579
  %v584 = vadd.f32 %v508, %v575
  %v585 = vadd.f32 %v509, %v579
  %v586 = vadd.f32 %v510, %v575
  %v587 = vadd.f32 %v511, %v579
  %v588 = vadd.f32 %v512, %v575
  %v589 = vadd.f32 %v513, %v579
  %v590 = vadd.f32 %v514, %v575
  %v591 = vadd.f32 %v515, %v579
  %v592 = vadd.f32 %v516, %v575
  %v593 = vadd.f32 %v517, %v579
  %v594 = vadd.f32 %v518, %v575
  %v595 = vadd.f32 %v519, %v579
  %v596 = vadd.f32 %v520, %v575
  %v597 = vadd.f32 %v521, %v579
  %v598 = vadd.f32 %v522, %v575
  %v599 = vadd.f32 %v523, %v579
  %v600 = vadd.f32 %v524, %v575
  %v601 = vadd.f32 %v525, %v579
  %v602 = vadd.f32 %v526, %v575
  %v603 = vadd.f32 %v527, %v579
  %v604 = vadd.f32 %v528, %v575
  %v605 = vadd.f32 %v529, %v579
  %v606 = vadd.f32 %v530, %v575
  %v607 = vadd.f32 %v531, %v579
  %v608 = vadd.f32 %v532, %v575
  %v609 = vadd.f32 %v533, %v579
  %v610 = vadd.f32 %v534, %v575
  %v611 = vadd.f32 %v535, %v579
  %v612 = vadd.f32 %v536, %v575
  %v613 = vadd.f32 %v537, %v579
  %v614 = vadd.f32 %v538, %v575
  %v615 = vadd.f32 %v539, %v579
  %v616 = vadd.f32 %v540, %v575
  %v617 = vadd.f32 %v541, %v579
  %v618 = vadd.f32 %v542, %v575
  %v619 = vadd.f32 %v543, %v579
  %v620 = vadd.f32 %v544, %v575
  %v621 = vadd.f32 %v545, %v579
  %v622 = vadd.f32 %v546, %v575
  %v623 = vadd.f32 %v547, %v579
  %v624 = vadd.f32 %v548, %v575
  %v625 = vadd.f32 %v549, %v579
  %v626 = vadd.f32 %v550, %v575
  %v627 = vadd.f32 %v551, %v579
  %v628 = vadd.f32 %v552, %v575
  %v629 = vadd.f32 %v553, %v579
  %v630 = vadd.f32 %v554, %v575
  %v631 = vadd.f32 %v555, %v579
  %v632 = vadd.f32 %v556, %v575
  %v633 = vadd.f32 %v557, %v579
  %v634 = vadd.f32 %v558, %v575
  %v635 = vadd.f32 %v559, %v579
  %v636 = vadd.f32 %v560, %v575
  %v637 = vadd.f32 %v561, %v579
  %v638 = vadd.f32 %v562, %v575
  %v639 = vadd.f32 %v563, %v579
  %v640 = vadd.f32 %v564, %v575
  %v641 = vadd.f32 %v565, %v579
  %v642 = vadd.f32 %v566, %v575
  %v643 = vadd.f32 %v567, %v579
  %v644 = vadd.f32 %v568, %v575
  %v645 = vadd.f32 %v569, %v579
  %v646 = vmax.f32 %v582, 0.0
  %v647 = vmax.f32 %v583, 0.0
  %v648 = vmax.f32 %v584, 0.0
  %v649 = vmax.f32 %v585, 0.0
  %v650 = vmax.f32 %v586, 0.0
  %v651 = vmax.f32 %v587, 0.0
  %v652 = vmax.f32 %v588, 0.0
  %v653 = vmax.f32 %v589, 0.0
  %v654 = vmax.f32 %v590, 0.0
  %v655 = vmax.f32 %v591, 0.0
  %v656 = vmax.f32 %v592, 0.0
  %v657 = vmax.f32 %v593, 0.0
  %v658 = vmax.f32 %v594, 0.0
  %v659 = vmax.f32 %v595, 0.0
  %v660 = vmax.f32 %v596, 0.0
  %v661 = vmax.f32 %v597, 0.0
  %v662 = vmax.f32 %v598, 0.0
  %v663 = vmax.f32 %v599, 0.0
  %v664 = vmax.f32 %v600, 0.0
  %v665 = vmax.f32 %v601, 0.0
  %v666 = vmax.f32 %v602, 0.0
  %v667 = vmax.f32 %v603, 0.0
  %v668 = vmax.f32 %v604, 0.0
  %v669 = vmax.f32 %v605, 0.0
  %v670 = vmax.f32 %v606, 0.0
  %v671 = vmax.f32 %v607, 0.0
  %v672 = vmax.f32 %v608, 0.0
  %v673 = vmax.f32 %v609, 0.0
  %v674 = vmax.f32 %v610, 0.0
  %v675 = vmax.f32 %v611, 0.0
  %v676 = vmax.f32 %v612, 0.0
  %v677 = vmax.f32 %v613, 0.0
  %v678 = vmax.f32 %v614, 0.0
  %v679 = vmax.f32 %v615, 0.0
  %v680 = vmax.f32 %v616, 0.0
  %v681 = vmax.f32 %v617, 0.0
  %v682 = vmax.f32 %v618, 0.0
  %v683 = vmax.f32 %v619, 0.0
  %v684 = vmax.f32 %v620, 0.0
  %v685 = vmax.f32 %v621, 0.0
  %v686 = vmax.f32 %v622, 0.0
  %v687 = vmax.f32 %v623, 0.0
  %v688 = vmax.f32 %v624, 0.0
  %v689 = vmax.f32 %v625, 0.0
  %v690 = vmax.f32 %v626, 0.0
  %v691 = vmax.f32 %v627, 0.0
  %v692 = vmax.f32 %v628, 0.0
  %v693 = vmax.f32 %v629, 0.0
  %v694 = vmax.f32 %v630, 0.0
  %v695 = vmax.f32 %v631, 0.0
  %v696 = vmax.f32 %v632, 0.0
  %v697 = vmax.f32 %v633, 0.0
  %v698 = vmax.f32 %v634, 0.0
  %v699 = vmax.f32 %v635, 0.0
  %v700 = vmax.f32 %v636, 0.0
  %v701 = vmax.f32 %v637, 0.0
  %v702 = vmax.f32 %v638, 0.0
  %v703 = vmax.f32 %v639, 0.0
  %v704 = vmax.f32 %v640, 0.0
  %v705 = vmax.f32 %v641, 0.0
  %v706 = vmax.f32 %v642, 0.0
  %v707 = vmax.f32 %v643, 0.0
  %v708 = vmax.f32 %v644, 0.0
  %v709 = vmax.f32 %v645, 0.0
  %v710 = vpack.c.bf16 %v648, %v646
  %v711 = vpack.c.bf16 %v649, %v647
  %v712 = vpack.c.bf16 %v652, %v650
  %v713 = vpack.c.bf16 %v653, %v651
  %v714 = vpack.c.bf16 %v656, %v654
  %v715 = vpack.c.bf16 %v657, %v655
  %v716 = vpack.c.bf16 %v660, %v658
  %v717 = vpack.c.bf16 %v661, %v659
  %v718 = vpack.c.bf16 %v664, %v662
  %v719 = vpack.c.bf16 %v665, %v663
  %v720 = vpack.c.bf16 %v668, %v666
  %v721 = vpack.c.bf16 %v669, %v667
  %v722 = vpack.c.bf16 %v672, %v670
  %v723 = vpack.c.bf16 %v673, %v671
  %v724 = vpack.c.bf16 %v676, %v674
  %v725 = vpack.c.bf16 %v677, %v675
  %v726 = vpack.c.bf16 %v680, %v678
  %v727 = vpack.c.bf16 %v681, %v679
  %v728 = vpack.c.bf16 %v684, %v682
  %v729 = vpack.c.bf16 %v685, %v683
  %v730 = vpack.c.bf16 %v688, %v686
  %v731 = vpack.c.bf16 %v689, %v687
  %v732 = vpack.c.bf16 %v692, %v690
  %v733 = vpack.c.bf16 %v693, %v691
  %v734 = vpack.c.bf16 %v696, %v694
  %v735 = vpack.c.bf16 %v697, %v695
  %v736 = vpack.c.bf16 %v700, %v698
  %v737 = vpack.c.bf16 %v701, %v699
  %v738 = vpack.c.bf16 %v704, %v702
  %v739 = vpack.c.bf16 %v705, %v703
  %v740 = vpack.c.bf16 %v708, %v706
  %v741 = vpack.c.bf16 %v709, %v707
  %v742 = vld [vmem:[%s3] sm:$0xff]
  %v743 = vld [vmem:[%s3 + $0x8] sm:$0xff]
  %v744 = vld [vmem:[%s3 + $0x10] sm:$0xff]
  %v745 = vld [vmem:[%s3 + $0x18] sm:$0xff]
  %v746 = vld [vmem:[%s3 + $0x20] sm:$0xff]
  %v747 = vld [vmem:[%s3 + $0x28] sm:$0xff]
  %v748 = vld [vmem:[%s3 + $0x30] sm:$0xff]
  %v749 = vld [vmem:[%s3 + $0x38] sm:$0xff]
  %v750 = vld [vmem:[%s3 + $0x40] sm:$0xff]
  %v751 = vld [vmem:[%s3 + $0x48] sm:$0xff]
  %v752 = vld [vmem:[%s3 + $0x50] sm:$0xff]
  %v753 = vld [vmem:[%s3 + $0x58] sm:$0xff]
  %v754 = vld [vmem:[%s3 + $0x60] sm:$0xff]
  %v755 = vld [vmem:[%s3 + $0x68] sm:$0xff]
  %v756 = vld [vmem:[%s3 + $0x70] sm:$0xff]
  %v757 = vld [vmem:[%s3 + $0x78] sm:$0xff]
  %v758 = vld [vmem:[%s3 + $0x80] sm:$0xff]
  %v759 = vld [vmem:[%s3 + $0x88] sm:$0xff]
  %v760 = vld [vmem:[%s3 + $0x90] sm:$0xff]
  %v761 = vld [vmem:[%s3 + $0x98] sm:$0xff]
  %v762 = vld [vmem:[%s3 + $0xa0] sm:$0xff]
  %v763 = vld [vmem:[%s3 + $0xa8] sm:$0xff]
  %v764 = vld [vmem:[%s3 + $0xb0] sm:$0xff]
  %v765 = vld [vmem:[%s3 + $0xb8] sm:$0xff]
  %v766 = vld [vmem:[%s3 + $0xc0] sm:$0xff]
  %v767 = vld [vmem:[%s3 + $0xc8] sm:$0xff]
  %v768 = vld [vmem:[%s3 + $0xd0] sm:$0xff]
  %v769 = vld [vmem:[%s3 + $0xd8] sm:$0xff]
  %v770 = vld [vmem:[%s3 + $0xe0] sm:$0xff]
  %v771 = vld [vmem:[%s3 + $0xe8] sm:$0xff]
  %v772 = vld [vmem:[%s3 + $0xf0] sm:$0xff]
  %v773 = vld [vmem:[%s3 + $0xf8] sm:$0xff]
  %v774 = vld [vmem:[%s3 + $0x100] sm:$0xff]
  %v775 = vld [vmem:[%s3 + $0x108] sm:$0xff]
  %v776 = vld [vmem:[%s3 + $0x110] sm:$0xff]
  %v777 = vld [vmem:[%s3 + $0x118] sm:$0xff]
  %v778 = vld [vmem:[%s3 + $0x120] sm:$0xff]
  %v779 = vld [vmem:[%s3 + $0x128] sm:$0xff]
  %v780 = vld [vmem:[%s3 + $0x130] sm:$0xff]
  %v781 = vld [vmem:[%s3 + $0x138] sm:$0xff]
  %v782 = vld [vmem:[%s3 + $0x140] sm:$0xff]
  %v783 = vld [vmem:[%s3 + $0x148] sm:$0xff]
  %v784 = vld [vmem:[%s3 + $0x150] sm:$0xff]
  %v785 = vld [vmem:[%s3 + $0x158] sm:$0xff]
  %v786 = vld [vmem:[%s3 + $0x160] sm:$0xff]
  %v787 = vld [vmem:[%s3 + $0x168] sm:$0xff]
  %v788 = vld [vmem:[%s3 + $0x170] sm:$0xff]
  %v789 = vld [vmem:[%s3 + $0x178] sm:$0xff]
  %v790 = vld [vmem:[%s3 + $0x180] sm:$0xff]
  %v791 = vld [vmem:[%s3 + $0x188] sm:$0xff]
  %v792 = vld [vmem:[%s3 + $0x190] sm:$0xff]
  %v793 = vld [vmem:[%s3 + $0x198] sm:$0xff]
  %v794 = vld [vmem:[%s3 + $0x1a0] sm:$0xff]
  %v795 = vld [vmem:[%s3 + $0x1a8] sm:$0xff]
  %v796 = vld [vmem:[%s3 + $0x1b0] sm:$0xff]
  %v797 = vld [vmem:[%s3 + $0x1b8] sm:$0xff]
  %v798 = vld [vmem:[%s3 + $0x1c0] sm:$0xff]
  %v799 = vld [vmem:[%s3 + $0x1c8] sm:$0xff]
  %v800 = vld [vmem:[%s3 + $0x1d0] sm:$0xff]
  %v801 = vld [vmem:[%s3 + $0x1d8] sm:$0xff]
  %v802 = vld [vmem:[%s3 + $0x1e0] sm:$0xff]
  %v803 = vld [vmem:[%s3 + $0x1e8] sm:$0xff]
  %v804 = vld [vmem:[%s3 + $0x1f0] sm:$0xff]
  %v805 = vld [vmem:[%s3 + $0x1f8] sm:$0xff]
  %v806 = vld [vmem:[%s3 + $0x200] sm:$0xff]
  %v807 = vld [vmem:[%s3 + $0x208] sm:$0xff]
  %v808 = vld [vmem:[%s3 + $0x210] sm:$0xff]
  %v809 = vld [vmem:[%s3 + $0x218] sm:$0xff]
  %v810 = vld [vmem:[%s3 + $0x220] sm:$0xff]
  %v811 = vld [vmem:[%s3 + $0x228] sm:$0xff]
  %v812 = vld [vmem:[%s3 + $0x230] sm:$0xff]
  %v813 = vld [vmem:[%s3 + $0x238] sm:$0xff]
  %v814 = vld [vmem:[%s3 + $0x240] sm:$0xff]
  %v815 = vld [vmem:[%s3 + $0x248] sm:$0xff]
  %v816 = vld [vmem:[%s3 + $0x250] sm:$0xff]
  %v817 = vld [vmem:[%s3 + $0x258] sm:$0xff]
  %v818 = vld [vmem:[%s3 + $0x260] sm:$0xff]
  %v819 = vld [vmem:[%s3 + $0x268] sm:$0xff]
  %v820 = vld [vmem:[%s3 + $0x270] sm:$0xff]
  %v821 = vld [vmem:[%s3 + $0x278] sm:$0xff]
  %v822 = vld [vmem:[%s3 + $0x280] sm:$0xff]
  %v823 = vld [vmem:[%s3 + $0x288] sm:$0xff]
  %v824 = vld [vmem:[%s3 + $0x290] sm:$0xff]
  %v825 = vld [vmem:[%s3 + $0x298] sm:$0xff]
  %v826 = vld [vmem:[%s3 + $0x2a0] sm:$0xff]
  %v827 = vld [vmem:[%s3 + $0x2a8] sm:$0xff]
  %v828 = vld [vmem:[%s3 + $0x2b0] sm:$0xff]
  %v829 = vld [vmem:[%s3 + $0x2b8] sm:$0xff]
  %v830 = vld [vmem:[%s3 + $0x2c0] sm:$0xff]
  %v831 = vld [vmem:[%s3 + $0x2c8] sm:$0xff]
  %v832 = vld [vmem:[%s3 + $0x2d0] sm:$0xff]
  %v833 = vld [vmem:[%s3 + $0x2d8] sm:$0xff]
  %v834 = vld [vmem:[%s3 + $0x2e0] sm:$0xff]
  %v835 = vld [vmem:[%s3 + $0x2e8] sm:$0xff]
  %v836 = vld [vmem:[%s3 + $0x2f0] sm:$0xff]
  %v837 = vld [vmem:[%s3 + $0x2f8] sm:$0xff]
  %v838 = vld [vmem:[%s3 + $0x300] sm:$0xff]
  %v839 = vld [vmem:[%s3 + $0x308] sm:$0xff]
  %v840 = vld [vmem:[%s3 + $0x310] sm:$0xff]
  %v841 = vld [vmem:[%s3 + $0x318] sm:$0xff]
  %v842 = vld [vmem:[%s3 + $0x320] sm:$0xff]
  %v843 = vld [vmem:[%s3 + $0x328] sm:$0xff]
  %v844 = vld [vmem:[%s3 + $0x330] sm:$0xff]
  %v845 = vld [vmem:[%s3 + $0x338] sm:$0xff]
  %v846 = vld [vmem:[%s3 + $0x340] sm:$0xff]
  %v847 = vld [vmem:[%s3 + $0x348] sm:$0xff]
  %v848 = vld [vmem:[%s3 + $0x350] sm:$0xff]
  %v849 = vld [vmem:[%s3 + $0x358] sm:$0xff]
  %v850 = vld [vmem:[%s3 + $0x360] sm:$0xff]
  %v851 = vld [vmem:[%s3 + $0x368] sm:$0xff]
  %v852 = vld [vmem:[%s3 + $0x370] sm:$0xff]
  %v853 = vld [vmem:[%s3 + $0x378] sm:$0xff]
  %v854 = vld [vmem:[%s3 + $0x380] sm:$0xff]
  %v855 = vld [vmem:[%s3 + $0x388] sm:$0xff]
  %v856 = vld [vmem:[%s3 + $0x390] sm:$0xff]
  %v857 = vld [vmem:[%s3 + $0x398] sm:$0xff]
  %v858 = vld [vmem:[%s3 + $0x3a0] sm:$0xff]
  %v859 = vld [vmem:[%s3 + $0x3a8] sm:$0xff]
  %v860 = vld [vmem:[%s3 + $0x3b0] sm:$0xff]
  %v861 = vld [vmem:[%s3 + $0x3b8] sm:$0xff]
  %v862 = vld [vmem:[%s3 + $0x3c0] sm:$0xff]
  %v863 = vld [vmem:[%s3 + $0x3c8] sm:$0xff]
  %v864 = vld [vmem:[%s3 + $0x3d0] sm:$0xff]
  %v865 = vld [vmem:[%s3 + $0x3d8] sm:$0xff]
  %v866 = vld [vmem:[%s3 + $0x3e0] sm:$0xff]
  %v867 = vld [vmem:[%s3 + $0x3e8] sm:$0xff]
  %v868 = vld [vmem:[%s3 + $0x3f0] sm:$0xff]
  %v869 = vld [vmem:[%s3 + $0x3f8] sm:$0xff]
  %v870 = vld [vmem:[%s4] sm:$0xff]
  %v872 = vlaneseq
  %v873 = vshrl.u32 %v872, 7
  %v874 = vsub.s32 0, %v873
  %v875 = vrot.slane %v870, %v874
  %v876 = vlaneseq
  %v877 = vshrl.u32 %v876, 7
  %v878 = vsub.s32 1, %v877
  %v879 = vrot.slane %v870, %v878
  %v880 = vlaneseq
  %v881 = vshrl.u32 %v880, 7
  %v882 = vsub.s32 2, %v881
  %v883 = vrot.slane %v870, %v882
  %v884 = vlaneseq
  %v885 = vshrl.u32 %v884, 7
  %v886 = vsub.s32 3, %v885
  %v887 = vrot.slane %v870, %v886
  %v888 = vlaneseq
  %v889 = vshrl.u32 %v888, 7
  %v890 = vsub.s32 4, %v889
  %v891 = vrot.slane %v870, %v890
  %v892 = vlaneseq
  %v893 = vshrl.u32 %v892, 7
  %v894 = vsub.s32 5, %v893
  %v895 = vrot.slane %v870, %v894
  %v896 = vlaneseq
  %v897 = vshrl.u32 %v896, 7
  %v898 = vsub.s32 6, %v897
  %v899 = vrot.slane %v870, %v898
  %v900 = vlaneseq
  %v901 = vshrl.u32 %v900, 7
  %v902 = vsub.s32 7, %v901
  %v903 = vrot.slane %v870, %v902
  %v1040 = vunpack.c.l.b16 %v742
  %v1041 = vunpack.c.h.b16 %v742
  %v1042 = vunpack.c.l.b16 %v743
  %v1043 = vunpack.c.h.b16 %v743
  %v1044 = vunpack.c.l.b16 %v744
  %v1045 = vunpack.c.h.b16 %v744
  %v1046 = vunpack.c.l.b16 %v745
  %v1047 = vunpack.c.h.b16 %v745
  %v1048 = vunpack.c.l.b16 %v746
  %v1049 = vunpack.c.h.b16 %v746
  %v1050 = vunpack.c.l.b16 %v747
  %v1051 = vunpack.c.h.b16 %v747
  %v1052 = vunpack.c.l.b16 %v748
  %v1053 = vunpack.c.h.b16 %v748
  %v1054 = vunpack.c.l.b16 %v749
  %v1055 = vunpack.c.h.b16 %v749
  %v1056 = vunpack.c.l.b16 %v750
  %v1057 = vunpack.c.h.b16 %v750
  %v1058 = vunpack.c.l.b16 %v751
  %v1059 = vunpack.c.h.b16 %v751
  %v1060 = vunpack.c.l.b16 %v752
  %v1061 = vunpack.c.h.b16 %v752
  %v1062 = vunpack.c.l.b16 %v753
  %v1063 = vunpack.c.h.b16 %v753
  %v1064 = vunpack.c.l.b16 %v754
  %v1065 = vunpack.c.h.b16 %v754
  %v1066 = vunpack.c.l.b16 %v755
  %v1067 = vunpack.c.h.b16 %v755
  %v1068 = vunpack.c.l.b16 %v756
  %v1069 = vunpack.c.h.b16 %v756
  %v1070 = vunpack.c.l.b16 %v757
  %v1071 = vunpack.c.h.b16 %v757
  %v1072 = vunpack.c.l.b16 %v758
  %v1073 = vunpack.c.h.b16 %v758
  %v1074 = vunpack.c.l.b16 %v759
  %v1075 = vunpack.c.h.b16 %v759
  %v1076 = vunpack.c.l.b16 %v760
  %v1077 = vunpack.c.h.b16 %v760
  %v1078 = vunpack.c.l.b16 %v761
  %v1079 = vunpack.c.h.b16 %v761
  %v1080 = vunpack.c.l.b16 %v762
  %v1081 = vunpack.c.h.b16 %v762
  %v1082 = vunpack.c.l.b16 %v763
  %v1083 = vunpack.c.h.b16 %v763
  %v1084 = vunpack.c.l.b16 %v764
  %v1085 = vunpack.c.h.b16 %v764
  %v1086 = vunpack.c.l.b16 %v765
  %v1087 = vunpack.c.h.b16 %v765
  %v1088 = vunpack.c.l.b16 %v766
  %v1089 = vunpack.c.h.b16 %v766
  %v1090 = vunpack.c.l.b16 %v767
  %v1091 = vunpack.c.h.b16 %v767
  %v1092 = vunpack.c.l.b16 %v768
  %v1093 = vunpack.c.h.b16 %v768
  %v1094 = vunpack.c.l.b16 %v769
  %v1095 = vunpack.c.h.b16 %v769
  %v1096 = vunpack.c.l.b16 %v770
  %v1097 = vunpack.c.h.b16 %v770
  %v1098 = vunpack.c.l.b16 %v771
  %v1099 = vunpack.c.h.b16 %v771
  %v1100 = vunpack.c.l.b16 %v772
  %v1101 = vunpack.c.h.b16 %v772
  %v1102 = vunpack.c.l.b16 %v773
  %v1103 = vunpack.c.h.b16 %v773
  %v1104 = vunpack.c.l.b16 %v774
  %v1105 = vunpack.c.h.b16 %v774
  %v1106 = vunpack.c.l.b16 %v775
  %v1107 = vunpack.c.h.b16 %v775
  %v1108 = vunpack.c.l.b16 %v776
  %v1109 = vunpack.c.h.b16 %v776
  %v1110 = vunpack.c.l.b16 %v777
  %v1111 = vunpack.c.h.b16 %v777
  %v1112 = vunpack.c.l.b16 %v778
  %v1113 = vunpack.c.h.b16 %v778
  %v1114 = vunpack.c.l.b16 %v779
  %v1115 = vunpack.c.h.b16 %v779
  %v1116 = vunpack.c.l.b16 %v780
  %v1117 = vunpack.c.h.b16 %v780
  %v1118 = vunpack.c.l.b16 %v781
  %v1119 = vunpack.c.h.b16 %v781
  %v1120 = vunpack.c.l.b16 %v782
  %v1121 = vunpack.c.h.b16 %v782
  %v1122 = vunpack.c.l.b16 %v783
  %v1123 = vunpack.c.h.b16 %v783
  %v1124 = vunpack.c.l.b16 %v784
  %v1125 = vunpack.c.h.b16 %v784
  %v1126 = vunpack.c.l.b16 %v785
  %v1127 = vunpack.c.h.b16 %v785
  %v1128 = vunpack.c.l.b16 %v786
  %v1129 = vunpack.c.h.b16 %v786
  %v1130 = vunpack.c.l.b16 %v787
  %v1131 = vunpack.c.h.b16 %v787
  %v1132 = vunpack.c.l.b16 %v788
  %v1133 = vunpack.c.h.b16 %v788
  %v1134 = vunpack.c.l.b16 %v789
  %v1135 = vunpack.c.h.b16 %v789
  %v1136 = vunpack.c.l.b16 %v790
  %v1137 = vunpack.c.h.b16 %v790
  %v1138 = vunpack.c.l.b16 %v791
  %v1139 = vunpack.c.h.b16 %v791
  %v1140 = vunpack.c.l.b16 %v792
  %v1141 = vunpack.c.h.b16 %v792
  %v1142 = vunpack.c.l.b16 %v793
  %v1143 = vunpack.c.h.b16 %v793
  %v1144 = vunpack.c.l.b16 %v794
  %v1145 = vunpack.c.h.b16 %v794
  %v1146 = vunpack.c.l.b16 %v795
  %v1147 = vunpack.c.h.b16 %v795
  %v1148 = vunpack.c.l.b16 %v796
  %v1149 = vunpack.c.h.b16 %v796
  %v1150 = vunpack.c.l.b16 %v797
  %v1151 = vunpack.c.h.b16 %v797
  %v1152 = vunpack.c.l.b16 %v798
  %v1153 = vunpack.c.h.b16 %v798
  %v1154 = vunpack.c.l.b16 %v799
  %v1155 = vunpack.c.h.b16 %v799
  %v1156 = vunpack.c.l.b16 %v800
  %v1157 = vunpack.c.h.b16 %v800
  %v1158 = vunpack.c.l.b16 %v801
  %v1159 = vunpack.c.h.b16 %v801
  %v1160 = vunpack.c.l.b16 %v802
  %v1161 = vunpack.c.h.b16 %v802
  %v1162 = vunpack.c.l.b16 %v803
  %v1163 = vunpack.c.h.b16 %v803
  %v1164 = vunpack.c.l.b16 %v804
  %v1165 = vunpack.c.h.b16 %v804
  %v1166 = vunpack.c.l.b16 %v805
  %v1167 = vunpack.c.h.b16 %v805
  %v1168 = vunpack.c.l.b16 %v806
  %v1169 = vunpack.c.h.b16 %v806
  %v1170 = vunpack.c.l.b16 %v807
  %v1171 = vunpack.c.h.b16 %v807
  %v1172 = vunpack.c.l.b16 %v808
  %v1173 = vunpack.c.h.b16 %v808
  %v1174 = vunpack.c.l.b16 %v809
  %v1175 = vunpack.c.h.b16 %v809
  %v1176 = vunpack.c.l.b16 %v810
  %v1177 = vunpack.c.h.b16 %v810
  %v1178 = vunpack.c.l.b16 %v811
  %v1179 = vunpack.c.h.b16 %v811
  %v1180 = vunpack.c.l.b16 %v812
  %v1181 = vunpack.c.h.b16 %v812
  %v1182 = vunpack.c.l.b16 %v813
  %v1183 = vunpack.c.h.b16 %v813
  %v1184 = vunpack.c.l.b16 %v814
  %v1185 = vunpack.c.h.b16 %v814
  %v1186 = vunpack.c.l.b16 %v815
  %v1187 = vunpack.c.h.b16 %v815
  %v1188 = vunpack.c.l.b16 %v816
  %v1189 = vunpack.c.h.b16 %v816
  %v1190 = vunpack.c.l.b16 %v817
  %v1191 = vunpack.c.h.b16 %v817
  %v1192 = vunpack.c.l.b16 %v818
  %v1193 = vunpack.c.h.b16 %v818
  %v1194 = vunpack.c.l.b16 %v819
  %v1195 = vunpack.c.h.b16 %v819
  %v1196 = vunpack.c.l.b16 %v820
  %v1197 = vunpack.c.h.b16 %v820
  %v1198 = vunpack.c.l.b16 %v821
  %v1199 = vunpack.c.h.b16 %v821
  %v1200 = vunpack.c.l.b16 %v822
  %v1201 = vunpack.c.h.b16 %v822
  %v1202 = vunpack.c.l.b16 %v823
  %v1203 = vunpack.c.h.b16 %v823
  %v1204 = vunpack.c.l.b16 %v824
  %v1205 = vunpack.c.h.b16 %v824
  %v1206 = vunpack.c.l.b16 %v825
  %v1207 = vunpack.c.h.b16 %v825
  %v1208 = vunpack.c.l.b16 %v826
  %v1209 = vunpack.c.h.b16 %v826
  %v1210 = vunpack.c.l.b16 %v827
  %v1211 = vunpack.c.h.b16 %v827
  %v1212 = vunpack.c.l.b16 %v828
  %v1213 = vunpack.c.h.b16 %v828
  %v1214 = vunpack.c.l.b16 %v829
  %v1215 = vunpack.c.h.b16 %v829
  %v1216 = vunpack.c.l.b16 %v830
  %v1217 = vunpack.c.h.b16 %v830
  %v1218 = vunpack.c.l.b16 %v831
  %v1219 = vunpack.c.h.b16 %v831
  %v1220 = vunpack.c.l.b16 %v832
  %v1221 = vunpack.c.h.b16 %v832
  %v1222 = vunpack.c.l.b16 %v833
  %v1223 = vunpack.c.h.b16 %v833
  %v1224 = vunpack.c.l.b16 %v834
  %v1225 = vunpack.c.h.b16 %v834
  %v1226 = vunpack.c.l.b16 %v835
  %v1227 = vunpack.c.h.b16 %v835
  %v1228 = vunpack.c.l.b16 %v836
  %v1229 = vunpack.c.h.b16 %v836
  %v1230 = vunpack.c.l.b16 %v837
  %v1231 = vunpack.c.h.b16 %v837
  %v1232 = vunpack.c.l.b16 %v838
  %v1233 = vunpack.c.h.b16 %v838
  %v1234 = vunpack.c.l.b16 %v839
  %v1235 = vunpack.c.h.b16 %v839
  %v1236 = vunpack.c.l.b16 %v840
  %v1237 = vunpack.c.h.b16 %v840
  %v1238 = vunpack.c.l.b16 %v841
  %v1239 = vunpack.c.h.b16 %v841
  %v1240 = vunpack.c.l.b16 %v842
  %v1241 = vunpack.c.h.b16 %v842
  %v1242 = vunpack.c.l.b16 %v843
  %v1243 = vunpack.c.h.b16 %v843
  %v1244 = vunpack.c.l.b16 %v844
  %v1245 = vunpack.c.h.b16 %v844
  %v1246 = vunpack.c.l.b16 %v845
  %v1247 = vunpack.c.h.b16 %v845
  %v1248 = vunpack.c.l.b16 %v846
  %v1249 = vunpack.c.h.b16 %v846
  %v1250 = vunpack.c.l.b16 %v847
  %v1251 = vunpack.c.h.b16 %v847
  %v1252 = vunpack.c.l.b16 %v848
  %v1253 = vunpack.c.h.b16 %v848
  %v1254 = vunpack.c.l.b16 %v849
  %v1255 = vunpack.c.h.b16 %v849
  %v1256 = vunpack.c.l.b16 %v850
  %v1257 = vunpack.c.h.b16 %v850
  %v1258 = vunpack.c.l.b16 %v851
  %v1259 = vunpack.c.h.b16 %v851
  %v1260 = vunpack.c.l.b16 %v852
  %v1261 = vunpack.c.h.b16 %v852
  %v1262 = vunpack.c.l.b16 %v853
  %v1263 = vunpack.c.h.b16 %v853
  %v1264 = vunpack.c.l.b16 %v854
  %v1265 = vunpack.c.h.b16 %v854
  %v1266 = vunpack.c.l.b16 %v855
  %v1267 = vunpack.c.h.b16 %v855
  %v1268 = vunpack.c.l.b16 %v856
  %v1269 = vunpack.c.h.b16 %v856
  %v1270 = vunpack.c.l.b16 %v857
  %v1271 = vunpack.c.h.b16 %v857
  %v1272 = vunpack.c.l.b16 %v858
  %v1273 = vunpack.c.h.b16 %v858
  %v1274 = vunpack.c.l.b16 %v859
  %v1275 = vunpack.c.h.b16 %v859
  %v1276 = vunpack.c.l.b16 %v860
  %v1277 = vunpack.c.h.b16 %v860
  %v1278 = vunpack.c.l.b16 %v861
  %v1279 = vunpack.c.h.b16 %v861
  %v1280 = vunpack.c.l.b16 %v862
  %v1281 = vunpack.c.h.b16 %v862
  %v1282 = vunpack.c.l.b16 %v863
  %v1283 = vunpack.c.h.b16 %v863
  %v1284 = vunpack.c.l.b16 %v864
  %v1285 = vunpack.c.h.b16 %v864
  %v1286 = vunpack.c.l.b16 %v865
  %v1287 = vunpack.c.h.b16 %v865
  %v1288 = vunpack.c.l.b16 %v866
  %v1289 = vunpack.c.h.b16 %v866
  %v1290 = vunpack.c.l.b16 %v867
  %v1291 = vunpack.c.h.b16 %v867
  %v1292 = vunpack.c.l.b16 %v868
  %v1293 = vunpack.c.h.b16 %v868
  %v1294 = vunpack.c.l.b16 %v869
  %v1295 = vunpack.c.h.b16 %v869
  %v1296 = vpack.c.b16 %v1048, %v1040
  %v1297 = vpack.c.b16 %v1049, %v1041
  %v1298 = vpack.c.b16 %v1050, %v1042
  %v1299 = vpack.c.b16 %v1051, %v1043
  %v1300 = vpack.c.b16 %v1052, %v1044
  %v1301 = vpack.c.b16 %v1053, %v1045
  %v1302 = vpack.c.b16 %v1054, %v1046
  %v1303 = vpack.c.b16 %v1055, %v1047
  %v1304 = vpack.c.b16 %v1064, %v1056
  %v1305 = vpack.c.b16 %v1065, %v1057
  %v1306 = vpack.c.b16 %v1066, %v1058
  %v1307 = vpack.c.b16 %v1067, %v1059
  %v1308 = vpack.c.b16 %v1068, %v1060
  %v1309 = vpack.c.b16 %v1069, %v1061
  %v1310 = vpack.c.b16 %v1070, %v1062
  %v1311 = vpack.c.b16 %v1071, %v1063
  %v1312 = vpack.c.b16 %v1080, %v1072
  %v1313 = vpack.c.b16 %v1081, %v1073
  %v1314 = vpack.c.b16 %v1082, %v1074
  %v1315 = vpack.c.b16 %v1083, %v1075
  %v1316 = vpack.c.b16 %v1084, %v1076
  %v1317 = vpack.c.b16 %v1085, %v1077
  %v1318 = vpack.c.b16 %v1086, %v1078
  %v1319 = vpack.c.b16 %v1087, %v1079
  %v1320 = vpack.c.b16 %v1096, %v1088
  %v1321 = vpack.c.b16 %v1097, %v1089
  %v1322 = vpack.c.b16 %v1098, %v1090
  %v1323 = vpack.c.b16 %v1099, %v1091
  %v1324 = vpack.c.b16 %v1100, %v1092
  %v1325 = vpack.c.b16 %v1101, %v1093
  %v1326 = vpack.c.b16 %v1102, %v1094
  %v1327 = vpack.c.b16 %v1103, %v1095
  %v1328 = vpack.c.b16 %v1112, %v1104
  %v1329 = vpack.c.b16 %v1113, %v1105
  %v1330 = vpack.c.b16 %v1114, %v1106
  %v1331 = vpack.c.b16 %v1115, %v1107
  %v1332 = vpack.c.b16 %v1116, %v1108
  %v1333 = vpack.c.b16 %v1117, %v1109
  %v1334 = vpack.c.b16 %v1118, %v1110
  %v1335 = vpack.c.b16 %v1119, %v1111
  %v1336 = vpack.c.b16 %v1128, %v1120
  %v1337 = vpack.c.b16 %v1129, %v1121
  %v1338 = vpack.c.b16 %v1130, %v1122
  %v1339 = vpack.c.b16 %v1131, %v1123
  %v1340 = vpack.c.b16 %v1132, %v1124
  %v1341 = vpack.c.b16 %v1133, %v1125
  %v1342 = vpack.c.b16 %v1134, %v1126
  %v1343 = vpack.c.b16 %v1135, %v1127
  %v1344 = vpack.c.b16 %v1144, %v1136
  %v1345 = vpack.c.b16 %v1145, %v1137
  %v1346 = vpack.c.b16 %v1146, %v1138
  %v1347 = vpack.c.b16 %v1147, %v1139
  %v1348 = vpack.c.b16 %v1148, %v1140
  %v1349 = vpack.c.b16 %v1149, %v1141
  %v1350 = vpack.c.b16 %v1150, %v1142
  %v1351 = vpack.c.b16 %v1151, %v1143
  %v1352 = vpack.c.b16 %v1160, %v1152
  %v1353 = vpack.c.b16 %v1161, %v1153
  %v1354 = vpack.c.b16 %v1162, %v1154
  %v1355 = vpack.c.b16 %v1163, %v1155
  %v1356 = vpack.c.b16 %v1164, %v1156
  %v1357 = vpack.c.b16 %v1165, %v1157
  %v1358 = vpack.c.b16 %v1166, %v1158
  %v1359 = vpack.c.b16 %v1167, %v1159
  %v1360 = vpack.c.b16 %v1176, %v1168
  %v1361 = vpack.c.b16 %v1177, %v1169
  %v1362 = vpack.c.b16 %v1178, %v1170
  %v1363 = vpack.c.b16 %v1179, %v1171
  %v1364 = vpack.c.b16 %v1180, %v1172
  %v1365 = vpack.c.b16 %v1181, %v1173
  %v1366 = vpack.c.b16 %v1182, %v1174
  %v1367 = vpack.c.b16 %v1183, %v1175
  %v1368 = vpack.c.b16 %v1192, %v1184
  %v1369 = vpack.c.b16 %v1193, %v1185
  %v1370 = vpack.c.b16 %v1194, %v1186
  %v1371 = vpack.c.b16 %v1195, %v1187
  %v1372 = vpack.c.b16 %v1196, %v1188
  %v1373 = vpack.c.b16 %v1197, %v1189
  %v1374 = vpack.c.b16 %v1198, %v1190
  %v1375 = vpack.c.b16 %v1199, %v1191
  %v1376 = vpack.c.b16 %v1208, %v1200
  %v1377 = vpack.c.b16 %v1209, %v1201
  %v1378 = vpack.c.b16 %v1210, %v1202
  %v1379 = vpack.c.b16 %v1211, %v1203
  %v1380 = vpack.c.b16 %v1212, %v1204
  %v1381 = vpack.c.b16 %v1213, %v1205
  %v1382 = vpack.c.b16 %v1214, %v1206
  %v1383 = vpack.c.b16 %v1215, %v1207
  %v1384 = vpack.c.b16 %v1224, %v1216
  %v1385 = vpack.c.b16 %v1225, %v1217
  %v1386 = vpack.c.b16 %v1226, %v1218
  %v1387 = vpack.c.b16 %v1227, %v1219
  %v1388 = vpack.c.b16 %v1228, %v1220
  %v1389 = vpack.c.b16 %v1229, %v1221
  %v1390 = vpack.c.b16 %v1230, %v1222
  %v1391 = vpack.c.b16 %v1231, %v1223
  %v1392 = vpack.c.b16 %v1240, %v1232
  %v1393 = vpack.c.b16 %v1241, %v1233
  %v1394 = vpack.c.b16 %v1242, %v1234
  %v1395 = vpack.c.b16 %v1243, %v1235
  %v1396 = vpack.c.b16 %v1244, %v1236
  %v1397 = vpack.c.b16 %v1245, %v1237
  %v1398 = vpack.c.b16 %v1246, %v1238
  %v1399 = vpack.c.b16 %v1247, %v1239
  %v1400 = vpack.c.b16 %v1256, %v1248
  %v1401 = vpack.c.b16 %v1257, %v1249
  %v1402 = vpack.c.b16 %v1258, %v1250
  %v1403 = vpack.c.b16 %v1259, %v1251
  %v1404 = vpack.c.b16 %v1260, %v1252
  %v1405 = vpack.c.b16 %v1261, %v1253
  %v1406 = vpack.c.b16 %v1262, %v1254
  %v1407 = vpack.c.b16 %v1263, %v1255
  %v1408 = vpack.c.b16 %v1272, %v1264
  %v1409 = vpack.c.b16 %v1273, %v1265
  %v1410 = vpack.c.b16 %v1274, %v1266
  %v1411 = vpack.c.b16 %v1275, %v1267
  %v1412 = vpack.c.b16 %v1276, %v1268
  %v1413 = vpack.c.b16 %v1277, %v1269
  %v1414 = vpack.c.b16 %v1278, %v1270
  %v1415 = vpack.c.b16 %v1279, %v1271
  %v1416 = vpack.c.b16 %v1288, %v1280
  %v1417 = vpack.c.b16 %v1289, %v1281
  %v1418 = vpack.c.b16 %v1290, %v1282
  %v1419 = vpack.c.b16 %v1291, %v1283
  %v1420 = vpack.c.b16 %v1292, %v1284
  %v1421 = vpack.c.b16 %v1293, %v1285
  %v1422 = vpack.c.b16 %v1294, %v1286
  %v1423 = vpack.c.b16 %v1295, %v1287
  %1552 = vmatprep.subr.bf16.mxu0 %v1353
  %1553 = vmatpush1.bf16.msra.mxu0 %v1352
  %1554 = vmatprep.subr.bf16.mxu0 %v1345
  %1555 = vmatpush1.bf16.msra.mxu0 %v1344
  %1556 = vmatprep.subr.bf16.mxu0 %v1337
  %1557 = vmatpush1.bf16.msra.mxu0 %v1336
  %1558 = vmatprep.subr.bf16.mxu0 %v1329
  %1559 = vmatpush1.bf16.msra.mxu0 %v1328
  %1560 = vmatprep.subr.bf16.mxu0 %v1321
  %1561 = vmatpush1.bf16.msra.mxu0 %v1320
  %1562 = vmatprep.subr.bf16.mxu0 %v1313
  %1563 = vmatpush1.bf16.msra.mxu0 %v1312
  %1564 = vmatprep.subr.bf16.mxu0 %v1305
  %1565 = vmatpush1.bf16.msra.mxu0 %v1304
  %1566 = vmatprep.subr.bf16.mxu0 %v1297
  %1567 = vmatpush1.bf16.msra.mxu0 %v1296
  %1568 = vmatprep.subr.bf16.mxu0 %v1417
  %1569 = vmatpush2.bf16.msra.mxu0 %v1416
  %1570 = vmatprep.subr.bf16.mxu0 %v1409
  %1571 = vmatpush2.bf16.msra.mxu0 %v1408
  %1572 = vmatprep.subr.bf16.mxu0 %v1401
  %1573 = vmatpush2.bf16.msra.mxu0 %v1400
  %1574 = vmatprep.subr.bf16.mxu0 %v1393
  %1575 = vmatpush2.bf16.msra.mxu0 %v1392
  %1576 = vmatprep.subr.bf16.mxu0 %v1385
  %1577 = vmatpush2.bf16.msra.mxu0 %v1384
  %1578 = vmatprep.subr.bf16.mxu0 %v1377
  %1579 = vmatpush2.bf16.msra.mxu0 %v1376
  %1580 = vmatprep.subr.bf16.mxu0 %v1369
  %1581 = vmatpush2.bf16.msra.mxu0 %v1368
  %1582 = vmatprep.subr.bf16.mxu0 %v1361
  %1583 = vmatpush2.bf16.msra.mxu0 %v1360
  %1584 = vmatprep.mubr.bf16.mxu0 %v711
  %1585 = vmatmul.mubr.bf16.gmra.mxu0 %v710
  %v1586 = vpop.f32.mrf.mxu0
  %v1587 = vadd.f32 %v875, %v1586
  %v1588 = vpop.f32.mrf.mxu0
  %v1589 = vadd.f32 %v879, %v1588
  %v1590 = vpop.f32.mrf.mxu0
  %v1591 = vadd.f32 %v875, %v1590
  %v1592 = vpop.f32.mrf.mxu0
  %v1593 = vadd.f32 %v879, %v1592
  %1594 = vmatprep.mubr.bf16.mxu0 %v713
  %1595 = vmatmul.mubr.bf16.gmra.mxu0 %v712
  %v1596 = vpop.f32.mrf.mxu0
  %v1597 = vadd.f32 %v875, %v1596
  %v1598 = vpop.f32.mrf.mxu0
  %v1599 = vadd.f32 %v879, %v1598
  %v1600 = vpop.f32.mrf.mxu0
  %v1601 = vadd.f32 %v875, %v1600
  %v1602 = vpop.f32.mrf.mxu0
  %v1603 = vadd.f32 %v879, %v1602
  %1604 = vmatprep.mubr.bf16.mxu0 %v715
  %1605 = vmatmul.mubr.bf16.gmra.mxu0 %v714
  %v1606 = vpop.f32.mrf.mxu0
  %v1607 = vadd.f32 %v875, %v1606
  %v1608 = vpop.f32.mrf.mxu0
  %v1609 = vadd.f32 %v879, %v1608
  %v1610 = vpop.f32.mrf.mxu0
  %v1611 = vadd.f32 %v875, %v1610
  %v1612 = vpop.f32.mrf.mxu0
  %v1613 = vadd.f32 %v879, %v1612
  %1614 = vmatprep.mubr.bf16.mxu0 %v717
  %1615 = vmatmul.mubr.bf16.gmra.mxu0 %v716
  %v1616 = vpop.f32.mrf.mxu0
  %v1617 = vadd.f32 %v875, %v1616
  %v1618 = vpop.f32.mrf.mxu0
  %v1619 = vadd.f32 %v879, %v1618
  %v1620 = vpop.f32.mrf.mxu0
  %v1621 = vadd.f32 %v875, %v1620
  %v1622 = vpop.f32.mrf.mxu0
  %v1623 = vadd.f32 %v879, %v1622
  %1624 = vmatprep.mubr.bf16.mxu0 %v719
  %1625 = vmatmul.mubr.bf16.gmra.mxu0 %v718
  %v1626 = vpop.f32.mrf.mxu0
  %v1627 = vadd.f32 %v875, %v1626
  %v1628 = vpop.f32.mrf.mxu0
  %v1629 = vadd.f32 %v879, %v1628
  %v1630 = vpop.f32.mrf.mxu0
  %v1631 = vadd.f32 %v875, %v1630
  %v1632 = vpop.f32.mrf.mxu0
  %v1633 = vadd.f32 %v879, %v1632
  %1634 = vmatprep.mubr.bf16.mxu0 %v721
  %1635 = vmatmul.mubr.bf16.gmra.mxu0 %v720
  %v1636 = vpop.f32.mrf.mxu0
  %v1637 = vadd.f32 %v875, %v1636
  %v1638 = vpop.f32.mrf.mxu0
  %v1639 = vadd.f32 %v879, %v1638
  %v1640 = vpop.f32.mrf.mxu0
  %v1641 = vadd.f32 %v875, %v1640
  %v1642 = vpop.f32.mrf.mxu0
  %v1643 = vadd.f32 %v879, %v1642
  %1644 = vmatprep.mubr.bf16.mxu0 %v723
  %1645 = vmatmul.mubr.bf16.gmra.mxu0 %v722
  %v1646 = vpop.f32.mrf.mxu0
  %v1647 = vadd.f32 %v875, %v1646
  %v1648 = vpop.f32.mrf.mxu0
  %v1649 = vadd.f32 %v879, %v1648
  %v1650 = vpop.f32.mrf.mxu0
  %v1651 = vadd.f32 %v875, %v1650
  %v1652 = vpop.f32.mrf.mxu0
  %v1653 = vadd.f32 %v879, %v1652
  %1654 = vmatprep.mubr.bf16.mxu0 %v725
  %1655 = vmatmul.mubr.bf16.gmra.mxu0 %v724
  %v1656 = vpop.f32.mrf.mxu0
  %v1657 = vadd.f32 %v875, %v1656
  %v1658 = vpop.f32.mrf.mxu0
  %v1659 = vadd.f32 %v879, %v1658
  %v1660 = vpop.f32.mrf.mxu0
  %v1661 = vadd.f32 %v875, %v1660
  %v1662 = vpop.f32.mrf.mxu0
  %v1663 = vadd.f32 %v879, %v1662
  %1664 = vmatprep.mubr.bf16.mxu0 %v727
  %1665 = vmatmul.mubr.bf16.gmra.mxu0 %v726
  %v1666 = vpop.f32.mrf.mxu0
  %v1667 = vadd.f32 %v875, %v1666
  %v1668 = vpop.f32.mrf.mxu0
  %v1669 = vadd.f32 %v879, %v1668
  %v1670 = vpop.f32.mrf.mxu0
  %v1671 = vadd.f32 %v875, %v1670
  %v1672 = vpop.f32.mrf.mxu0
  %v1673 = vadd.f32 %v879, %v1672
  %1674 = vmatprep.mubr.bf16.mxu0 %v729
  %1675 = vmatmul.mubr.bf16.gmra.mxu0 %v728
  %v1676 = vpop.f32.mrf.mxu0
  %v1677 = vadd.f32 %v875, %v1676
  %v1678 = vpop.f32.mrf.mxu0
  %v1679 = vadd.f32 %v879, %v1678
  %v1680 = vpop.f32.mrf.mxu0
  %v1681 = vadd.f32 %v875, %v1680
  %v1682 = vpop.f32.mrf.mxu0
  %v1683 = vadd.f32 %v879, %v1682
  %1684 = vmatprep.mubr.bf16.mxu0 %v731
  %1685 = vmatmul.mubr.bf16.gmra.mxu0 %v730
  %v1686 = vpop.f32.mrf.mxu0
  %v1687 = vadd.f32 %v875, %v1686
  %v1688 = vpop.f32.mrf.mxu0
  %v1689 = vadd.f32 %v879, %v1688
  %v1690 = vpop.f32.mrf.mxu0
  %v1691 = vadd.f32 %v875, %v1690
  %v1692 = vpop.f32.mrf.mxu0
  %v1693 = vadd.f32 %v879, %v1692
  %1694 = vmatprep.mubr.bf16.mxu0 %v733
  %1695 = vmatmul.mubr.bf16.gmra.mxu0 %v732
  %v1696 = vpop.f32.mrf.mxu0
  %v1697 = vadd.f32 %v875, %v1696
  %v1698 = vpop.f32.mrf.mxu0
  %v1699 = vadd.f32 %v879, %v1698
  %v1700 = vpop.f32.mrf.mxu0
  %v1701 = vadd.f32 %v875, %v1700
  %v1702 = vpop.f32.mrf.mxu0
  %v1703 = vadd.f32 %v879, %v1702
  %1704 = vmatprep.mubr.bf16.mxu0 %v735
  %1705 = vmatmul.mubr.bf16.gmra.mxu0 %v734
  %v1706 = vpop.f32.mrf.mxu0
  %v1707 = vadd.f32 %v875, %v1706
  %v1708 = vpop.f32.mrf.mxu0
  %v1709 = vadd.f32 %v879, %v1708
  %v1710 = vpop.f32.mrf.mxu0
  %v1711 = vadd.f32 %v875, %v1710
  %v1712 = vpop.f32.mrf.mxu0
  %v1713 = vadd.f32 %v879, %v1712
  %1714 = vmatprep.mubr.bf16.mxu0 %v737
  %1715 = vmatmul.mubr.bf16.gmra.mxu0 %v736
  %v1716 = vpop.f32.mrf.mxu0
  %v1717 = vadd.f32 %v875, %v1716
  %v1718 = vpop.f32.mrf.mxu0
  %v1719 = vadd.f32 %v879, %v1718
  %v1720 = vpop.f32.mrf.mxu0
  %v1721 = vadd.f32 %v875, %v1720
  %v1722 = vpop.f32.mrf.mxu0
  %v1723 = vadd.f32 %v879, %v1722
  %1724 = vmatprep.mubr.bf16.mxu0 %v739
  %1725 = vmatmul.mubr.bf16.gmra.mxu0 %v738
  %v1726 = vpop.f32.mrf.mxu0
  %v1727 = vadd.f32 %v875, %v1726
  %v1728 = vpop.f32.mrf.mxu0
  %v1729 = vadd.f32 %v879, %v1728
  %v1730 = vpop.f32.mrf.mxu0
  %v1731 = vadd.f32 %v875, %v1730
  %v1732 = vpop.f32.mrf.mxu0
  %v1733 = vadd.f32 %v879, %v1732
  %1734 = vmatprep.mubr.bf16.mxu0 %v741
  %1735 = vmatmul.mubr.bf16.gmra.mxu0 %v740
  %v1736 = vpop.f32.mrf.mxu0
  %v1737 = vadd.f32 %v875, %v1736
  %v1738 = vpop.f32.mrf.mxu0
  %v1739 = vadd.f32 %v879, %v1738
  %v1740 = vpop.f32.mrf.mxu0
  %v1741 = vadd.f32 %v875, %v1740
  %v1742 = vpop.f32.mrf.mxu0
  %v1743 = vadd.f32 %v879, %v1742
  %1744 = vdwg.mxu0
  %1745 = vmatprep.subr.bf16.mxu0 %v1355
  %1746 = vmatpush1.bf16.msra.mxu0 %v1354
  %1747 = vmatprep.subr.bf16.mxu0 %v1347
  %1748 = vmatpush1.bf16.msra.mxu0 %v1346
  %1749 = vmatprep.subr.bf16.mxu0 %v1339
  %1750 = vmatpush1.bf16.msra.mxu0 %v1338
  %1751 = vmatprep.subr.bf16.mxu0 %v1331
  %1752 = vmatpush1.bf16.msra.mxu0 %v1330
  %1753 = vmatprep.subr.bf16.mxu0 %v1323
  %1754 = vmatpush1.bf16.msra.mxu0 %v1322
  %1755 = vmatprep.subr.bf16.mxu0 %v1315
  %1756 = vmatpush1.bf16.msra.mxu0 %v1314
  %1757 = vmatprep.subr.bf16.mxu0 %v1307
  %1758 = vmatpush1.bf16.msra.mxu0 %v1306
  %1759 = vmatprep.subr.bf16.mxu0 %v1299
  %1760 = vmatpush1.bf16.msra.mxu0 %v1298
  %1761 = vmatprep.subr.bf16.mxu0 %v1419
  %1762 = vmatpush2.bf16.msra.mxu0 %v1418
  %1763 = vmatprep.subr.bf16.mxu0 %v1411
  %1764 = vmatpush2.bf16.msra.mxu0 %v1410
  %1765 = vmatprep.subr.bf16.mxu0 %v1403
  %1766 = vmatpush2.bf16.msra.mxu0 %v1402
  %1767 = vmatprep.subr.bf16.mxu0 %v1395
  %1768 = vmatpush2.bf16.msra.mxu0 %v1394
  %1769 = vmatprep.subr.bf16.mxu0 %v1387
  %1770 = vmatpush2.bf16.msra.mxu0 %v1386
  %1771 = vmatprep.subr.bf16.mxu0 %v1379
  %1772 = vmatpush2.bf16.msra.mxu0 %v1378
  %1773 = vmatprep.subr.bf16.mxu0 %v1371
  %1774 = vmatpush2.bf16.msra.mxu0 %v1370
  %1775 = vmatprep.subr.bf16.mxu0 %v1363
  %1776 = vmatpush2.bf16.msra.mxu0 %v1362
  %1777 = vmatprep.mubr.bf16.mxu0 %v711
  %1778 = vmatmul.mubr.bf16.gmra.mxu0 %v710
  %v1779 = vpop.f32.mrf.mxu0
  %v1780 = vadd.f32 %v883, %v1779
  %v1781 = vpop.f32.mrf.mxu0
  %v1782 = vadd.f32 %v887, %v1781
  %v1783 = vpop.f32.mrf.mxu0
  %v1784 = vadd.f32 %v883, %v1783
  %v1785 = vpop.f32.mrf.mxu0
  %v1786 = vadd.f32 %v887, %v1785
  %1787 = vmatprep.mubr.bf16.mxu0 %v713
  %1788 = vmatmul.mubr.bf16.gmra.mxu0 %v712
  %v1789 = vpop.f32.mrf.mxu0
  %v1790 = vadd.f32 %v883, %v1789
  %v1791 = vpop.f32.mrf.mxu0
  %v1792 = vadd.f32 %v887, %v1791
  %v1793 = vpop.f32.mrf.mxu0
  %v1794 = vadd.f32 %v883, %v1793
  %v1795 = vpop.f32.mrf.mxu0
  %v1796 = vadd.f32 %v887, %v1795
  %1797 = vmatprep.mubr.bf16.mxu0 %v715
  %1798 = vmatmul.mubr.bf16.gmra.mxu0 %v714
  %v1799 = vpop.f32.mrf.mxu0
  %v1800 = vadd.f32 %v883, %v1799
  %v1801 = vpop.f32.mrf.mxu0
  %v1802 = vadd.f32 %v887, %v1801
  %v1803 = vpop.f32.mrf.mxu0
  %v1804 = vadd.f32 %v883, %v1803
  %v1805 = vpop.f32.mrf.mxu0
  %v1806 = vadd.f32 %v887, %v1805
  %1807 = vmatprep.mubr.bf16.mxu0 %v717
  %1808 = vmatmul.mubr.bf16.gmra.mxu0 %v716
  %v1809 = vpop.f32.mrf.mxu0
  %v1810 = vadd.f32 %v883, %v1809
  %v1811 = vpop.f32.mrf.mxu0
  %v1812 = vadd.f32 %v887, %v1811
  %v1813 = vpop.f32.mrf.mxu0
  %v1814 = vadd.f32 %v883, %v1813
  %v1815 = vpop.f32.mrf.mxu0
  %v1816 = vadd.f32 %v887, %v1815
  %1817 = vmatprep.mubr.bf16.mxu0 %v719
  %1818 = vmatmul.mubr.bf16.gmra.mxu0 %v718
  %v1819 = vpop.f32.mrf.mxu0
  %v1820 = vadd.f32 %v883, %v1819
  %v1821 = vpop.f32.mrf.mxu0
  %v1822 = vadd.f32 %v887, %v1821
  %v1823 = vpop.f32.mrf.mxu0
  %v1824 = vadd.f32 %v883, %v1823
  %v1825 = vpop.f32.mrf.mxu0
  %v1826 = vadd.f32 %v887, %v1825
  %1827 = vmatprep.mubr.bf16.mxu0 %v721
  %1828 = vmatmul.mubr.bf16.gmra.mxu0 %v720
  %v1829 = vpop.f32.mrf.mxu0
  %v1830 = vadd.f32 %v883, %v1829
  %v1831 = vpop.f32.mrf.mxu0
  %v1832 = vadd.f32 %v887, %v1831
  %v1833 = vpop.f32.mrf.mxu0
  %v1834 = vadd.f32 %v883, %v1833
  %v1835 = vpop.f32.mrf.mxu0
  %v1836 = vadd.f32 %v887, %v1835
  %1837 = vmatprep.mubr.bf16.mxu0 %v723
  %1838 = vmatmul.mubr.bf16.gmra.mxu0 %v722
  %v1839 = vpop.f32.mrf.mxu0
  %v1840 = vadd.f32 %v883, %v1839
  %v1841 = vpop.f32.mrf.mxu0
  %v1842 = vadd.f32 %v887, %v1841
  %v1843 = vpop.f32.mrf.mxu0
  %v1844 = vadd.f32 %v883, %v1843
  %v1845 = vpop.f32.mrf.mxu0
  %v1846 = vadd.f32 %v887, %v1845
  %1847 = vmatprep.mubr.bf16.mxu0 %v725
  %1848 = vmatmul.mubr.bf16.gmra.mxu0 %v724
  %v1849 = vpop.f32.mrf.mxu0
  %v1850 = vadd.f32 %v883, %v1849
  %v1851 = vpop.f32.mrf.mxu0
  %v1852 = vadd.f32 %v887, %v1851
  %v1853 = vpop.f32.mrf.mxu0
  %v1854 = vadd.f32 %v883, %v1853
  %v1855 = vpop.f32.mrf.mxu0
  %v1856 = vadd.f32 %v887, %v1855
  %1857 = vmatprep.mubr.bf16.mxu0 %v727
  %1858 = vmatmul.mubr.bf16.gmra.mxu0 %v726
  %v1859 = vpop.f32.mrf.mxu0
  %v1860 = vadd.f32 %v883, %v1859
  %v1861 = vpop.f32.mrf.mxu0
  %v1862 = vadd.f32 %v887, %v1861
  %v1863 = vpop.f32.mrf.mxu0
  %v1864 = vadd.f32 %v883, %v1863
  %v1865 = vpop.f32.mrf.mxu0
  %v1866 = vadd.f32 %v887, %v1865
  %1867 = vmatprep.mubr.bf16.mxu0 %v729
  %1868 = vmatmul.mubr.bf16.gmra.mxu0 %v728
  %v1869 = vpop.f32.mrf.mxu0
  %v1870 = vadd.f32 %v883, %v1869
  %v1871 = vpop.f32.mrf.mxu0
  %v1872 = vadd.f32 %v887, %v1871
  %v1873 = vpop.f32.mrf.mxu0
  %v1874 = vadd.f32 %v883, %v1873
  %v1875 = vpop.f32.mrf.mxu0
  %v1876 = vadd.f32 %v887, %v1875
  %1877 = vmatprep.mubr.bf16.mxu0 %v731
  %1878 = vmatmul.mubr.bf16.gmra.mxu0 %v730
  %v1879 = vpop.f32.mrf.mxu0
  %v1880 = vadd.f32 %v883, %v1879
  %v1881 = vpop.f32.mrf.mxu0
  %v1882 = vadd.f32 %v887, %v1881
  %v1883 = vpop.f32.mrf.mxu0
  %v1884 = vadd.f32 %v883, %v1883
  %v1885 = vpop.f32.mrf.mxu0
  %v1886 = vadd.f32 %v887, %v1885
  %1887 = vmatprep.mubr.bf16.mxu0 %v733
  %1888 = vmatmul.mubr.bf16.gmra.mxu0 %v732
  %v1889 = vpop.f32.mrf.mxu0
  %v1890 = vadd.f32 %v883, %v1889
  %v1891 = vpop.f32.mrf.mxu0
  %v1892 = vadd.f32 %v887, %v1891
  %v1893 = vpop.f32.mrf.mxu0
  %v1894 = vadd.f32 %v883, %v1893
  %v1895 = vpop.f32.mrf.mxu0
  %v1896 = vadd.f32 %v887, %v1895
  %1897 = vmatprep.mubr.bf16.mxu0 %v735
  %1898 = vmatmul.mubr.bf16.gmra.mxu0 %v734
  %v1899 = vpop.f32.mrf.mxu0
  %v1900 = vadd.f32 %v883, %v1899
  %v1901 = vpop.f32.mrf.mxu0
  %v1902 = vadd.f32 %v887, %v1901
  %v1903 = vpop.f32.mrf.mxu0
  %v1904 = vadd.f32 %v883, %v1903
  %v1905 = vpop.f32.mrf.mxu0
  %v1906 = vadd.f32 %v887, %v1905
  %1907 = vmatprep.mubr.bf16.mxu0 %v737
  %1908 = vmatmul.mubr.bf16.gmra.mxu0 %v736
  %v1909 = vpop.f32.mrf.mxu0
  %v1910 = vadd.f32 %v883, %v1909
  %v1911 = vpop.f32.mrf.mxu0
  %v1912 = vadd.f32 %v887, %v1911
  %v1913 = vpop.f32.mrf.mxu0
  %v1914 = vadd.f32 %v883, %v1913
  %v1915 = vpop.f32.mrf.mxu0
  %v1916 = vadd.f32 %v887, %v1915
  %1917 = vmatprep.mubr.bf16.mxu0 %v739
  %1918 = vmatmul.mubr.bf16.gmra.mxu0 %v738
  %v1919 = vpop.f32.mrf.mxu0
  %v1920 = vadd.f32 %v883, %v1919
  %v1921 = vpop.f32.mrf.mxu0
  %v1922 = vadd.f32 %v887, %v1921
  %v1923 = vpop.f32.mrf.mxu0
  %v1924 = vadd.f32 %v883, %v1923
  %v1925 = vpop.f32.mrf.mxu0
  %v1926 = vadd.f32 %v887, %v1925
  %1927 = vmatprep.mubr.bf16.mxu0 %v741
  %1928 = vmatmul.mubr.bf16.gmra.mxu0 %v740
  %v1929 = vpop.f32.mrf.mxu0
  %v1930 = vadd.f32 %v883, %v1929
  %v1931 = vpop.f32.mrf.mxu0
  %v1932 = vadd.f32 %v887, %v1931
  %v1933 = vpop.f32.mrf.mxu0
  %v1934 = vadd.f32 %v883, %v1933
  %v1935 = vpop.f32.mrf.mxu0
  %v1936 = vadd.f32 %v887, %v1935
  %1937 = vdwg.mxu0
  %1938 = vmatprep.subr.bf16.mxu0 %v1357
  %1939 = vmatpush1.bf16.msra.mxu0 %v1356
  %1940 = vmatprep.subr.bf16.mxu0 %v1349
  %1941 = vmatpush1.bf16.msra.mxu0 %v1348
  %1942 = vmatprep.subr.bf16.mxu0 %v1341
  %1943 = vmatpush1.bf16.msra.mxu0 %v1340
  %1944 = vmatprep.subr.bf16.mxu0 %v1333
  %1945 = vmatpush1.bf16.msra.mxu0 %v1332
  %1946 = vmatprep.subr.bf16.mxu0 %v1325
  %1947 = vmatpush1.bf16.msra.mxu0 %v1324
  %1948 = vmatprep.subr.bf16.mxu0 %v1317
  %1949 = vmatpush1.bf16.msra.mxu0 %v1316
  %1950 = vmatprep.subr.bf16.mxu0 %v1309
  %1951 = vmatpush1.bf16.msra.mxu0 %v1308
  %1952 = vmatprep.subr.bf16.mxu0 %v1301
  %1953 = vmatpush1.bf16.msra.mxu0 %v1300
  %1954 = vmatprep.subr.bf16.mxu0 %v1421
  %1955 = vmatpush2.bf16.msra.mxu0 %v1420
  %1956 = vmatprep.subr.bf16.mxu0 %v1413
  %1957 = vmatpush2.bf16.msra.mxu0 %v1412
  %1958 = vmatprep.subr.bf16.mxu0 %v1405
  %1959 = vmatpush2.bf16.msra.mxu0 %v1404
  %1960 = vmatprep.subr.bf16.mxu0 %v1397
  %1961 = vmatpush2.bf16.msra.mxu0 %v1396
  %1962 = vmatprep.subr.bf16.mxu0 %v1389
  %1963 = vmatpush2.bf16.msra.mxu0 %v1388
  %1964 = vmatprep.subr.bf16.mxu0 %v1381
  %1965 = vmatpush2.bf16.msra.mxu0 %v1380
  %1966 = vmatprep.subr.bf16.mxu0 %v1373
  %1967 = vmatpush2.bf16.msra.mxu0 %v1372
  %1968 = vmatprep.subr.bf16.mxu0 %v1365
  %1969 = vmatpush2.bf16.msra.mxu0 %v1364
  %1970 = vmatprep.mubr.bf16.mxu0 %v711
  %1971 = vmatmul.mubr.bf16.gmra.mxu0 %v710
  %v1972 = vpop.f32.mrf.mxu0
  %v1973 = vadd.f32 %v891, %v1972
  %v1974 = vpop.f32.mrf.mxu0
  %v1975 = vadd.f32 %v895, %v1974
  %v1976 = vpop.f32.mrf.mxu0
  %v1977 = vadd.f32 %v891, %v1976
  %v1978 = vpop.f32.mrf.mxu0
  %v1979 = vadd.f32 %v895, %v1978
  %1980 = vmatprep.mubr.bf16.mxu0 %v713
  %1981 = vmatmul.mubr.bf16.gmra.mxu0 %v712
  %v1982 = vpop.f32.mrf.mxu0
  %v1983 = vadd.f32 %v891, %v1982
  %v1984 = vpop.f32.mrf.mxu0
  %v1985 = vadd.f32 %v895, %v1984
  %v1986 = vpop.f32.mrf.mxu0
  %v1987 = vadd.f32 %v891, %v1986
  %v1988 = vpop.f32.mrf.mxu0
  %v1989 = vadd.f32 %v895, %v1988
  %1990 = vmatprep.mubr.bf16.mxu0 %v715
  %1991 = vmatmul.mubr.bf16.gmra.mxu0 %v714
  %v1992 = vpop.f32.mrf.mxu0
  %v1993 = vadd.f32 %v891, %v1992
  %v1994 = vpop.f32.mrf.mxu0
  %v1995 = vadd.f32 %v895, %v1994
  %v1996 = vpop.f32.mrf.mxu0
  %v1997 = vadd.f32 %v891, %v1996
  %v1998 = vpop.f32.mrf.mxu0
  %v1999 = vadd.f32 %v895, %v1998
  %2000 = vmatprep.mubr.bf16.mxu0 %v717
  %2001 = vmatmul.mubr.bf16.gmra.mxu0 %v716
  %v2002 = vpop.f32.mrf.mxu0
  %v2003 = vadd.f32 %v891, %v2002
  %v2004 = vpop.f32.mrf.mxu0
  %v2005 = vadd.f32 %v895, %v2004
  %v2006 = vpop.f32.mrf.mxu0
  %v2007 = vadd.f32 %v891, %v2006
  %v2008 = vpop.f32.mrf.mxu0
  %v2009 = vadd.f32 %v895, %v2008
  %2010 = vmatprep.mubr.bf16.mxu0 %v719
  %2011 = vmatmul.mubr.bf16.gmra.mxu0 %v718
  %v2012 = vpop.f32.mrf.mxu0
  %v2013 = vadd.f32 %v891, %v2012
  %v2014 = vpop.f32.mrf.mxu0
  %v2015 = vadd.f32 %v895, %v2014
  %v2016 = vpop.f32.mrf.mxu0
  %v2017 = vadd.f32 %v891, %v2016
  %v2018 = vpop.f32.mrf.mxu0
  %v2019 = vadd.f32 %v895, %v2018
  %2020 = vmatprep.mubr.bf16.mxu0 %v721
  %2021 = vmatmul.mubr.bf16.gmra.mxu0 %v720
  %v2022 = vpop.f32.mrf.mxu0
  %v2023 = vadd.f32 %v891, %v2022
  %v2024 = vpop.f32.mrf.mxu0
  %v2025 = vadd.f32 %v895, %v2024
  %v2026 = vpop.f32.mrf.mxu0
  %v2027 = vadd.f32 %v891, %v2026
  %v2028 = vpop.f32.mrf.mxu0
  %v2029 = vadd.f32 %v895, %v2028
  %2030 = vmatprep.mubr.bf16.mxu0 %v723
  %2031 = vmatmul.mubr.bf16.gmra.mxu0 %v722
  %v2032 = vpop.f32.mrf.mxu0
  %v2033 = vadd.f32 %v891, %v2032
  %v2034 = vpop.f32.mrf.mxu0
  %v2035 = vadd.f32 %v895, %v2034
  %v2036 = vpop.f32.mrf.mxu0
  %v2037 = vadd.f32 %v891, %v2036
  %v2038 = vpop.f32.mrf.mxu0
  %v2039 = vadd.f32 %v895, %v2038
  %2040 = vmatprep.mubr.bf16.mxu0 %v725
  %2041 = vmatmul.mubr.bf16.gmra.mxu0 %v724
  %v2042 = vpop.f32.mrf.mxu0
  %v2043 = vadd.f32 %v891, %v2042
  %v2044 = vpop.f32.mrf.mxu0
  %v2045 = vadd.f32 %v895, %v2044
  %v2046 = vpop.f32.mrf.mxu0
  %v2047 = vadd.f32 %v891, %v2046
  %v2048 = vpop.f32.mrf.mxu0
  %v2049 = vadd.f32 %v895, %v2048
  %2050 = vmatprep.mubr.bf16.mxu0 %v727
  %2051 = vmatmul.mubr.bf16.gmra.mxu0 %v726
  %v2052 = vpop.f32.mrf.mxu0
  %v2053 = vadd.f32 %v891, %v2052
  %v2054 = vpop.f32.mrf.mxu0
  %v2055 = vadd.f32 %v895, %v2054
  %v2056 = vpop.f32.mrf.mxu0
  %v2057 = vadd.f32 %v891, %v2056
  %v2058 = vpop.f32.mrf.mxu0
  %v2059 = vadd.f32 %v895, %v2058
  %2060 = vmatprep.mubr.bf16.mxu0 %v729
  %2061 = vmatmul.mubr.bf16.gmra.mxu0 %v728
  %v2062 = vpop.f32.mrf.mxu0
  %v2063 = vadd.f32 %v891, %v2062
  %v2064 = vpop.f32.mrf.mxu0
  %v2065 = vadd.f32 %v895, %v2064
  %v2066 = vpop.f32.mrf.mxu0
  %v2067 = vadd.f32 %v891, %v2066
  %v2068 = vpop.f32.mrf.mxu0
  %v2069 = vadd.f32 %v895, %v2068
  %2070 = vmatprep.mubr.bf16.mxu0 %v731
  %2071 = vmatmul.mubr.bf16.gmra.mxu0 %v730
  %v2072 = vpop.f32.mrf.mxu0
  %v2073 = vadd.f32 %v891, %v2072
  %v2074 = vpop.f32.mrf.mxu0
  %v2075 = vadd.f32 %v895, %v2074
  %v2076 = vpop.f32.mrf.mxu0
  %v2077 = vadd.f32 %v891, %v2076
  %v2078 = vpop.f32.mrf.mxu0
  %v2079 = vadd.f32 %v895, %v2078
  %2080 = vmatprep.mubr.bf16.mxu0 %v733
  %2081 = vmatmul.mubr.bf16.gmra.mxu0 %v732
  %v2082 = vpop.f32.mrf.mxu0
  %v2083 = vadd.f32 %v891, %v2082
  %v2084 = vpop.f32.mrf.mxu0
  %v2085 = vadd.f32 %v895, %v2084
  %v2086 = vpop.f32.mrf.mxu0
  %v2087 = vadd.f32 %v891, %v2086
  %v2088 = vpop.f32.mrf.mxu0
  %v2089 = vadd.f32 %v895, %v2088
  %2090 = vmatprep.mubr.bf16.mxu0 %v735
  %2091 = vmatmul.mubr.bf16.gmra.mxu0 %v734
  %v2092 = vpop.f32.mrf.mxu0
  %v2093 = vadd.f32 %v891, %v2092
  %v2094 = vpop.f32.mrf.mxu0
  %v2095 = vadd.f32 %v895, %v2094
  %v2096 = vpop.f32.mrf.mxu0
  %v2097 = vadd.f32 %v891, %v2096
  %v2098 = vpop.f32.mrf.mxu0
  %v2099 = vadd.f32 %v895, %v2098
  %2100 = vmatprep.mubr.bf16.mxu0 %v737
  %2101 = vmatmul.mubr.bf16.gmra.mxu0 %v736
  %v2102 = vpop.f32.mrf.mxu0
  %v2103 = vadd.f32 %v891, %v2102
  %v2104 = vpop.f32.mrf.mxu0
  %v2105 = vadd.f32 %v895, %v2104
  %v2106 = vpop.f32.mrf.mxu0
  %v2107 = vadd.f32 %v891, %v2106
  %v2108 = vpop.f32.mrf.mxu0
  %v2109 = vadd.f32 %v895, %v2108
  %2110 = vmatprep.mubr.bf16.mxu0 %v739
  %2111 = vmatmul.mubr.bf16.gmra.mxu0 %v738
  %v2112 = vpop.f32.mrf.mxu0
  %v2113 = vadd.f32 %v891, %v2112
  %v2114 = vpop.f32.mrf.mxu0
  %v2115 = vadd.f32 %v895, %v2114
  %v2116 = vpop.f32.mrf.mxu0
  %v2117 = vadd.f32 %v891, %v2116
  %v2118 = vpop.f32.mrf.mxu0
  %v2119 = vadd.f32 %v895, %v2118
  %2120 = vmatprep.mubr.bf16.mxu0 %v741
  %2121 = vmatmul.mubr.bf16.gmra.mxu0 %v740
  %v2122 = vpop.f32.mrf.mxu0
  %v2123 = vadd.f32 %v891, %v2122
  %v2124 = vpop.f32.mrf.mxu0
  %v2125 = vadd.f32 %v895, %v2124
  %v2126 = vpop.f32.mrf.mxu0
  %v2127 = vadd.f32 %v891, %v2126
  %v2128 = vpop.f32.mrf.mxu0
  %v2129 = vadd.f32 %v895, %v2128
  %2130 = vdwg.mxu0
  %2131 = vmatprep.subr.bf16.mxu0 %v1359
  %2132 = vmatpush1.bf16.msra.mxu0 %v1358
  %2133 = vmatprep.subr.bf16.mxu0 %v1351
  %2134 = vmatpush1.bf16.msra.mxu0 %v1350
  %2135 = vmatprep.subr.bf16.mxu0 %v1343
  %2136 = vmatpush1.bf16.msra.mxu0 %v1342
  %2137 = vmatprep.subr.bf16.mxu0 %v1335
  %2138 = vmatpush1.bf16.msra.mxu0 %v1334
  %2139 = vmatprep.subr.bf16.mxu0 %v1327
  %2140 = vmatpush1.bf16.msra.mxu0 %v1326
  %2141 = vmatprep.subr.bf16.mxu0 %v1319
  %2142 = vmatpush1.bf16.msra.mxu0 %v1318
  %2143 = vmatprep.subr.bf16.mxu0 %v1311
  %2144 = vmatpush1.bf16.msra.mxu0 %v1310
  %2145 = vmatprep.subr.bf16.mxu0 %v1303
  %2146 = vmatpush1.bf16.msra.mxu0 %v1302
  %2147 = vmatprep.subr.bf16.mxu0 %v1423
  %2148 = vmatpush2.bf16.msra.mxu0 %v1422
  %2149 = vmatprep.subr.bf16.mxu0 %v1415
  %2150 = vmatpush2.bf16.msra.mxu0 %v1414
  %2151 = vmatprep.subr.bf16.mxu0 %v1407
  %2152 = vmatpush2.bf16.msra.mxu0 %v1406
  %2153 = vmatprep.subr.bf16.mxu0 %v1399
  %2154 = vmatpush2.bf16.msra.mxu0 %v1398
  %2155 = vmatprep.subr.bf16.mxu0 %v1391
  %2156 = vmatpush2.bf16.msra.mxu0 %v1390
  %2157 = vmatprep.subr.bf16.mxu0 %v1383
  %2158 = vmatpush2.bf16.msra.mxu0 %v1382
  %2159 = vmatprep.subr.bf16.mxu0 %v1375
  %2160 = vmatpush2.bf16.msra.mxu0 %v1374
  %2161 = vmatprep.subr.bf16.mxu0 %v1367
  %2162 = vmatpush2.bf16.msra.mxu0 %v1366
  %2163 = vmatprep.mubr.bf16.mxu0 %v711
  %2164 = vmatmul.mubr.bf16.gmra.mxu0 %v710
  %v2165 = vpop.f32.mrf.mxu0
  %v2166 = vadd.f32 %v899, %v2165
  %v2167 = vpop.f32.mrf.mxu0
  %v2168 = vadd.f32 %v903, %v2167
  %v2169 = vpop.f32.mrf.mxu0
  %v2170 = vadd.f32 %v899, %v2169
  %v2171 = vpop.f32.mrf.mxu0
  %v2172 = vadd.f32 %v903, %v2171
  %2173 = vmatprep.mubr.bf16.mxu0 %v713
  %2174 = vmatmul.mubr.bf16.gmra.mxu0 %v712
  %v2175 = vpop.f32.mrf.mxu0
  %v2176 = vadd.f32 %v899, %v2175
  %v2177 = vpop.f32.mrf.mxu0
  %v2178 = vadd.f32 %v903, %v2177
  %v2179 = vpop.f32.mrf.mxu0
  %v2180 = vadd.f32 %v899, %v2179
  %v2181 = vpop.f32.mrf.mxu0
  %v2182 = vadd.f32 %v903, %v2181
  %2183 = vmatprep.mubr.bf16.mxu0 %v715
  %2184 = vmatmul.mubr.bf16.gmra.mxu0 %v714
  %v2185 = vpop.f32.mrf.mxu0
  %v2186 = vadd.f32 %v899, %v2185
  %v2187 = vpop.f32.mrf.mxu0
  %v2188 = vadd.f32 %v903, %v2187
  %v2189 = vpop.f32.mrf.mxu0
  %v2190 = vadd.f32 %v899, %v2189
  %v2191 = vpop.f32.mrf.mxu0
  %v2192 = vadd.f32 %v903, %v2191
  %2193 = vmatprep.mubr.bf16.mxu0 %v717
  %2194 = vmatmul.mubr.bf16.gmra.mxu0 %v716
  %v2195 = vpop.f32.mrf.mxu0
  %v2196 = vadd.f32 %v899, %v2195
  %v2197 = vpop.f32.mrf.mxu0
  %v2198 = vadd.f32 %v903, %v2197
  %v2199 = vpop.f32.mrf.mxu0
  %v2200 = vadd.f32 %v899, %v2199
  %v2201 = vpop.f32.mrf.mxu0
  %v2202 = vadd.f32 %v903, %v2201
  %2203 = vmatprep.mubr.bf16.mxu0 %v719
  %2204 = vmatmul.mubr.bf16.gmra.mxu0 %v718
  %v2205 = vpop.f32.mrf.mxu0
  %v2206 = vadd.f32 %v899, %v2205
  %v2207 = vpop.f32.mrf.mxu0
  %v2208 = vadd.f32 %v903, %v2207
  %v2209 = vpop.f32.mrf.mxu0
  %v2210 = vadd.f32 %v899, %v2209
  %v2211 = vpop.f32.mrf.mxu0
  %v2212 = vadd.f32 %v903, %v2211
  %2213 = vmatprep.mubr.bf16.mxu0 %v721
  %2214 = vmatmul.mubr.bf16.gmra.mxu0 %v720
  %v2215 = vpop.f32.mrf.mxu0
  %v2216 = vadd.f32 %v899, %v2215
  %v2217 = vpop.f32.mrf.mxu0
  %v2218 = vadd.f32 %v903, %v2217
  %v2219 = vpop.f32.mrf.mxu0
  %v2220 = vadd.f32 %v899, %v2219
  %v2221 = vpop.f32.mrf.mxu0
  %v2222 = vadd.f32 %v903, %v2221
  %2223 = vmatprep.mubr.bf16.mxu0 %v723
  %2224 = vmatmul.mubr.bf16.gmra.mxu0 %v722
  %v2225 = vpop.f32.mrf.mxu0
  %v2226 = vadd.f32 %v899, %v2225
  %v2227 = vpop.f32.mrf.mxu0
  %v2228 = vadd.f32 %v903, %v2227
  %v2229 = vpop.f32.mrf.mxu0
  %v2230 = vadd.f32 %v899, %v2229
  %v2231 = vpop.f32.mrf.mxu0
  %v2232 = vadd.f32 %v903, %v2231
  %2233 = vmatprep.mubr.bf16.mxu0 %v725
  %2234 = vmatmul.mubr.bf16.gmra.mxu0 %v724
  %v2235 = vpop.f32.mrf.mxu0
  %v2236 = vadd.f32 %v899, %v2235
  %v2237 = vpop.f32.mrf.mxu0
  %v2238 = vadd.f32 %v903, %v2237
  %v2239 = vpop.f32.mrf.mxu0
  %v2240 = vadd.f32 %v899, %v2239
  %v2241 = vpop.f32.mrf.mxu0
  %v2242 = vadd.f32 %v903, %v2241
  %2243 = vmatprep.mubr.bf16.mxu0 %v727
  %2244 = vmatmul.mubr.bf16.gmra.mxu0 %v726
  %v2245 = vpop.f32.mrf.mxu0
  %v2246 = vadd.f32 %v899, %v2245
  %v2247 = vpop.f32.mrf.mxu0
  %v2248 = vadd.f32 %v903, %v2247
  %v2249 = vpop.f32.mrf.mxu0
  %v2250 = vadd.f32 %v899, %v2249
  %v2251 = vpop.f32.mrf.mxu0
  %v2252 = vadd.f32 %v903, %v2251
  %2253 = vmatprep.mubr.bf16.mxu0 %v729
  %2254 = vmatmul.mubr.bf16.gmra.mxu0 %v728
  %v2255 = vpop.f32.mrf.mxu0
  %v2256 = vadd.f32 %v899, %v2255
  %v2257 = vpop.f32.mrf.mxu0
  %v2258 = vadd.f32 %v903, %v2257
  %v2259 = vpop.f32.mrf.mxu0
  %v2260 = vadd.f32 %v899, %v2259
  %v2261 = vpop.f32.mrf.mxu0
  %v2262 = vadd.f32 %v903, %v2261
  %2263 = vmatprep.mubr.bf16.mxu0 %v731
  %2264 = vmatmul.mubr.bf16.gmra.mxu0 %v730
  %v2265 = vpop.f32.mrf.mxu0
  %v2266 = vadd.f32 %v899, %v2265
  %v2267 = vpop.f32.mrf.mxu0
  %v2268 = vadd.f32 %v903, %v2267
  %v2269 = vpop.f32.mrf.mxu0
  %v2270 = vadd.f32 %v899, %v2269
  %v2271 = vpop.f32.mrf.mxu0
  %v2272 = vadd.f32 %v903, %v2271
  %2273 = vmatprep.mubr.bf16.mxu0 %v733
  %2274 = vmatmul.mubr.bf16.gmra.mxu0 %v732
  %v2275 = vpop.f32.mrf.mxu0
  %v2276 = vadd.f32 %v899, %v2275
  %v2277 = vpop.f32.mrf.mxu0
  %v2278 = vadd.f32 %v903, %v2277
  %v2279 = vpop.f32.mrf.mxu0
  %v2280 = vadd.f32 %v899, %v2279
  %v2281 = vpop.f32.mrf.mxu0
  %v2282 = vadd.f32 %v903, %v2281
  %2283 = vmatprep.mubr.bf16.mxu0 %v735
  %2284 = vmatmul.mubr.bf16.gmra.mxu0 %v734
  %v2285 = vpop.f32.mrf.mxu0
  %v2286 = vadd.f32 %v899, %v2285
  %v2287 = vpop.f32.mrf.mxu0
  %v2288 = vadd.f32 %v903, %v2287
  %v2289 = vpop.f32.mrf.mxu0
  %v2290 = vadd.f32 %v899, %v2289
  %v2291 = vpop.f32.mrf.mxu0
  %v2292 = vadd.f32 %v903, %v2291
  %2293 = vmatprep.mubr.bf16.mxu0 %v737
  %2294 = vmatmul.mubr.bf16.gmra.mxu0 %v736
  %v2295 = vpop.f32.mrf.mxu0
  %v2296 = vadd.f32 %v899, %v2295
  %v2297 = vpop.f32.mrf.mxu0
  %v2298 = vadd.f32 %v903, %v2297
  %v2299 = vpop.f32.mrf.mxu0
  %v2300 = vadd.f32 %v899, %v2299
  %v2301 = vpop.f32.mrf.mxu0
  %v2302 = vadd.f32 %v903, %v2301
  %2303 = vmatprep.mubr.bf16.mxu0 %v739
  %2304 = vmatmul.mubr.bf16.gmra.mxu0 %v738
  %v2305 = vpop.f32.mrf.mxu0
  %v2306 = vadd.f32 %v899, %v2305
  %v2307 = vpop.f32.mrf.mxu0
  %v2308 = vadd.f32 %v903, %v2307
  %v2309 = vpop.f32.mrf.mxu0
  %v2310 = vadd.f32 %v899, %v2309
  %v2311 = vpop.f32.mrf.mxu0
  %v2312 = vadd.f32 %v903, %v2311
  %2313 = vmatprep.mubr.bf16.mxu0 %v741
  %2314 = vmatmul.mubr.bf16.gmra.mxu0 %v740
  %v2315 = vpop.f32.mrf.mxu0
  %v2316 = vadd.f32 %v899, %v2315
  %v2317 = vpop.f32.mrf.mxu0
  %v2318 = vadd.f32 %v903, %v2317
  %v2319 = vpop.f32.mrf.mxu0
  %v2320 = vadd.f32 %v899, %v2319
  %v2321 = vpop.f32.mrf.mxu0
  %v2322 = vadd.f32 %v903, %v2321
  %2323 = vdwg.mxu0
  %v2324 = vmax.f32 %v1587, 0.0
  %v2325 = vmax.f32 %v1589, 0.0
  %v2326 = vmax.f32 %v1780, 0.0
  %v2327 = vmax.f32 %v1782, 0.0
  %v2328 = vmax.f32 %v1973, 0.0
  %v2329 = vmax.f32 %v1975, 0.0
  %v2330 = vmax.f32 %v2166, 0.0
  %v2331 = vmax.f32 %v2168, 0.0
  %v2332 = vmax.f32 %v1591, 0.0
  %v2333 = vmax.f32 %v1593, 0.0
  %v2334 = vmax.f32 %v1784, 0.0
  %v2335 = vmax.f32 %v1786, 0.0
  %v2336 = vmax.f32 %v1977, 0.0
  %v2337 = vmax.f32 %v1979, 0.0
  %v2338 = vmax.f32 %v2170, 0.0
  %v2339 = vmax.f32 %v2172, 0.0
  %v2340 = vmax.f32 %v1597, 0.0
  %v2341 = vmax.f32 %v1599, 0.0
  %v2342 = vmax.f32 %v1790, 0.0
  %v2343 = vmax.f32 %v1792, 0.0
  %v2344 = vmax.f32 %v1983, 0.0
  %v2345 = vmax.f32 %v1985, 0.0
  %v2346 = vmax.f32 %v2176, 0.0
  %v2347 = vmax.f32 %v2178, 0.0
  %v2348 = vmax.f32 %v1601, 0.0
  %v2349 = vmax.f32 %v1603, 0.0
  %v2350 = vmax.f32 %v1794, 0.0
  %v2351 = vmax.f32 %v1796, 0.0
  %v2352 = vmax.f32 %v1987, 0.0
  %v2353 = vmax.f32 %v1989, 0.0
  %v2354 = vmax.f32 %v2180, 0.0
  %v2355 = vmax.f32 %v2182, 0.0
  %v2356 = vmax.f32 %v1607, 0.0
  %v2357 = vmax.f32 %v1609, 0.0
  %v2358 = vmax.f32 %v1800, 0.0
  %v2359 = vmax.f32 %v1802, 0.0
  %v2360 = vmax.f32 %v1993, 0.0
  %v2361 = vmax.f32 %v1995, 0.0
  %v2362 = vmax.f32 %v2186, 0.0
  %v2363 = vmax.f32 %v2188, 0.0
  %v2364 = vmax.f32 %v1611, 0.0
  %v2365 = vmax.f32 %v1613, 0.0
  %v2366 = vmax.f32 %v1804, 0.0
  %v2367 = vmax.f32 %v1806, 0.0
  %v2368 = vmax.f32 %v1997, 0.0
  %v2369 = vmax.f32 %v1999, 0.0
  %v2370 = vmax.f32 %v2190, 0.0
  %v2371 = vmax.f32 %v2192, 0.0
  %v2372 = vmax.f32 %v1617, 0.0
  %v2373 = vmax.f32 %v1619, 0.0
  %v2374 = vmax.f32 %v1810, 0.0
  %v2375 = vmax.f32 %v1812, 0.0
  %v2376 = vmax.f32 %v2003, 0.0
  %v2377 = vmax.f32 %v2005, 0.0
  %v2378 = vmax.f32 %v2196, 0.0
  %v2379 = vmax.f32 %v2198, 0.0
  %v2380 = vmax.f32 %v1621, 0.0
  %v2381 = vmax.f32 %v1623, 0.0
  %v2382 = vmax.f32 %v1814, 0.0
  %v2383 = vmax.f32 %v1816, 0.0
  %v2384 = vmax.f32 %v2007, 0.0
  %v2385 = vmax.f32 %v2009, 0.0
  %v2386 = vmax.f32 %v2200, 0.0
  %v2387 = vmax.f32 %v2202, 0.0
  %v2388 = vmax.f32 %v1627, 0.0
  %v2389 = vmax.f32 %v1629, 0.0
  %v2390 = vmax.f32 %v1820, 0.0
  %v2391 = vmax.f32 %v1822, 0.0
  %v2392 = vmax.f32 %v2013, 0.0
  %v2393 = vmax.f32 %v2015, 0.0
  %v2394 = vmax.f32 %v2206, 0.0
  %v2395 = vmax.f32 %v2208, 0.0
  %v2396 = vmax.f32 %v1631, 0.0
  %v2397 = vmax.f32 %v1633, 0.0
  %v2398 = vmax.f32 %v1824, 0.0
  %v2399 = vmax.f32 %v1826, 0.0
  %v2400 = vmax.f32 %v2017, 0.0
  %v2401 = vmax.f32 %v2019, 0.0
  %v2402 = vmax.f32 %v2210, 0.0
  %v2403 = vmax.f32 %v2212, 0.0
  %v2404 = vmax.f32 %v1637, 0.0
  %v2405 = vmax.f32 %v1639, 0.0
  %v2406 = vmax.f32 %v1830, 0.0
  %v2407 = vmax.f32 %v1832, 0.0
  %v2408 = vmax.f32 %v2023, 0.0
  %v2409 = vmax.f32 %v2025, 0.0
  %v2410 = vmax.f32 %v2216, 0.0
  %v2411 = vmax.f32 %v2218, 0.0
  %v2412 = vmax.f32 %v1641, 0.0
  %v2413 = vmax.f32 %v1643, 0.0
  %v2414 = vmax.f32 %v1834, 0.0
  %v2415 = vmax.f32 %v1836, 0.0
  %v2416 = vmax.f32 %v2027, 0.0
  %v2417 = vmax.f32 %v2029, 0.0
  %v2418 = vmax.f32 %v2220, 0.0
  %v2419 = vmax.f32 %v2222, 0.0
  %v2420 = vmax.f32 %v1647, 0.0
  %v2421 = vmax.f32 %v1649, 0.0
  %v2422 = vmax.f32 %v1840, 0.0
  %v2423 = vmax.f32 %v1842, 0.0
  %v2424 = vmax.f32 %v2033, 0.0
  %v2425 = vmax.f32 %v2035, 0.0
  %v2426 = vmax.f32 %v2226, 0.0
  %v2427 = vmax.f32 %v2228, 0.0
  %v2428 = vmax.f32 %v1651, 0.0
  %v2429 = vmax.f32 %v1653, 0.0
  %v2430 = vmax.f32 %v1844, 0.0
  %v2431 = vmax.f32 %v1846, 0.0
  %v2432 = vmax.f32 %v2037, 0.0
  %v2433 = vmax.f32 %v2039, 0.0
  %v2434 = vmax.f32 %v2230, 0.0
  %v2435 = vmax.f32 %v2232, 0.0
  %v2436 = vmax.f32 %v1657, 0.0
  %v2437 = vmax.f32 %v1659, 0.0
  %v2438 = vmax.f32 %v1850, 0.0
  %v2439 = vmax.f32 %v1852, 0.0
  %v2440 = vmax.f32 %v2043, 0.0
  %v2441 = vmax.f32 %v2045, 0.0
  %v2442 = vmax.f32 %v2236, 0.0
  %v2443 = vmax.f32 %v2238, 0.0
  %v2444 = vmax.f32 %v1661, 0.0
  %v2445 = vmax.f32 %v1663, 0.0
  %v2446 = vmax.f32 %v1854, 0.0
  %v2447 = vmax.f32 %v1856, 0.0
  %v2448 = vmax.f32 %v2047, 0.0
  %v2449 = vmax.f32 %v2049, 0.0
  %v2450 = vmax.f32 %v2240, 0.0
  %v2451 = vmax.f32 %v2242, 0.0
  %v2452 = vmax.f32 %v1667, 0.0
  %v2453 = vmax.f32 %v1669, 0.0
  %v2454 = vmax.f32 %v1860, 0.0
  %v2455 = vmax.f32 %v1862, 0.0
  %v2456 = vmax.f32 %v2053, 0.0
  %v2457 = vmax.f32 %v2055, 0.0
  %v2458 = vmax.f32 %v2246, 0.0
  %v2459 = vmax.f32 %v2248, 0.0
  %v2460 = vmax.f32 %v1671, 0.0
  %v2461 = vmax.f32 %v1673, 0.0
  %v2462 = vmax.f32 %v1864, 0.0
  %v2463 = vmax.f32 %v1866, 0.0
  %v2464 = vmax.f32 %v2057, 0.0
  %v2465 = vmax.f32 %v2059, 0.0
  %v2466 = vmax.f32 %v2250, 0.0
  %v2467 = vmax.f32 %v2252, 0.0
  %v2468 = vmax.f32 %v1677, 0.0
  %v2469 = vmax.f32 %v1679, 0.0
  %v2470 = vmax.f32 %v1870, 0.0
  %v2471 = vmax.f32 %v1872, 0.0
  %v2472 = vmax.f32 %v2063, 0.0
  %v2473 = vmax.f32 %v2065, 0.0
  %v2474 = vmax.f32 %v2256, 0.0
  %v2475 = vmax.f32 %v2258, 0.0
  %v2476 = vmax.f32 %v1681, 0.0
  %v2477 = vmax.f32 %v1683, 0.0
  %v2478 = vmax.f32 %v1874, 0.0
  %v2479 = vmax.f32 %v1876, 0.0
  %v2480 = vmax.f32 %v2067, 0.0
  %v2481 = vmax.f32 %v2069, 0.0
  %v2482 = vmax.f32 %v2260, 0.0
  %v2483 = vmax.f32 %v2262, 0.0
  %v2484 = vmax.f32 %v1687, 0.0
  %v2485 = vmax.f32 %v1689, 0.0
  %v2486 = vmax.f32 %v1880, 0.0
  %v2487 = vmax.f32 %v1882, 0.0
  %v2488 = vmax.f32 %v2073, 0.0
  %v2489 = vmax.f32 %v2075, 0.0
  %v2490 = vmax.f32 %v2266, 0.0
  %v2491 = vmax.f32 %v2268, 0.0
  %v2492 = vmax.f32 %v1691, 0.0
  %v2493 = vmax.f32 %v1693, 0.0
  %v2494 = vmax.f32 %v1884, 0.0
  %v2495 = vmax.f32 %v1886, 0.0
  %v2496 = vmax.f32 %v2077, 0.0
  %v2497 = vmax.f32 %v2079, 0.0
  %v2498 = vmax.f32 %v2270, 0.0
  %v2499 = vmax.f32 %v2272, 0.0
  %v2500 = vmax.f32 %v1697, 0.0
  %v2501 = vmax.f32 %v1699, 0.0
  %v2502 = vmax.f32 %v1890, 0.0
  %v2503 = vmax.f32 %v1892, 0.0
  %v2504 = vmax.f32 %v2083, 0.0
  %v2505 = vmax.f32 %v2085, 0.0
  %v2506 = vmax.f32 %v2276, 0.0
  %v2507 = vmax.f32 %v2278, 0.0
  %v2508 = vmax.f32 %v1701, 0.0
  %v2509 = vmax.f32 %v1703, 0.0
  %v2510 = vmax.f32 %v1894, 0.0
  %v2511 = vmax.f32 %v1896, 0.0
  %v2512 = vmax.f32 %v2087, 0.0
  %v2513 = vmax.f32 %v2089, 0.0
  %v2514 = vmax.f32 %v2280, 0.0
  %v2515 = vmax.f32 %v2282, 0.0
  %v2516 = vmax.f32 %v1707, 0.0
  %v2517 = vmax.f32 %v1709, 0.0
  %v2518 = vmax.f32 %v1900, 0.0
  %v2519 = vmax.f32 %v1902, 0.0
  %v2520 = vmax.f32 %v2093, 0.0
  %v2521 = vmax.f32 %v2095, 0.0
  %v2522 = vmax.f32 %v2286, 0.0
  %v2523 = vmax.f32 %v2288, 0.0
  %v2524 = vmax.f32 %v1711, 0.0
  %v2525 = vmax.f32 %v1713, 0.0
  %v2526 = vmax.f32 %v1904, 0.0
  %v2527 = vmax.f32 %v1906, 0.0
  %v2528 = vmax.f32 %v2097, 0.0
  %v2529 = vmax.f32 %v2099, 0.0
  %v2530 = vmax.f32 %v2290, 0.0
  %v2531 = vmax.f32 %v2292, 0.0
  %v2532 = vmax.f32 %v1717, 0.0
  %v2533 = vmax.f32 %v1719, 0.0
  %v2534 = vmax.f32 %v1910, 0.0
  %v2535 = vmax.f32 %v1912, 0.0
  %v2536 = vmax.f32 %v2103, 0.0
  %v2537 = vmax.f32 %v2105, 0.0
  %v2538 = vmax.f32 %v2296, 0.0
  %v2539 = vmax.f32 %v2298, 0.0
  %v2540 = vmax.f32 %v1721, 0.0
  %v2541 = vmax.f32 %v1723, 0.0
  %v2542 = vmax.f32 %v1914, 0.0
  %v2543 = vmax.f32 %v1916, 0.0
  %v2544 = vmax.f32 %v2107, 0.0
  %v2545 = vmax.f32 %v2109, 0.0
  %v2546 = vmax.f32 %v2300, 0.0
  %v2547 = vmax.f32 %v2302, 0.0
  %v2548 = vmax.f32 %v1727, 0.0
  %v2549 = vmax.f32 %v1729, 0.0
  %v2550 = vmax.f32 %v1920, 0.0
  %v2551 = vmax.f32 %v1922, 0.0
  %v2552 = vmax.f32 %v2113, 0.0
  %v2553 = vmax.f32 %v2115, 0.0
  %v2554 = vmax.f32 %v2306, 0.0
  %v2555 = vmax.f32 %v2308, 0.0
  %v2556 = vmax.f32 %v1731, 0.0
  %v2557 = vmax.f32 %v1733, 0.0
  %v2558 = vmax.f32 %v1924, 0.0
  %v2559 = vmax.f32 %v1926, 0.0
  %v2560 = vmax.f32 %v2117, 0.0
  %v2561 = vmax.f32 %v2119, 0.0
  %v2562 = vmax.f32 %v2310, 0.0
  %v2563 = vmax.f32 %v2312, 0.0
  %v2564 = vmax.f32 %v1737, 0.0
  %v2565 = vmax.f32 %v1739, 0.0
  %v2566 = vmax.f32 %v1930, 0.0
  %v2567 = vmax.f32 %v1932, 0.0
  %v2568 = vmax.f32 %v2123, 0.0
  %v2569 = vmax.f32 %v2125, 0.0
  %v2570 = vmax.f32 %v2316, 0.0
  %v2571 = vmax.f32 %v2318, 0.0
  %v2572 = vmax.f32 %v1741, 0.0
  %v2573 = vmax.f32 %v1743, 0.0
  %v2574 = vmax.f32 %v1934, 0.0
  %v2575 = vmax.f32 %v1936, 0.0
  %v2576 = vmax.f32 %v2127, 0.0
  %v2577 = vmax.f32 %v2129, 0.0
  %v2578 = vmax.f32 %v2320, 0.0
  %v2579 = vmax.f32 %v2322, 0.0
  %v2580 = vpack.c.bf16 %v2332, %v2324
  %v2581 = vpack.c.bf16 %v2333, %v2325
  %v2582 = vpack.c.bf16 %v2334, %v2326
  %v2583 = vpack.c.bf16 %v2335, %v2327
  %v2584 = vpack.c.bf16 %v2336, %v2328
  %v2585 = vpack.c.bf16 %v2337, %v2329
  %v2586 = vpack.c.bf16 %v2338, %v2330
  %v2587 = vpack.c.bf16 %v2339, %v2331
  %v2588 = vpack.c.bf16 %v2348, %v2340
  %v2589 = vpack.c.bf16 %v2349, %v2341
  %v2590 = vpack.c.bf16 %v2350, %v2342
  %v2591 = vpack.c.bf16 %v2351, %v2343
  %v2592 = vpack.c.bf16 %v2352, %v2344
  %v2593 = vpack.c.bf16 %v2353, %v2345
  %v2594 = vpack.c.bf16 %v2354, %v2346
  %v2595 = vpack.c.bf16 %v2355, %v2347
  %v2596 = vpack.c.bf16 %v2364, %v2356
  %v2597 = vpack.c.bf16 %v2365, %v2357
  %v2598 = vpack.c.bf16 %v2366, %v2358
  %v2599 = vpack.c.bf16 %v2367, %v2359
  %v2600 = vpack.c.bf16 %v2368, %v2360
  %v2601 = vpack.c.bf16 %v2369, %v2361
  %v2602 = vpack.c.bf16 %v2370, %v2362
  %v2603 = vpack.c.bf16 %v2371, %v2363
  %v2604 = vpack.c.bf16 %v2380, %v2372
  %v2605 = vpack.c.bf16 %v2381, %v2373
  %v2606 = vpack.c.bf16 %v2382, %v2374
  %v2607 = vpack.c.bf16 %v2383, %v2375
  %v2608 = vpack.c.bf16 %v2384, %v2376
  %v2609 = vpack.c.bf16 %v2385, %v2377
  %v2610 = vpack.c.bf16 %v2386, %v2378
  %v2611 = vpack.c.bf16 %v2387, %v2379
  %v2612 = vpack.c.bf16 %v2396, %v2388
  %v2613 = vpack.c.bf16 %v2397, %v2389
  %v2614 = vpack.c.bf16 %v2398, %v2390
  %v2615 = vpack.c.bf16 %v2399, %v2391
  %v2616 = vpack.c.bf16 %v2400, %v2392
  %v2617 = vpack.c.bf16 %v2401, %v2393
  %v2618 = vpack.c.bf16 %v2402, %v2394
  %v2619 = vpack.c.bf16 %v2403, %v2395
  %v2620 = vpack.c.bf16 %v2412, %v2404
  %v2621 = vpack.c.bf16 %v2413, %v2405
  %v2622 = vpack.c.bf16 %v2414, %v2406
  %v2623 = vpack.c.bf16 %v2415, %v2407
  %v2624 = vpack.c.bf16 %v2416, %v2408
  %v2625 = vpack.c.bf16 %v2417, %v2409
  %v2626 = vpack.c.bf16 %v2418, %v2410
  %v2627 = vpack.c.bf16 %v2419, %v2411
  %v2628 = vpack.c.bf16 %v2428, %v2420
  %v2629 = vpack.c.bf16 %v2429, %v2421
  %v2630 = vpack.c.bf16 %v2430, %v2422
  %v2631 = vpack.c.bf16 %v2431, %v2423
  %v2632 = vpack.c.bf16 %v2432, %v2424
  %v2633 = vpack.c.bf16 %v2433, %v2425
  %v2634 = vpack.c.bf16 %v2434, %v2426
  %v2635 = vpack.c.bf16 %v2435, %v2427
  %v2636 = vpack.c.bf16 %v2444, %v2436
  %v2637 = vpack.c.bf16 %v2445, %v2437
  %v2638 = vpack.c.bf16 %v2446, %v2438
  %v2639 = vpack.c.bf16 %v2447, %v2439
  %v2640 = vpack.c.bf16 %v2448, %v2440
  %v2641 = vpack.c.bf16 %v2449, %v2441
  %v2642 = vpack.c.bf16 %v2450, %v2442
  %v2643 = vpack.c.bf16 %v2451, %v2443
  %v2644 = vpack.c.bf16 %v2460, %v2452
  %v2645 = vpack.c.bf16 %v2461, %v2453
  %v2646 = vpack.c.bf16 %v2462, %v2454
  %v2647 = vpack.c.bf16 %v2463, %v2455
  %v2648 = vpack.c.bf16 %v2464, %v2456
  %v2649 = vpack.c.bf16 %v2465, %v2457
  %v2650 = vpack.c.bf16 %v2466, %v2458
  %v2651 = vpack.c.bf16 %v2467, %v2459
  %v2652 = vpack.c.bf16 %v2476, %v2468
  %v2653 = vpack.c.bf16 %v2477, %v2469
  %v2654 = vpack.c.bf16 %v2478, %v2470
  %v2655 = vpack.c.bf16 %v2479, %v2471
  %v2656 = vpack.c.bf16 %v2480, %v2472
  %v2657 = vpack.c.bf16 %v2481, %v2473
  %v2658 = vpack.c.bf16 %v2482, %v2474
  %v2659 = vpack.c.bf16 %v2483, %v2475
  %v2660 = vpack.c.bf16 %v2492, %v2484
  %v2661 = vpack.c.bf16 %v2493, %v2485
  %v2662 = vpack.c.bf16 %v2494, %v2486
  %v2663 = vpack.c.bf16 %v2495, %v2487
  %v2664 = vpack.c.bf16 %v2496, %v2488
  %v2665 = vpack.c.bf16 %v2497, %v2489
  %v2666 = vpack.c.bf16 %v2498, %v2490
  %v2667 = vpack.c.bf16 %v2499, %v2491
  %v2668 = vpack.c.bf16 %v2508, %v2500
  %v2669 = vpack.c.bf16 %v2509, %v2501
  %v2670 = vpack.c.bf16 %v2510, %v2502
  %v2671 = vpack.c.bf16 %v2511, %v2503
  %v2672 = vpack.c.bf16 %v2512, %v2504
  %v2673 = vpack.c.bf16 %v2513, %v2505
  %v2674 = vpack.c.bf16 %v2514, %v2506
  %v2675 = vpack.c.bf16 %v2515, %v2507
  %v2676 = vpack.c.bf16 %v2524, %v2516
  %v2677 = vpack.c.bf16 %v2525, %v2517
  %v2678 = vpack.c.bf16 %v2526, %v2518
  %v2679 = vpack.c.bf16 %v2527, %v2519
  %v2680 = vpack.c.bf16 %v2528, %v2520
  %v2681 = vpack.c.bf16 %v2529, %v2521
  %v2682 = vpack.c.bf16 %v2530, %v2522
  %v2683 = vpack.c.bf16 %v2531, %v2523
  %v2684 = vpack.c.bf16 %v2540, %v2532
  %v2685 = vpack.c.bf16 %v2541, %v2533
  %v2686 = vpack.c.bf16 %v2542, %v2534
  %v2687 = vpack.c.bf16 %v2543, %v2535
  %v2688 = vpack.c.bf16 %v2544, %v2536
  %v2689 = vpack.c.bf16 %v2545, %v2537
  %v2690 = vpack.c.bf16 %v2546, %v2538
  %v2691 = vpack.c.bf16 %v2547, %v2539
  %v2692 = vpack.c.bf16 %v2556, %v2548
  %v2693 = vpack.c.bf16 %v2557, %v2549
  %v2694 = vpack.c.bf16 %v2558, %v2550
  %v2695 = vpack.c.bf16 %v2559, %v2551
  %v2696 = vpack.c.bf16 %v2560, %v2552
  %v2697 = vpack.c.bf16 %v2561, %v2553
  %v2698 = vpack.c.bf16 %v2562, %v2554
  %v2699 = vpack.c.bf16 %v2563, %v2555
  %v2700 = vpack.c.bf16 %v2572, %v2564
  %v2701 = vpack.c.bf16 %v2573, %v2565
  %v2702 = vpack.c.bf16 %v2574, %v2566
  %v2703 = vpack.c.bf16 %v2575, %v2567
  %v2704 = vpack.c.bf16 %v2576, %v2568
  %v2705 = vpack.c.bf16 %v2577, %v2569
  %v2706 = vpack.c.bf16 %v2578, %v2570
  %v2707 = vpack.c.bf16 %v2579, %v2571
  %v2708 = vld [vmem:[%s5] sm:$0xff]
  %v2709 = vld [vmem:[%s5 + $0x8] sm:$0xff]
  %v2710 = vld [vmem:[%s5 + $0x10] sm:$0xff]
  %v2711 = vld [vmem:[%s5 + $0x18] sm:$0xff]
  %v2712 = vld [vmem:[%s5 + $0x20] sm:$0xff]
  %v2713 = vld [vmem:[%s5 + $0x28] sm:$0xff]
  %v2714 = vld [vmem:[%s5 + $0x30] sm:$0xff]
  %v2715 = vld [vmem:[%s5 + $0x38] sm:$0xff]
  %v2716 = vld [vmem:[%s5 + $0x40] sm:$0xff]
  %v2717 = vld [vmem:[%s5 + $0x48] sm:$0xff]
  %v2718 = vld [vmem:[%s5 + $0x50] sm:$0xff]
  %v2719 = vld [vmem:[%s5 + $0x58] sm:$0xff]
  %v2720 = vld [vmem:[%s5 + $0x60] sm:$0xff]
  %v2721 = vld [vmem:[%s5 + $0x68] sm:$0xff]
  %v2722 = vld [vmem:[%s5 + $0x70] sm:$0xff]
  %v2723 = vld [vmem:[%s5 + $0x78] sm:$0xff]
  %v2724 = vld [vmem:[%s5 + $0x80] sm:$0xff]
  %v2725 = vld [vmem:[%s5 + $0x88] sm:$0xff]
  %v2726 = vld [vmem:[%s5 + $0x90] sm:$0xff]
  %v2727 = vld [vmem:[%s5 + $0x98] sm:$0xff]
  %v2728 = vld [vmem:[%s5 + $0xa0] sm:$0xff]
  %v2729 = vld [vmem:[%s5 + $0xa8] sm:$0xff]
  %v2730 = vld [vmem:[%s5 + $0xb0] sm:$0xff]
  %v2731 = vld [vmem:[%s5 + $0xb8] sm:$0xff]
  %v2732 = vld [vmem:[%s5 + $0xc0] sm:$0xff]
  %v2733 = vld [vmem:[%s5 + $0xc8] sm:$0xff]
  %v2734 = vld [vmem:[%s5 + $0xd0] sm:$0xff]
  %v2735 = vld [vmem:[%s5 + $0xd8] sm:$0xff]
  %v2736 = vld [vmem:[%s5 + $0xe0] sm:$0xff]
  %v2737 = vld [vmem:[%s5 + $0xe8] sm:$0xff]
  %v2738 = vld [vmem:[%s5 + $0xf0] sm:$0xff]
  %v2739 = vld [vmem:[%s5 + $0xf8] sm:$0xff]
  %v2740 = vld [vmem:[%s5 + $0x100] sm:$0xff]
  %v2741 = vld [vmem:[%s5 + $0x108] sm:$0xff]
  %v2742 = vld [vmem:[%s5 + $0x110] sm:$0xff]
  %v2743 = vld [vmem:[%s5 + $0x118] sm:$0xff]
  %v2744 = vld [vmem:[%s5 + $0x120] sm:$0xff]
  %v2745 = vld [vmem:[%s5 + $0x128] sm:$0xff]
  %v2746 = vld [vmem:[%s5 + $0x130] sm:$0xff]
  %v2747 = vld [vmem:[%s5 + $0x138] sm:$0xff]
  %v2748 = vld [vmem:[%s5 + $0x140] sm:$0xff]
  %v2749 = vld [vmem:[%s5 + $0x148] sm:$0xff]
  %v2750 = vld [vmem:[%s5 + $0x150] sm:$0xff]
  %v2751 = vld [vmem:[%s5 + $0x158] sm:$0xff]
  %v2752 = vld [vmem:[%s5 + $0x160] sm:$0xff]
  %v2753 = vld [vmem:[%s5 + $0x168] sm:$0xff]
  %v2754 = vld [vmem:[%s5 + $0x170] sm:$0xff]
  %v2755 = vld [vmem:[%s5 + $0x178] sm:$0xff]
  %v2756 = vld [vmem:[%s5 + $0x180] sm:$0xff]
  %v2757 = vld [vmem:[%s5 + $0x188] sm:$0xff]
  %v2758 = vld [vmem:[%s5 + $0x190] sm:$0xff]
  %v2759 = vld [vmem:[%s5 + $0x198] sm:$0xff]
  %v2760 = vld [vmem:[%s5 + $0x1a0] sm:$0xff]
  %v2761 = vld [vmem:[%s5 + $0x1a8] sm:$0xff]
  %v2762 = vld [vmem:[%s5 + $0x1b0] sm:$0xff]
  %v2763 = vld [vmem:[%s5 + $0x1b8] sm:$0xff]
  %v2764 = vld [vmem:[%s5 + $0x1c0] sm:$0xff]
  %v2765 = vld [vmem:[%s5 + $0x1c8] sm:$0xff]
  %v2766 = vld [vmem:[%s5 + $0x1d0] sm:$0xff]
  %v2767 = vld [vmem:[%s5 + $0x1d8] sm:$0xff]
  %v2768 = vld [vmem:[%s5 + $0x1e0] sm:$0xff]
  %v2769 = vld [vmem:[%s5 + $0x1e8] sm:$0xff]
  %v2770 = vld [vmem:[%s5 + $0x1f0] sm:$0xff]
  %v2771 = vld [vmem:[%s5 + $0x1f8] sm:$0xff]
  %v2772 = vld [vmem:[%s5 + $0x200] sm:$0xff]
  %v2773 = vld [vmem:[%s5 + $0x208] sm:$0xff]
  %v2774 = vld [vmem:[%s5 + $0x210] sm:$0xff]
  %v2775 = vld [vmem:[%s5 + $0x218] sm:$0xff]
  %v2776 = vld [vmem:[%s5 + $0x220] sm:$0xff]
  %v2777 = vld [vmem:[%s5 + $0x228] sm:$0xff]
  %v2778 = vld [vmem:[%s5 + $0x230] sm:$0xff]
  %v2779 = vld [vmem:[%s5 + $0x238] sm:$0xff]
  %v2780 = vld [vmem:[%s5 + $0x240] sm:$0xff]
  %v2781 = vld [vmem:[%s5 + $0x248] sm:$0xff]
  %v2782 = vld [vmem:[%s5 + $0x250] sm:$0xff]
  %v2783 = vld [vmem:[%s5 + $0x258] sm:$0xff]
  %v2784 = vld [vmem:[%s5 + $0x260] sm:$0xff]
  %v2785 = vld [vmem:[%s5 + $0x268] sm:$0xff]
  %v2786 = vld [vmem:[%s5 + $0x270] sm:$0xff]
  %v2787 = vld [vmem:[%s5 + $0x278] sm:$0xff]
  %v2788 = vld [vmem:[%s5 + $0x280] sm:$0xff]
  %v2789 = vld [vmem:[%s5 + $0x288] sm:$0xff]
  %v2790 = vld [vmem:[%s5 + $0x290] sm:$0xff]
  %v2791 = vld [vmem:[%s5 + $0x298] sm:$0xff]
  %v2792 = vld [vmem:[%s5 + $0x2a0] sm:$0xff]
  %v2793 = vld [vmem:[%s5 + $0x2a8] sm:$0xff]
  %v2794 = vld [vmem:[%s5 + $0x2b0] sm:$0xff]
  %v2795 = vld [vmem:[%s5 + $0x2b8] sm:$0xff]
  %v2796 = vld [vmem:[%s5 + $0x2c0] sm:$0xff]
  %v2797 = vld [vmem:[%s5 + $0x2c8] sm:$0xff]
  %v2798 = vld [vmem:[%s5 + $0x2d0] sm:$0xff]
  %v2799 = vld [vmem:[%s5 + $0x2d8] sm:$0xff]
  %v2800 = vld [vmem:[%s5 + $0x2e0] sm:$0xff]
  %v2801 = vld [vmem:[%s5 + $0x2e8] sm:$0xff]
  %v2802 = vld [vmem:[%s5 + $0x2f0] sm:$0xff]
  %v2803 = vld [vmem:[%s5 + $0x2f8] sm:$0xff]
  %v2804 = vld [vmem:[%s5 + $0x300] sm:$0xff]
  %v2805 = vld [vmem:[%s5 + $0x308] sm:$0xff]
  %v2806 = vld [vmem:[%s5 + $0x310] sm:$0xff]
  %v2807 = vld [vmem:[%s5 + $0x318] sm:$0xff]
  %v2808 = vld [vmem:[%s5 + $0x320] sm:$0xff]
  %v2809 = vld [vmem:[%s5 + $0x328] sm:$0xff]
  %v2810 = vld [vmem:[%s5 + $0x330] sm:$0xff]
  %v2811 = vld [vmem:[%s5 + $0x338] sm:$0xff]
  %v2812 = vld [vmem:[%s5 + $0x340] sm:$0xff]
  %v2813 = vld [vmem:[%s5 + $0x348] sm:$0xff]
  %v2814 = vld [vmem:[%s5 + $0x350] sm:$0xff]
  %v2815 = vld [vmem:[%s5 + $0x358] sm:$0xff]
  %v2816 = vld [vmem:[%s5 + $0x360] sm:$0xff]
  %v2817 = vld [vmem:[%s5 + $0x368] sm:$0xff]
  %v2818 = vld [vmem:[%s5 + $0x370] sm:$0xff]
  %v2819 = vld [vmem:[%s5 + $0x378] sm:$0xff]
  %v2820 = vld [vmem:[%s5 + $0x380] sm:$0xff]
  %v2821 = vld [vmem:[%s5 + $0x388] sm:$0xff]
  %v2822 = vld [vmem:[%s5 + $0x390] sm:$0xff]
  %v2823 = vld [vmem:[%s5 + $0x398] sm:$0xff]
  %v2824 = vld [vmem:[%s5 + $0x3a0] sm:$0xff]
  %v2825 = vld [vmem:[%s5 + $0x3a8] sm:$0xff]
  %v2826 = vld [vmem:[%s5 + $0x3b0] sm:$0xff]
  %v2827 = vld [vmem:[%s5 + $0x3b8] sm:$0xff]
  %v2828 = vld [vmem:[%s5 + $0x3c0] sm:$0xff]
  %v2829 = vld [vmem:[%s5 + $0x3c8] sm:$0xff]
  %v2830 = vld [vmem:[%s5 + $0x3d0] sm:$0xff]
  %v2831 = vld [vmem:[%s5 + $0x3d8] sm:$0xff]
  %v2832 = vld [vmem:[%s5 + $0x3e0] sm:$0xff]
  %v2833 = vld [vmem:[%s5 + $0x3e8] sm:$0xff]
  %v2834 = vld [vmem:[%s5 + $0x3f0] sm:$0xff]
  %v2835 = vld [vmem:[%s5 + $0x3f8] sm:$0xff]
  %v2836 = vld [vmem:[%s6] sm:$0x3]
  %v2838 = vlaneseq
  %v2839 = vshrl.u32 %v2838, 7
  %v2840 = vsub.s32 0, %v2839
  %v2841 = vrot.slane %v2836, %v2840
  %v2842 = vlaneseq
  %v2843 = vshrl.u32 %v2842, 7
  %v2844 = vsub.s32 1, %v2843
  %v2845 = vrot.slane %v2836, %v2844
  %v2976 = vunpack.c.l.b16 %v2708
  %v2977 = vunpack.c.h.b16 %v2708
  %v2978 = vunpack.c.l.b16 %v2709
  %v2979 = vunpack.c.h.b16 %v2709
  %v2980 = vunpack.c.l.b16 %v2710
  %v2981 = vunpack.c.h.b16 %v2710
  %v2982 = vunpack.c.l.b16 %v2711
  %v2983 = vunpack.c.h.b16 %v2711
  %v2984 = vunpack.c.l.b16 %v2712
  %v2985 = vunpack.c.h.b16 %v2712
  %v2986 = vunpack.c.l.b16 %v2713
  %v2987 = vunpack.c.h.b16 %v2713
  %v2988 = vunpack.c.l.b16 %v2714
  %v2989 = vunpack.c.h.b16 %v2714
  %v2990 = vunpack.c.l.b16 %v2715
  %v2991 = vunpack.c.h.b16 %v2715
  %v2992 = vunpack.c.l.b16 %v2716
  %v2993 = vunpack.c.h.b16 %v2716
  %v2994 = vunpack.c.l.b16 %v2717
  %v2995 = vunpack.c.h.b16 %v2717
  %v2996 = vunpack.c.l.b16 %v2718
  %v2997 = vunpack.c.h.b16 %v2718
  %v2998 = vunpack.c.l.b16 %v2719
  %v2999 = vunpack.c.h.b16 %v2719
  %v3000 = vunpack.c.l.b16 %v2720
  %v3001 = vunpack.c.h.b16 %v2720
  %v3002 = vunpack.c.l.b16 %v2721
  %v3003 = vunpack.c.h.b16 %v2721
  %v3004 = vunpack.c.l.b16 %v2722
  %v3005 = vunpack.c.h.b16 %v2722
  %v3006 = vunpack.c.l.b16 %v2723
  %v3007 = vunpack.c.h.b16 %v2723
  %v3008 = vunpack.c.l.b16 %v2724
  %v3009 = vunpack.c.h.b16 %v2724
  %v3010 = vunpack.c.l.b16 %v2725
  %v3011 = vunpack.c.h.b16 %v2725
  %v3012 = vunpack.c.l.b16 %v2726
  %v3013 = vunpack.c.h.b16 %v2726
  %v3014 = vunpack.c.l.b16 %v2727
  %v3015 = vunpack.c.h.b16 %v2727
  %v3016 = vunpack.c.l.b16 %v2728
  %v3017 = vunpack.c.h.b16 %v2728
  %v3018 = vunpack.c.l.b16 %v2729
  %v3019 = vunpack.c.h.b16 %v2729
  %v3020 = vunpack.c.l.b16 %v2730
  %v3021 = vunpack.c.h.b16 %v2730
  %v3022 = vunpack.c.l.b16 %v2731
  %v3023 = vunpack.c.h.b16 %v2731
  %v3024 = vunpack.c.l.b16 %v2732
  %v3025 = vunpack.c.h.b16 %v2732
  %v3026 = vunpack.c.l.b16 %v2733
  %v3027 = vunpack.c.h.b16 %v2733
  %v3028 = vunpack.c.l.b16 %v2734
  %v3029 = vunpack.c.h.b16 %v2734
  %v3030 = vunpack.c.l.b16 %v2735
  %v3031 = vunpack.c.h.b16 %v2735
  %v3032 = vunpack.c.l.b16 %v2736
  %v3033 = vunpack.c.h.b16 %v2736
  %v3034 = vunpack.c.l.b16 %v2737
  %v3035 = vunpack.c.h.b16 %v2737
  %v3036 = vunpack.c.l.b16 %v2738
  %v3037 = vunpack.c.h.b16 %v2738
  %v3038 = vunpack.c.l.b16 %v2739
  %v3039 = vunpack.c.h.b16 %v2739
  %v3040 = vunpack.c.l.b16 %v2740
  %v3041 = vunpack.c.h.b16 %v2740
  %v3042 = vunpack.c.l.b16 %v2741
  %v3043 = vunpack.c.h.b16 %v2741
  %v3044 = vunpack.c.l.b16 %v2742
  %v3045 = vunpack.c.h.b16 %v2742
  %v3046 = vunpack.c.l.b16 %v2743
  %v3047 = vunpack.c.h.b16 %v2743
  %v3048 = vunpack.c.l.b16 %v2744
  %v3049 = vunpack.c.h.b16 %v2744
  %v3050 = vunpack.c.l.b16 %v2745
  %v3051 = vunpack.c.h.b16 %v2745
  %v3052 = vunpack.c.l.b16 %v2746
  %v3053 = vunpack.c.h.b16 %v2746
  %v3054 = vunpack.c.l.b16 %v2747
  %v3055 = vunpack.c.h.b16 %v2747
  %v3056 = vunpack.c.l.b16 %v2748
  %v3057 = vunpack.c.h.b16 %v2748
  %v3058 = vunpack.c.l.b16 %v2749
  %v3059 = vunpack.c.h.b16 %v2749
  %v3060 = vunpack.c.l.b16 %v2750
  %v3061 = vunpack.c.h.b16 %v2750
  %v3062 = vunpack.c.l.b16 %v2751
  %v3063 = vunpack.c.h.b16 %v2751
  %v3064 = vunpack.c.l.b16 %v2752
  %v3065 = vunpack.c.h.b16 %v2752
  %v3066 = vunpack.c.l.b16 %v2753
  %v3067 = vunpack.c.h.b16 %v2753
  %v3068 = vunpack.c.l.b16 %v2754
  %v3069 = vunpack.c.h.b16 %v2754
  %v3070 = vunpack.c.l.b16 %v2755
  %v3071 = vunpack.c.h.b16 %v2755
  %v3072 = vunpack.c.l.b16 %v2756
  %v3073 = vunpack.c.h.b16 %v2756
  %v3074 = vunpack.c.l.b16 %v2757
  %v3075 = vunpack.c.h.b16 %v2757
  %v3076 = vunpack.c.l.b16 %v2758
  %v3077 = vunpack.c.h.b16 %v2758
  %v3078 = vunpack.c.l.b16 %v2759
  %v3079 = vunpack.c.h.b16 %v2759
  %v3080 = vunpack.c.l.b16 %v2760
  %v3081 = vunpack.c.h.b16 %v2760
  %v3082 = vunpack.c.l.b16 %v2761
  %v3083 = vunpack.c.h.b16 %v2761
  %v3084 = vunpack.c.l.b16 %v2762
  %v3085 = vunpack.c.h.b16 %v2762
  %v3086 = vunpack.c.l.b16 %v2763
  %v3087 = vunpack.c.h.b16 %v2763
  %v3088 = vunpack.c.l.b16 %v2764
  %v3089 = vunpack.c.h.b16 %v2764
  %v3090 = vunpack.c.l.b16 %v2765
  %v3091 = vunpack.c.h.b16 %v2765
  %v3092 = vunpack.c.l.b16 %v2766
  %v3093 = vunpack.c.h.b16 %v2766
  %v3094 = vunpack.c.l.b16 %v2767
  %v3095 = vunpack.c.h.b16 %v2767
  %v3096 = vunpack.c.l.b16 %v2768
  %v3097 = vunpack.c.h.b16 %v2768
  %v3098 = vunpack.c.l.b16 %v2769
  %v3099 = vunpack.c.h.b16 %v2769
  %v3100 = vunpack.c.l.b16 %v2770
  %v3101 = vunpack.c.h.b16 %v2770
  %v3102 = vunpack.c.l.b16 %v2771
  %v3103 = vunpack.c.h.b16 %v2771
  %v3104 = vunpack.c.l.b16 %v2772
  %v3105 = vunpack.c.h.b16 %v2772
  %v3106 = vunpack.c.l.b16 %v2773
  %v3107 = vunpack.c.h.b16 %v2773
  %v3108 = vunpack.c.l.b16 %v2774
  %v3109 = vunpack.c.h.b16 %v2774
  %v3110 = vunpack.c.l.b16 %v2775
  %v3111 = vunpack.c.h.b16 %v2775
  %v3112 = vunpack.c.l.b16 %v2776
  %v3113 = vunpack.c.h.b16 %v2776
  %v3114 = vunpack.c.l.b16 %v2777
  %v3115 = vunpack.c.h.b16 %v2777
  %v3116 = vunpack.c.l.b16 %v2778
  %v3117 = vunpack.c.h.b16 %v2778
  %v3118 = vunpack.c.l.b16 %v2779
  %v3119 = vunpack.c.h.b16 %v2779
  %v3120 = vunpack.c.l.b16 %v2780
  %v3121 = vunpack.c.h.b16 %v2780
  %v3122 = vunpack.c.l.b16 %v2781
  %v3123 = vunpack.c.h.b16 %v2781
  %v3124 = vunpack.c.l.b16 %v2782
  %v3125 = vunpack.c.h.b16 %v2782
  %v3126 = vunpack.c.l.b16 %v2783
  %v3127 = vunpack.c.h.b16 %v2783
  %v3128 = vunpack.c.l.b16 %v2784
  %v3129 = vunpack.c.h.b16 %v2784
  %v3130 = vunpack.c.l.b16 %v2785
  %v3131 = vunpack.c.h.b16 %v2785
  %v3132 = vunpack.c.l.b16 %v2786
  %v3133 = vunpack.c.h.b16 %v2786
  %v3134 = vunpack.c.l.b16 %v2787
  %v3135 = vunpack.c.h.b16 %v2787
  %v3136 = vunpack.c.l.b16 %v2788
  %v3137 = vunpack.c.h.b16 %v2788
  %v3138 = vunpack.c.l.b16 %v2789
  %v3139 = vunpack.c.h.b16 %v2789
  %v3140 = vunpack.c.l.b16 %v2790
  %v3141 = vunpack.c.h.b16 %v2790
  %v3142 = vunpack.c.l.b16 %v2791
  %v3143 = vunpack.c.h.b16 %v2791
  %v3144 = vunpack.c.l.b16 %v2792
  %v3145 = vunpack.c.h.b16 %v2792
  %v3146 = vunpack.c.l.b16 %v2793
  %v3147 = vunpack.c.h.b16 %v2793
  %v3148 = vunpack.c.l.b16 %v2794
  %v3149 = vunpack.c.h.b16 %v2794
  %v3150 = vunpack.c.l.b16 %v2795
  %v3151 = vunpack.c.h.b16 %v2795
  %v3152 = vunpack.c.l.b16 %v2796
  %v3153 = vunpack.c.h.b16 %v2796
  %v3154 = vunpack.c.l.b16 %v2797
  %v3155 = vunpack.c.h.b16 %v2797
  %v3156 = vunpack.c.l.b16 %v2798
  %v3157 = vunpack.c.h.b16 %v2798
  %v3158 = vunpack.c.l.b16 %v2799
  %v3159 = vunpack.c.h.b16 %v2799
  %v3160 = vunpack.c.l.b16 %v2800
  %v3161 = vunpack.c.h.b16 %v2800
  %v3162 = vunpack.c.l.b16 %v2801
  %v3163 = vunpack.c.h.b16 %v2801
  %v3164 = vunpack.c.l.b16 %v2802
  %v3165 = vunpack.c.h.b16 %v2802
  %v3166 = vunpack.c.l.b16 %v2803
  %v3167 = vunpack.c.h.b16 %v2803
  %v3168 = vunpack.c.l.b16 %v2804
  %v3169 = vunpack.c.h.b16 %v2804
  %v3170 = vunpack.c.l.b16 %v2805
  %v3171 = vunpack.c.h.b16 %v2805
  %v3172 = vunpack.c.l.b16 %v2806
  %v3173 = vunpack.c.h.b16 %v2806
  %v3174 = vunpack.c.l.b16 %v2807
  %v3175 = vunpack.c.h.b16 %v2807
  %v3176 = vunpack.c.l.b16 %v2808
  %v3177 = vunpack.c.h.b16 %v2808
  %v3178 = vunpack.c.l.b16 %v2809
  %v3179 = vunpack.c.h.b16 %v2809
  %v3180 = vunpack.c.l.b16 %v2810
  %v3181 = vunpack.c.h.b16 %v2810
  %v3182 = vunpack.c.l.b16 %v2811
  %v3183 = vunpack.c.h.b16 %v2811
  %v3184 = vunpack.c.l.b16 %v2812
  %v3185 = vunpack.c.h.b16 %v2812
  %v3186 = vunpack.c.l.b16 %v2813
  %v3187 = vunpack.c.h.b16 %v2813
  %v3188 = vunpack.c.l.b16 %v2814
  %v3189 = vunpack.c.h.b16 %v2814
  %v3190 = vunpack.c.l.b16 %v2815
  %v3191 = vunpack.c.h.b16 %v2815
  %v3192 = vunpack.c.l.b16 %v2816
  %v3193 = vunpack.c.h.b16 %v2816
  %v3194 = vunpack.c.l.b16 %v2817
  %v3195 = vunpack.c.h.b16 %v2817
  %v3196 = vunpack.c.l.b16 %v2818
  %v3197 = vunpack.c.h.b16 %v2818
  %v3198 = vunpack.c.l.b16 %v2819
  %v3199 = vunpack.c.h.b16 %v2819
  %v3200 = vunpack.c.l.b16 %v2820
  %v3201 = vunpack.c.h.b16 %v2820
  %v3202 = vunpack.c.l.b16 %v2821
  %v3203 = vunpack.c.h.b16 %v2821
  %v3204 = vunpack.c.l.b16 %v2822
  %v3205 = vunpack.c.h.b16 %v2822
  %v3206 = vunpack.c.l.b16 %v2823
  %v3207 = vunpack.c.h.b16 %v2823
  %v3208 = vunpack.c.l.b16 %v2824
  %v3209 = vunpack.c.h.b16 %v2824
  %v3210 = vunpack.c.l.b16 %v2825
  %v3211 = vunpack.c.h.b16 %v2825
  %v3212 = vunpack.c.l.b16 %v2826
  %v3213 = vunpack.c.h.b16 %v2826
  %v3214 = vunpack.c.l.b16 %v2827
  %v3215 = vunpack.c.h.b16 %v2827
  %v3216 = vunpack.c.l.b16 %v2828
  %v3217 = vunpack.c.h.b16 %v2828
  %v3218 = vunpack.c.l.b16 %v2829
  %v3219 = vunpack.c.h.b16 %v2829
  %v3220 = vunpack.c.l.b16 %v2830
  %v3221 = vunpack.c.h.b16 %v2830
  %v3222 = vunpack.c.l.b16 %v2831
  %v3223 = vunpack.c.h.b16 %v2831
  %v3224 = vunpack.c.l.b16 %v2832
  %v3225 = vunpack.c.h.b16 %v2832
  %v3226 = vunpack.c.l.b16 %v2833
  %v3227 = vunpack.c.h.b16 %v2833
  %v3228 = vunpack.c.l.b16 %v2834
  %v3229 = vunpack.c.h.b16 %v2834
  %v3230 = vunpack.c.l.b16 %v2835
  %v3231 = vunpack.c.h.b16 %v2835
  %v3232 = vpack.c.b16 %v2978, %v2976
  %v3233 = vpack.c.b16 %v2979, %v2977
  %v3234 = vpack.c.b16 %v2982, %v2980
  %v3235 = vpack.c.b16 %v2983, %v2981
  %v3236 = vpack.c.b16 %v2986, %v2984
  %v3237 = vpack.c.b16 %v2987, %v2985
  %v3238 = vpack.c.b16 %v2990, %v2988
  %v3239 = vpack.c.b16 %v2991, %v2989
  %v3240 = vpack.c.b16 %v2994, %v2992
  %v3241 = vpack.c.b16 %v2995, %v2993
  %v3242 = vpack.c.b16 %v2998, %v2996
  %v3243 = vpack.c.b16 %v2999, %v2997
  %v3244 = vpack.c.b16 %v3002, %v3000
  %v3245 = vpack.c.b16 %v3003, %v3001
  %v3246 = vpack.c.b16 %v3006, %v3004
  %v3247 = vpack.c.b16 %v3007, %v3005
  %v3248 = vpack.c.b16 %v3010, %v3008
  %v3249 = vpack.c.b16 %v3011, %v3009
  %v3250 = vpack.c.b16 %v3014, %v3012
  %v3251 = vpack.c.b16 %v3015, %v3013
  %v3252 = vpack.c.b16 %v3018, %v3016
  %v3253 = vpack.c.b16 %v3019, %v3017
  %v3254 = vpack.c.b16 %v3022, %v3020
  %v3255 = vpack.c.b16 %v3023, %v3021
  %v3256 = vpack.c.b16 %v3026, %v3024
  %v3257 = vpack.c.b16 %v3027, %v3025
  %v3258 = vpack.c.b16 %v3030, %v3028
  %v3259 = vpack.c.b16 %v3031, %v3029
  %v3260 = vpack.c.b16 %v3034, %v3032
  %v3261 = vpack.c.b16 %v3035, %v3033
  %v3262 = vpack.c.b16 %v3038, %v3036
  %v3263 = vpack.c.b16 %v3039, %v3037
  %v3264 = vpack.c.b16 %v3042, %v3040
  %v3265 = vpack.c.b16 %v3043, %v3041
  %v3266 = vpack.c.b16 %v3046, %v3044
  %v3267 = vpack.c.b16 %v3047, %v3045
  %v3268 = vpack.c.b16 %v3050, %v3048
  %v3269 = vpack.c.b16 %v3051, %v3049
  %v3270 = vpack.c.b16 %v3054, %v3052
  %v3271 = vpack.c.b16 %v3055, %v3053
  %v3272 = vpack.c.b16 %v3058, %v3056
  %v3273 = vpack.c.b16 %v3059, %v3057
  %v3274 = vpack.c.b16 %v3062, %v3060
  %v3275 = vpack.c.b16 %v3063, %v3061
  %v3276 = vpack.c.b16 %v3066, %v3064
  %v3277 = vpack.c.b16 %v3067, %v3065
  %v3278 = vpack.c.b16 %v3070, %v3068
  %v3279 = vpack.c.b16 %v3071, %v3069
  %v3280 = vpack.c.b16 %v3074, %v3072
  %v3281 = vpack.c.b16 %v3075, %v3073
  %v3282 = vpack.c.b16 %v3078, %v3076
  %v3283 = vpack.c.b16 %v3079, %v3077
  %v3284 = vpack.c.b16 %v3082, %v3080
  %v3285 = vpack.c.b16 %v3083, %v3081
  %v3286 = vpack.c.b16 %v3086, %v3084
  %v3287 = vpack.c.b16 %v3087, %v3085
  %v3288 = vpack.c.b16 %v3090, %v3088
  %v3289 = vpack.c.b16 %v3091, %v3089
  %v3290 = vpack.c.b16 %v3094, %v3092
  %v3291 = vpack.c.b16 %v3095, %v3093
  %v3292 = vpack.c.b16 %v3098, %v3096
  %v3293 = vpack.c.b16 %v3099, %v3097
  %v3294 = vpack.c.b16 %v3102, %v3100
  %v3295 = vpack.c.b16 %v3103, %v3101
  %v3296 = vpack.c.b16 %v3106, %v3104
  %v3297 = vpack.c.b16 %v3107, %v3105
  %v3298 = vpack.c.b16 %v3110, %v3108
  %v3299 = vpack.c.b16 %v3111, %v3109
  %v3300 = vpack.c.b16 %v3114, %v3112
  %v3301 = vpack.c.b16 %v3115, %v3113
  %v3302 = vpack.c.b16 %v3118, %v3116
  %v3303 = vpack.c.b16 %v3119, %v3117
  %v3304 = vpack.c.b16 %v3122, %v3120
  %v3305 = vpack.c.b16 %v3123, %v3121
  %v3306 = vpack.c.b16 %v3126, %v3124
  %v3307 = vpack.c.b16 %v3127, %v3125
  %v3308 = vpack.c.b16 %v3130, %v3128
  %v3309 = vpack.c.b16 %v3131, %v3129
  %v3310 = vpack.c.b16 %v3134, %v3132
  %v3311 = vpack.c.b16 %v3135, %v3133
  %v3312 = vpack.c.b16 %v3138, %v3136
  %v3313 = vpack.c.b16 %v3139, %v3137
  %v3314 = vpack.c.b16 %v3142, %v3140
  %v3315 = vpack.c.b16 %v3143, %v3141
  %v3316 = vpack.c.b16 %v3146, %v3144
  %v3317 = vpack.c.b16 %v3147, %v3145
  %v3318 = vpack.c.b16 %v3150, %v3148
  %v3319 = vpack.c.b16 %v3151, %v3149
  %v3320 = vpack.c.b16 %v3154, %v3152
  %v3321 = vpack.c.b16 %v3155, %v3153
  %v3322 = vpack.c.b16 %v3158, %v3156
  %v3323 = vpack.c.b16 %v3159, %v3157
  %v3324 = vpack.c.b16 %v3162, %v3160
  %v3325 = vpack.c.b16 %v3163, %v3161
  %v3326 = vpack.c.b16 %v3166, %v3164
  %v3327 = vpack.c.b16 %v3167, %v3165
  %v3328 = vpack.c.b16 %v3170, %v3168
  %v3329 = vpack.c.b16 %v3171, %v3169
  %v3330 = vpack.c.b16 %v3174, %v3172
  %v3331 = vpack.c.b16 %v3175, %v3173
  %v3332 = vpack.c.b16 %v3178, %v3176
  %v3333 = vpack.c.b16 %v3179, %v3177
  %v3334 = vpack.c.b16 %v3182, %v3180
  %v3335 = vpack.c.b16 %v3183, %v3181
  %v3336 = vpack.c.b16 %v3186, %v3184
  %v3337 = vpack.c.b16 %v3187, %v3185
  %v3338 = vpack.c.b16 %v3190, %v3188
  %v3339 = vpack.c.b16 %v3191, %v3189
  %v3340 = vpack.c.b16 %v3194, %v3192
  %v3341 = vpack.c.b16 %v3195, %v3193
  %v3342 = vpack.c.b16 %v3198, %v3196
  %v3343 = vpack.c.b16 %v3199, %v3197
  %v3344 = vpack.c.b16 %v3202, %v3200
  %v3345 = vpack.c.b16 %v3203, %v3201
  %v3346 = vpack.c.b16 %v3206, %v3204
  %v3347 = vpack.c.b16 %v3207, %v3205
  %v3348 = vpack.c.b16 %v3210, %v3208
  %v3349 = vpack.c.b16 %v3211, %v3209
  %v3350 = vpack.c.b16 %v3214, %v3212
  %v3351 = vpack.c.b16 %v3215, %v3213
  %v3352 = vpack.c.b16 %v3218, %v3216
  %v3353 = vpack.c.b16 %v3219, %v3217
  %v3354 = vpack.c.b16 %v3222, %v3220
  %v3355 = vpack.c.b16 %v3223, %v3221
  %v3356 = vpack.c.b16 %v3226, %v3224
  %v3357 = vpack.c.b16 %v3227, %v3225
  %v3358 = vpack.c.b16 %v3230, %v3228
  %v3359 = vpack.c.b16 %v3231, %v3229
  %3488 = vmatprep.subr.bf16.mxu0 %v3247
  %3489 = vmatpush1.bf16.msra.mxu0 %v3246
  %3490 = vmatprep.subr.bf16.mxu0 %v3245
  %3491 = vmatpush1.bf16.msra.mxu0 %v3244
  %3492 = vmatprep.subr.bf16.mxu0 %v3243
  %3493 = vmatpush1.bf16.msra.mxu0 %v3242
  %3494 = vmatprep.subr.bf16.mxu0 %v3241
  %3495 = vmatpush1.bf16.msra.mxu0 %v3240
  %3496 = vmatprep.subr.bf16.mxu0 %v3239
  %3497 = vmatpush1.bf16.msra.mxu0 %v3238
  %3498 = vmatprep.subr.bf16.mxu0 %v3237
  %3499 = vmatpush1.bf16.msra.mxu0 %v3236
  %3500 = vmatprep.subr.bf16.mxu0 %v3235
  %3501 = vmatpush1.bf16.msra.mxu0 %v3234
  %3502 = vmatprep.subr.bf16.mxu0 %v3233
  %3503 = vmatpush1.bf16.msra.mxu0 %v3232
  %3504 = vmatprep.subr.bf16.mxu0 %v3263
  %3505 = vmatpush2.bf16.msra.mxu0 %v3262
  %3506 = vmatprep.subr.bf16.mxu0 %v3261
  %3507 = vmatpush2.bf16.msra.mxu0 %v3260
  %3508 = vmatprep.subr.bf16.mxu0 %v3259
  %3509 = vmatpush2.bf16.msra.mxu0 %v3258
  %3510 = vmatprep.subr.bf16.mxu0 %v3257
  %3511 = vmatpush2.bf16.msra.mxu0 %v3256
  %3512 = vmatprep.subr.bf16.mxu0 %v3255
  %3513 = vmatpush2.bf16.msra.mxu0 %v3254
  %3514 = vmatprep.subr.bf16.mxu0 %v3253
  %3515 = vmatpush2.bf16.msra.mxu0 %v3252
  %3516 = vmatprep.subr.bf16.mxu0 %v3251
  %3517 = vmatpush2.bf16.msra.mxu0 %v3250
  %3518 = vmatprep.subr.bf16.mxu0 %v3249
  %3519 = vmatpush2.bf16.msra.mxu0 %v3248
  %3520 = vmatprep.mubr.bf16.mxu0 %v2581
  %3521 = vmatmul.mubr.bf16.gmra.mxu0 %v2580
  %v3522 = vpop.f32.mrf.mxu0
  %v3523 = vadd.f32 %v2841, %v3522
  %v3524 = vpop.f32.mrf.mxu0
  %v3525 = vadd.f32 %v2845, %v3524
  %v3526 = vpop.f32.mrf.mxu0
  %v3527 = vadd.f32 %v2841, %v3526
  %v3528 = vpop.f32.mrf.mxu0
  %v3529 = vadd.f32 %v2845, %v3528
  %3530 = vmatprep.mubr.bf16.mxu0 %v2589
  %3531 = vmatmul.mubr.bf16.gmra.mxu0 %v2588
  %v3532 = vpop.f32.mrf.mxu0
  %v3533 = vadd.f32 %v2841, %v3532
  %v3534 = vpop.f32.mrf.mxu0
  %v3535 = vadd.f32 %v2845, %v3534
  %v3536 = vpop.f32.mrf.mxu0
  %v3537 = vadd.f32 %v2841, %v3536
  %v3538 = vpop.f32.mrf.mxu0
  %v3539 = vadd.f32 %v2845, %v3538
  %3540 = vmatprep.mubr.bf16.mxu0 %v2597
  %3541 = vmatmul.mubr.bf16.gmra.mxu0 %v2596
  %v3542 = vpop.f32.mrf.mxu0
  %v3543 = vadd.f32 %v2841, %v3542
  %v3544 = vpop.f32.mrf.mxu0
  %v3545 = vadd.f32 %v2845, %v3544
  %v3546 = vpop.f32.mrf.mxu0
  %v3547 = vadd.f32 %v2841, %v3546
  %v3548 = vpop.f32.mrf.mxu0
  %v3549 = vadd.f32 %v2845, %v3548
  %3550 = vmatprep.mubr.bf16.mxu0 %v2605
  %3551 = vmatmul.mubr.bf16.gmra.mxu0 %v2604
  %v3552 = vpop.f32.mrf.mxu0
  %v3553 = vadd.f32 %v2841, %v3552
  %v3554 = vpop.f32.mrf.mxu0
  %v3555 = vadd.f32 %v2845, %v3554
  %v3556 = vpop.f32.mrf.mxu0
  %v3557 = vadd.f32 %v2841, %v3556
  %v3558 = vpop.f32.mrf.mxu0
  %v3559 = vadd.f32 %v2845, %v3558
  %3560 = vmatprep.mubr.bf16.mxu0 %v2613
  %3561 = vmatmul.mubr.bf16.gmra.mxu0 %v2612
  %v3562 = vpop.f32.mrf.mxu0
  %v3563 = vadd.f32 %v2841, %v3562
  %v3564 = vpop.f32.mrf.mxu0
  %v3565 = vadd.f32 %v2845, %v3564
  %v3566 = vpop.f32.mrf.mxu0
  %v3567 = vadd.f32 %v2841, %v3566
  %v3568 = vpop.f32.mrf.mxu0
  %v3569 = vadd.f32 %v2845, %v3568
  %3570 = vmatprep.mubr.bf16.mxu0 %v2621
  %3571 = vmatmul.mubr.bf16.gmra.mxu0 %v2620
  %v3572 = vpop.f32.mrf.mxu0
  %v3573 = vadd.f32 %v2841, %v3572
  %v3574 = vpop.f32.mrf.mxu0
  %v3575 = vadd.f32 %v2845, %v3574
  %v3576 = vpop.f32.mrf.mxu0
  %v3577 = vadd.f32 %v2841, %v3576
  %v3578 = vpop.f32.mrf.mxu0
  %v3579 = vadd.f32 %v2845, %v3578
  %3580 = vmatprep.mubr.bf16.mxu0 %v2629
  %3581 = vmatmul.mubr.bf16.gmra.mxu0 %v2628
  %v3582 = vpop.f32.mrf.mxu0
  %v3583 = vadd.f32 %v2841, %v3582
  %v3584 = vpop.f32.mrf.mxu0
  %v3585 = vadd.f32 %v2845, %v3584
  %v3586 = vpop.f32.mrf.mxu0
  %v3587 = vadd.f32 %v2841, %v3586
  %v3588 = vpop.f32.mrf.mxu0
  %v3589 = vadd.f32 %v2845, %v3588
  %3590 = vmatprep.mubr.bf16.mxu0 %v2637
  %3591 = vmatmul.mubr.bf16.gmra.mxu0 %v2636
  %v3592 = vpop.f32.mrf.mxu0
  %v3593 = vadd.f32 %v2841, %v3592
  %v3594 = vpop.f32.mrf.mxu0
  %v3595 = vadd.f32 %v2845, %v3594
  %v3596 = vpop.f32.mrf.mxu0
  %v3597 = vadd.f32 %v2841, %v3596
  %v3598 = vpop.f32.mrf.mxu0
  %v3599 = vadd.f32 %v2845, %v3598
  %3600 = vmatprep.mubr.bf16.mxu0 %v2645
  %3601 = vmatmul.mubr.bf16.gmra.mxu0 %v2644
  %v3602 = vpop.f32.mrf.mxu0
  %v3603 = vadd.f32 %v2841, %v3602
  %v3604 = vpop.f32.mrf.mxu0
  %v3605 = vadd.f32 %v2845, %v3604
  %v3606 = vpop.f32.mrf.mxu0
  %v3607 = vadd.f32 %v2841, %v3606
  %v3608 = vpop.f32.mrf.mxu0
  %v3609 = vadd.f32 %v2845, %v3608
  %3610 = vmatprep.mubr.bf16.mxu0 %v2653
  %3611 = vmatmul.mubr.bf16.gmra.mxu0 %v2652
  %v3612 = vpop.f32.mrf.mxu0
  %v3613 = vadd.f32 %v2841, %v3612
  %v3614 = vpop.f32.mrf.mxu0
  %v3615 = vadd.f32 %v2845, %v3614
  %v3616 = vpop.f32.mrf.mxu0
  %v3617 = vadd.f32 %v2841, %v3616
  %v3618 = vpop.f32.mrf.mxu0
  %v3619 = vadd.f32 %v2845, %v3618
  %3620 = vmatprep.mubr.bf16.mxu0 %v2661
  %3621 = vmatmul.mubr.bf16.gmra.mxu0 %v2660
  %v3622 = vpop.f32.mrf.mxu0
  %v3623 = vadd.f32 %v2841, %v3622
  %v3624 = vpop.f32.mrf.mxu0
  %v3625 = vadd.f32 %v2845, %v3624
  %v3626 = vpop.f32.mrf.mxu0
  %v3627 = vadd.f32 %v2841, %v3626
  %v3628 = vpop.f32.mrf.mxu0
  %v3629 = vadd.f32 %v2845, %v3628
  %3630 = vmatprep.mubr.bf16.mxu0 %v2669
  %3631 = vmatmul.mubr.bf16.gmra.mxu0 %v2668
  %v3632 = vpop.f32.mrf.mxu0
  %v3633 = vadd.f32 %v2841, %v3632
  %v3634 = vpop.f32.mrf.mxu0
  %v3635 = vadd.f32 %v2845, %v3634
  %v3636 = vpop.f32.mrf.mxu0
  %v3637 = vadd.f32 %v2841, %v3636
  %v3638 = vpop.f32.mrf.mxu0
  %v3639 = vadd.f32 %v2845, %v3638
  %3640 = vmatprep.mubr.bf16.mxu0 %v2677
  %3641 = vmatmul.mubr.bf16.gmra.mxu0 %v2676
  %v3642 = vpop.f32.mrf.mxu0
  %v3643 = vadd.f32 %v2841, %v3642
  %v3644 = vpop.f32.mrf.mxu0
  %v3645 = vadd.f32 %v2845, %v3644
  %v3646 = vpop.f32.mrf.mxu0
  %v3647 = vadd.f32 %v2841, %v3646
  %v3648 = vpop.f32.mrf.mxu0
  %v3649 = vadd.f32 %v2845, %v3648
  %3650 = vmatprep.mubr.bf16.mxu0 %v2685
  %3651 = vmatmul.mubr.bf16.gmra.mxu0 %v2684
  %v3652 = vpop.f32.mrf.mxu0
  %v3653 = vadd.f32 %v2841, %v3652
  %v3654 = vpop.f32.mrf.mxu0
  %v3655 = vadd.f32 %v2845, %v3654
  %v3656 = vpop.f32.mrf.mxu0
  %v3657 = vadd.f32 %v2841, %v3656
  %v3658 = vpop.f32.mrf.mxu0
  %v3659 = vadd.f32 %v2845, %v3658
  %3660 = vmatprep.mubr.bf16.mxu0 %v2693
  %3661 = vmatmul.mubr.bf16.gmra.mxu0 %v2692
  %v3662 = vpop.f32.mrf.mxu0
  %v3663 = vadd.f32 %v2841, %v3662
  %v3664 = vpop.f32.mrf.mxu0
  %v3665 = vadd.f32 %v2845, %v3664
  %v3666 = vpop.f32.mrf.mxu0
  %v3667 = vadd.f32 %v2841, %v3666
  %v3668 = vpop.f32.mrf.mxu0
  %v3669 = vadd.f32 %v2845, %v3668
  %3670 = vmatprep.mubr.bf16.mxu0 %v2701
  %3671 = vmatmul.mubr.bf16.gmra.mxu0 %v2700
  %v3672 = vpop.f32.mrf.mxu0
  %v3673 = vadd.f32 %v2841, %v3672
  %v3674 = vpop.f32.mrf.mxu0
  %v3675 = vadd.f32 %v2845, %v3674
  %v3676 = vpop.f32.mrf.mxu0
  %v3677 = vadd.f32 %v2841, %v3676
  %v3678 = vpop.f32.mrf.mxu0
  %v3679 = vadd.f32 %v2845, %v3678
  %3680 = vdwg.mxu0
  %3681 = vmatprep.subr.bf16.mxu0 %v3279
  %3682 = vmatpush1.bf16.msra.mxu0 %v3278
  %3683 = vmatprep.subr.bf16.mxu0 %v3277
  %3684 = vmatpush1.bf16.msra.mxu0 %v3276
  %3685 = vmatprep.subr.bf16.mxu0 %v3275
  %3686 = vmatpush1.bf16.msra.mxu0 %v3274
  %3687 = vmatprep.subr.bf16.mxu0 %v3273
  %3688 = vmatpush1.bf16.msra.mxu0 %v3272
  %3689 = vmatprep.subr.bf16.mxu0 %v3271
  %3690 = vmatpush1.bf16.msra.mxu0 %v3270
  %3691 = vmatprep.subr.bf16.mxu0 %v3269
  %3692 = vmatpush1.bf16.msra.mxu0 %v3268
  %3693 = vmatprep.subr.bf16.mxu0 %v3267
  %3694 = vmatpush1.bf16.msra.mxu0 %v3266
  %3695 = vmatprep.subr.bf16.mxu0 %v3265
  %3696 = vmatpush1.bf16.msra.mxu0 %v3264
  %3697 = vmatprep.subr.bf16.mxu0 %v3295
  %3698 = vmatpush2.bf16.msra.mxu0 %v3294
  %3699 = vmatprep.subr.bf16.mxu0 %v3293
  %3700 = vmatpush2.bf16.msra.mxu0 %v3292
  %3701 = vmatprep.subr.bf16.mxu0 %v3291
  %3702 = vmatpush2.bf16.msra.mxu0 %v3290
  %3703 = vmatprep.subr.bf16.mxu0 %v3289
  %3704 = vmatpush2.bf16.msra.mxu0 %v3288
  %3705 = vmatprep.subr.bf16.mxu0 %v3287
  %3706 = vmatpush2.bf16.msra.mxu0 %v3286
  %3707 = vmatprep.subr.bf16.mxu0 %v3285
  %3708 = vmatpush2.bf16.msra.mxu0 %v3284
  %3709 = vmatprep.subr.bf16.mxu0 %v3283
  %3710 = vmatpush2.bf16.msra.mxu0 %v3282
  %3711 = vmatprep.subr.bf16.mxu0 %v3281
  %3712 = vmatpush2.bf16.msra.mxu0 %v3280
  %3713 = vmatprep.mubr.bf16.mxu0 %v2583
  %3714 = vmatmul.mubr.bf16.gmra.mxu0 %v2582
  %v3715 = vpop.f32.mrf.mxu0
  %v3716 = vadd.f32 %v3523, %v3715
  %v3717 = vpop.f32.mrf.mxu0
  %v3718 = vadd.f32 %v3525, %v3717
  %v3719 = vpop.f32.mrf.mxu0
  %v3720 = vadd.f32 %v3527, %v3719
  %v3721 = vpop.f32.mrf.mxu0
  %v3722 = vadd.f32 %v3529, %v3721
  %3723 = vmatprep.mubr.bf16.mxu0 %v2591
  %3724 = vmatmul.mubr.bf16.gmra.mxu0 %v2590
  %v3725 = vpop.f32.mrf.mxu0
  %v3726 = vadd.f32 %v3533, %v3725
  %v3727 = vpop.f32.mrf.mxu0
  %v3728 = vadd.f32 %v3535, %v3727
  %v3729 = vpop.f32.mrf.mxu0
  %v3730 = vadd.f32 %v3537, %v3729
  %v3731 = vpop.f32.mrf.mxu0
  %v3732 = vadd.f32 %v3539, %v3731
  %3733 = vmatprep.mubr.bf16.mxu0 %v2599
  %3734 = vmatmul.mubr.bf16.gmra.mxu0 %v2598
  %v3735 = vpop.f32.mrf.mxu0
  %v3736 = vadd.f32 %v3543, %v3735
  %v3737 = vpop.f32.mrf.mxu0
  %v3738 = vadd.f32 %v3545, %v3737
  %v3739 = vpop.f32.mrf.mxu0
  %v3740 = vadd.f32 %v3547, %v3739
  %v3741 = vpop.f32.mrf.mxu0
  %v3742 = vadd.f32 %v3549, %v3741
  %3743 = vmatprep.mubr.bf16.mxu0 %v2607
  %3744 = vmatmul.mubr.bf16.gmra.mxu0 %v2606
  %v3745 = vpop.f32.mrf.mxu0
  %v3746 = vadd.f32 %v3553, %v3745
  %v3747 = vpop.f32.mrf.mxu0
  %v3748 = vadd.f32 %v3555, %v3747
  %v3749 = vpop.f32.mrf.mxu0
  %v3750 = vadd.f32 %v3557, %v3749
  %v3751 = vpop.f32.mrf.mxu0
  %v3752 = vadd.f32 %v3559, %v3751
  %3753 = vmatprep.mubr.bf16.mxu0 %v2615
  %3754 = vmatmul.mubr.bf16.gmra.mxu0 %v2614
  %v3755 = vpop.f32.mrf.mxu0
  %v3756 = vadd.f32 %v3563, %v3755
  %v3757 = vpop.f32.mrf.mxu0
  %v3758 = vadd.f32 %v3565, %v3757
  %v3759 = vpop.f32.mrf.mxu0
  %v3760 = vadd.f32 %v3567, %v3759
  %v3761 = vpop.f32.mrf.mxu0
  %v3762 = vadd.f32 %v3569, %v3761
  %3763 = vmatprep.mubr.bf16.mxu0 %v2623
  %3764 = vmatmul.mubr.bf16.gmra.mxu0 %v2622
  %v3765 = vpop.f32.mrf.mxu0
  %v3766 = vadd.f32 %v3573, %v3765
  %v3767 = vpop.f32.mrf.mxu0
  %v3768 = vadd.f32 %v3575, %v3767
  %v3769 = vpop.f32.mrf.mxu0
  %v3770 = vadd.f32 %v3577, %v3769
  %v3771 = vpop.f32.mrf.mxu0
  %v3772 = vadd.f32 %v3579, %v3771
  %3773 = vmatprep.mubr.bf16.mxu0 %v2631
  %3774 = vmatmul.mubr.bf16.gmra.mxu0 %v2630
  %v3775 = vpop.f32.mrf.mxu0
  %v3776 = vadd.f32 %v3583, %v3775
  %v3777 = vpop.f32.mrf.mxu0
  %v3778 = vadd.f32 %v3585, %v3777
  %v3779 = vpop.f32.mrf.mxu0
  %v3780 = vadd.f32 %v3587, %v3779
  %v3781 = vpop.f32.mrf.mxu0
  %v3782 = vadd.f32 %v3589, %v3781
  %3783 = vmatprep.mubr.bf16.mxu0 %v2639
  %3784 = vmatmul.mubr.bf16.gmra.mxu0 %v2638
  %v3785 = vpop.f32.mrf.mxu0
  %v3786 = vadd.f32 %v3593, %v3785
  %v3787 = vpop.f32.mrf.mxu0
  %v3788 = vadd.f32 %v3595, %v3787
  %v3789 = vpop.f32.mrf.mxu0
  %v3790 = vadd.f32 %v3597, %v3789
  %v3791 = vpop.f32.mrf.mxu0
  %v3792 = vadd.f32 %v3599, %v3791
  %3793 = vmatprep.mubr.bf16.mxu0 %v2647
  %3794 = vmatmul.mubr.bf16.gmra.mxu0 %v2646
  %v3795 = vpop.f32.mrf.mxu0
  %v3796 = vadd.f32 %v3603, %v3795
  %v3797 = vpop.f32.mrf.mxu0
  %v3798 = vadd.f32 %v3605, %v3797
  %v3799 = vpop.f32.mrf.mxu0
  %v3800 = vadd.f32 %v3607, %v3799
  %v3801 = vpop.f32.mrf.mxu0
  %v3802 = vadd.f32 %v3609, %v3801
  %3803 = vmatprep.mubr.bf16.mxu0 %v2655
  %3804 = vmatmul.mubr.bf16.gmra.mxu0 %v2654
  %v3805 = vpop.f32.mrf.mxu0
  %v3806 = vadd.f32 %v3613, %v3805
  %v3807 = vpop.f32.mrf.mxu0
  %v3808 = vadd.f32 %v3615, %v3807
  %v3809 = vpop.f32.mrf.mxu0
  %v3810 = vadd.f32 %v3617, %v3809
  %v3811 = vpop.f32.mrf.mxu0
  %v3812 = vadd.f32 %v3619, %v3811
  %3813 = vmatprep.mubr.bf16.mxu0 %v2663
  %3814 = vmatmul.mubr.bf16.gmra.mxu0 %v2662
  %v3815 = vpop.f32.mrf.mxu0
  %v3816 = vadd.f32 %v3623, %v3815
  %v3817 = vpop.f32.mrf.mxu0
  %v3818 = vadd.f32 %v3625, %v3817
  %v3819 = vpop.f32.mrf.mxu0
  %v3820 = vadd.f32 %v3627, %v3819
  %v3821 = vpop.f32.mrf.mxu0
  %v3822 = vadd.f32 %v3629, %v3821
  %3823 = vmatprep.mubr.bf16.mxu0 %v2671
  %3824 = vmatmul.mubr.bf16.gmra.mxu0 %v2670
  %v3825 = vpop.f32.mrf.mxu0
  %v3826 = vadd.f32 %v3633, %v3825
  %v3827 = vpop.f32.mrf.mxu0
  %v3828 = vadd.f32 %v3635, %v3827
  %v3829 = vpop.f32.mrf.mxu0
  %v3830 = vadd.f32 %v3637, %v3829
  %v3831 = vpop.f32.mrf.mxu0
  %v3832 = vadd.f32 %v3639, %v3831
  %3833 = vmatprep.mubr.bf16.mxu0 %v2679
  %3834 = vmatmul.mubr.bf16.gmra.mxu0 %v2678
  %v3835 = vpop.f32.mrf.mxu0
  %v3836 = vadd.f32 %v3643, %v3835
  %v3837 = vpop.f32.mrf.mxu0
  %v3838 = vadd.f32 %v3645, %v3837
  %v3839 = vpop.f32.mrf.mxu0
  %v3840 = vadd.f32 %v3647, %v3839
  %v3841 = vpop.f32.mrf.mxu0
  %v3842 = vadd.f32 %v3649, %v3841
  %3843 = vmatprep.mubr.bf16.mxu0 %v2687
  %3844 = vmatmul.mubr.bf16.gmra.mxu0 %v2686
  %v3845 = vpop.f32.mrf.mxu0
  %v3846 = vadd.f32 %v3653, %v3845
  %v3847 = vpop.f32.mrf.mxu0
  %v3848 = vadd.f32 %v3655, %v3847
  %v3849 = vpop.f32.mrf.mxu0
  %v3850 = vadd.f32 %v3657, %v3849
  %v3851 = vpop.f32.mrf.mxu0
  %v3852 = vadd.f32 %v3659, %v3851
  %3853 = vmatprep.mubr.bf16.mxu0 %v2695
  %3854 = vmatmul.mubr.bf16.gmra.mxu0 %v2694
  %v3855 = vpop.f32.mrf.mxu0
  %v3856 = vadd.f32 %v3663, %v3855
  %v3857 = vpop.f32.mrf.mxu0
  %v3858 = vadd.f32 %v3665, %v3857
  %v3859 = vpop.f32.mrf.mxu0
  %v3860 = vadd.f32 %v3667, %v3859
  %v3861 = vpop.f32.mrf.mxu0
  %v3862 = vadd.f32 %v3669, %v3861
  %3863 = vmatprep.mubr.bf16.mxu0 %v2703
  %3864 = vmatmul.mubr.bf16.gmra.mxu0 %v2702
  %v3865 = vpop.f32.mrf.mxu0
  %v3866 = vadd.f32 %v3673, %v3865
  %v3867 = vpop.f32.mrf.mxu0
  %v3868 = vadd.f32 %v3675, %v3867
  %v3869 = vpop.f32.mrf.mxu0
  %v3870 = vadd.f32 %v3677, %v3869
  %v3871 = vpop.f32.mrf.mxu0
  %v3872 = vadd.f32 %v3679, %v3871
  %3873 = vdwg.mxu0
  %3874 = vmatprep.subr.bf16.mxu0 %v3311
  %3875 = vmatpush1.bf16.msra.mxu0 %v3310
  %3876 = vmatprep.subr.bf16.mxu0 %v3309
  %3877 = vmatpush1.bf16.msra.mxu0 %v3308
  %3878 = vmatprep.subr.bf16.mxu0 %v3307
  %3879 = vmatpush1.bf16.msra.mxu0 %v3306
  %3880 = vmatprep.subr.bf16.mxu0 %v3305
  %3881 = vmatpush1.bf16.msra.mxu0 %v3304
  %3882 = vmatprep.subr.bf16.mxu0 %v3303
  %3883 = vmatpush1.bf16.msra.mxu0 %v3302
  %3884 = vmatprep.subr.bf16.mxu0 %v3301
  %3885 = vmatpush1.bf16.msra.mxu0 %v3300
  %3886 = vmatprep.subr.bf16.mxu0 %v3299
  %3887 = vmatpush1.bf16.msra.mxu0 %v3298
  %3888 = vmatprep.subr.bf16.mxu0 %v3297
  %3889 = vmatpush1.bf16.msra.mxu0 %v3296
  %3890 = vmatprep.subr.bf16.mxu0 %v3327
  %3891 = vmatpush2.bf16.msra.mxu0 %v3326
  %3892 = vmatprep.subr.bf16.mxu0 %v3325
  %3893 = vmatpush2.bf16.msra.mxu0 %v3324
  %3894 = vmatprep.subr.bf16.mxu0 %v3323
  %3895 = vmatpush2.bf16.msra.mxu0 %v3322
  %3896 = vmatprep.subr.bf16.mxu0 %v3321
  %3897 = vmatpush2.bf16.msra.mxu0 %v3320
  %3898 = vmatprep.subr.bf16.mxu0 %v3319
  %3899 = vmatpush2.bf16.msra.mxu0 %v3318
  %3900 = vmatprep.subr.bf16.mxu0 %v3317
  %3901 = vmatpush2.bf16.msra.mxu0 %v3316
  %3902 = vmatprep.subr.bf16.mxu0 %v3315
  %3903 = vmatpush2.bf16.msra.mxu0 %v3314
  %3904 = vmatprep.subr.bf16.mxu0 %v3313
  %3905 = vmatpush2.bf16.msra.mxu0 %v3312
  %3906 = vmatprep.mubr.bf16.mxu0 %v2585
  %3907 = vmatmul.mubr.bf16.gmra.mxu0 %v2584
  %v3908 = vpop.f32.mrf.mxu0
  %v3909 = vadd.f32 %v3716, %v3908
  %v3910 = vpop.f32.mrf.mxu0
  %v3911 = vadd.f32 %v3718, %v3910
  %v3912 = vpop.f32.mrf.mxu0
  %v3913 = vadd.f32 %v3720, %v3912
  %v3914 = vpop.f32.mrf.mxu0
  %v3915 = vadd.f32 %v3722, %v3914
  %3916 = vmatprep.mubr.bf16.mxu0 %v2593
  %3917 = vmatmul.mubr.bf16.gmra.mxu0 %v2592
  %v3918 = vpop.f32.mrf.mxu0
  %v3919 = vadd.f32 %v3726, %v3918
  %v3920 = vpop.f32.mrf.mxu0
  %v3921 = vadd.f32 %v3728, %v3920
  %v3922 = vpop.f32.mrf.mxu0
  %v3923 = vadd.f32 %v3730, %v3922
  %v3924 = vpop.f32.mrf.mxu0
  %v3925 = vadd.f32 %v3732, %v3924
  %3926 = vmatprep.mubr.bf16.mxu0 %v2601
  %3927 = vmatmul.mubr.bf16.gmra.mxu0 %v2600
  %v3928 = vpop.f32.mrf.mxu0
  %v3929 = vadd.f32 %v3736, %v3928
  %v3930 = vpop.f32.mrf.mxu0
  %v3931 = vadd.f32 %v3738, %v3930
  %v3932 = vpop.f32.mrf.mxu0
  %v3933 = vadd.f32 %v3740, %v3932
  %v3934 = vpop.f32.mrf.mxu0
  %v3935 = vadd.f32 %v3742, %v3934
  %3936 = vmatprep.mubr.bf16.mxu0 %v2609
  %3937 = vmatmul.mubr.bf16.gmra.mxu0 %v2608
  %v3938 = vpop.f32.mrf.mxu0
  %v3939 = vadd.f32 %v3746, %v3938
  %v3940 = vpop.f32.mrf.mxu0
  %v3941 = vadd.f32 %v3748, %v3940
  %v3942 = vpop.f32.mrf.mxu0
  %v3943 = vadd.f32 %v3750, %v3942
  %v3944 = vpop.f32.mrf.mxu0
  %v3945 = vadd.f32 %v3752, %v3944
  %3946 = vmatprep.mubr.bf16.mxu0 %v2617
  %3947 = vmatmul.mubr.bf16.gmra.mxu0 %v2616
  %v3948 = vpop.f32.mrf.mxu0
  %v3949 = vadd.f32 %v3756, %v3948
  %v3950 = vpop.f32.mrf.mxu0
  %v3951 = vadd.f32 %v3758, %v3950
  %v3952 = vpop.f32.mrf.mxu0
  %v3953 = vadd.f32 %v3760, %v3952
  %v3954 = vpop.f32.mrf.mxu0
  %v3955 = vadd.f32 %v3762, %v3954
  %3956 = vmatprep.mubr.bf16.mxu0 %v2625
  %3957 = vmatmul.mubr.bf16.gmra.mxu0 %v2624
  %v3958 = vpop.f32.mrf.mxu0
  %v3959 = vadd.f32 %v3766, %v3958
  %v3960 = vpop.f32.mrf.mxu0
  %v3961 = vadd.f32 %v3768, %v3960
  %v3962 = vpop.f32.mrf.mxu0
  %v3963 = vadd.f32 %v3770, %v3962
  %v3964 = vpop.f32.mrf.mxu0
  %v3965 = vadd.f32 %v3772, %v3964
  %3966 = vmatprep.mubr.bf16.mxu0 %v2633
  %3967 = vmatmul.mubr.bf16.gmra.mxu0 %v2632
  %v3968 = vpop.f32.mrf.mxu0
  %v3969 = vadd.f32 %v3776, %v3968
  %v3970 = vpop.f32.mrf.mxu0
  %v3971 = vadd.f32 %v3778, %v3970
  %v3972 = vpop.f32.mrf.mxu0
  %v3973 = vadd.f32 %v3780, %v3972
  %v3974 = vpop.f32.mrf.mxu0
  %v3975 = vadd.f32 %v3782, %v3974
  %3976 = vmatprep.mubr.bf16.mxu0 %v2641
  %3977 = vmatmul.mubr.bf16.gmra.mxu0 %v2640
  %v3978 = vpop.f32.mrf.mxu0
  %v3979 = vadd.f32 %v3786, %v3978
  %v3980 = vpop.f32.mrf.mxu0
  %v3981 = vadd.f32 %v3788, %v3980
  %v3982 = vpop.f32.mrf.mxu0
  %v3983 = vadd.f32 %v3790, %v3982
  %v3984 = vpop.f32.mrf.mxu0
  %v3985 = vadd.f32 %v3792, %v3984
  %3986 = vmatprep.mubr.bf16.mxu0 %v2649
  %3987 = vmatmul.mubr.bf16.gmra.mxu0 %v2648
  %v3988 = vpop.f32.mrf.mxu0
  %v3989 = vadd.f32 %v3796, %v3988
  %v3990 = vpop.f32.mrf.mxu0
  %v3991 = vadd.f32 %v3798, %v3990
  %v3992 = vpop.f32.mrf.mxu0
  %v3993 = vadd.f32 %v3800, %v3992
  %v3994 = vpop.f32.mrf.mxu0
  %v3995 = vadd.f32 %v3802, %v3994
  %3996 = vmatprep.mubr.bf16.mxu0 %v2657
  %3997 = vmatmul.mubr.bf16.gmra.mxu0 %v2656
  %v3998 = vpop.f32.mrf.mxu0
  %v3999 = vadd.f32 %v3806, %v3998
  %v4000 = vpop.f32.mrf.mxu0
  %v4001 = vadd.f32 %v3808, %v4000
  %v4002 = vpop.f32.mrf.mxu0
  %v4003 = vadd.f32 %v3810, %v4002
  %v4004 = vpop.f32.mrf.mxu0
  %v4005 = vadd.f32 %v3812, %v4004
  %4006 = vmatprep.mubr.bf16.mxu0 %v2665
  %4007 = vmatmul.mubr.bf16.gmra.mxu0 %v2664
  %v4008 = vpop.f32.mrf.mxu0
  %v4009 = vadd.f32 %v3816, %v4008
  %v4010 = vpop.f32.mrf.mxu0
  %v4011 = vadd.f32 %v3818, %v4010
  %v4012 = vpop.f32.mrf.mxu0
  %v4013 = vadd.f32 %v3820, %v4012
  %v4014 = vpop.f32.mrf.mxu0
  %v4015 = vadd.f32 %v3822, %v4014
  %4016 = vmatprep.mubr.bf16.mxu0 %v2673
  %4017 = vmatmul.mubr.bf16.gmra.mxu0 %v2672
  %v4018 = vpop.f32.mrf.mxu0
  %v4019 = vadd.f32 %v3826, %v4018
  %v4020 = vpop.f32.mrf.mxu0
  %v4021 = vadd.f32 %v3828, %v4020
  %v4022 = vpop.f32.mrf.mxu0
  %v4023 = vadd.f32 %v3830, %v4022
  %v4024 = vpop.f32.mrf.mxu0
  %v4025 = vadd.f32 %v3832, %v4024
  %4026 = vmatprep.mubr.bf16.mxu0 %v2681
  %4027 = vmatmul.mubr.bf16.gmra.mxu0 %v2680
  %v4028 = vpop.f32.mrf.mxu0
  %v4029 = vadd.f32 %v3836, %v4028
  %v4030 = vpop.f32.mrf.mxu0
  %v4031 = vadd.f32 %v3838, %v4030
  %v4032 = vpop.f32.mrf.mxu0
  %v4033 = vadd.f32 %v3840, %v4032
  %v4034 = vpop.f32.mrf.mxu0
  %v4035 = vadd.f32 %v3842, %v4034
  %4036 = vmatprep.mubr.bf16.mxu0 %v2689
  %4037 = vmatmul.mubr.bf16.gmra.mxu0 %v2688
  %v4038 = vpop.f32.mrf.mxu0
  %v4039 = vadd.f32 %v3846, %v4038
  %v4040 = vpop.f32.mrf.mxu0
  %v4041 = vadd.f32 %v3848, %v4040
  %v4042 = vpop.f32.mrf.mxu0
  %v4043 = vadd.f32 %v3850, %v4042
  %v4044 = vpop.f32.mrf.mxu0
  %v4045 = vadd.f32 %v3852, %v4044
  %4046 = vmatprep.mubr.bf16.mxu0 %v2697
  %4047 = vmatmul.mubr.bf16.gmra.mxu0 %v2696
  %v4048 = vpop.f32.mrf.mxu0
  %v4049 = vadd.f32 %v3856, %v4048
  %v4050 = vpop.f32.mrf.mxu0
  %v4051 = vadd.f32 %v3858, %v4050
  %v4052 = vpop.f32.mrf.mxu0
  %v4053 = vadd.f32 %v3860, %v4052
  %v4054 = vpop.f32.mrf.mxu0
  %v4055 = vadd.f32 %v3862, %v4054
  %4056 = vmatprep.mubr.bf16.mxu0 %v2705
  %4057 = vmatmul.mubr.bf16.gmra.mxu0 %v2704
  %v4058 = vpop.f32.mrf.mxu0
  %v4059 = vadd.f32 %v3866, %v4058
  %v4060 = vpop.f32.mrf.mxu0
  %v4061 = vadd.f32 %v3868, %v4060
  %v4062 = vpop.f32.mrf.mxu0
  %v4063 = vadd.f32 %v3870, %v4062
  %v4064 = vpop.f32.mrf.mxu0
  %v4065 = vadd.f32 %v3872, %v4064
  %4066 = vdwg.mxu0
  %4067 = vmatprep.subr.bf16.mxu0 %v3343
  %4068 = vmatpush1.bf16.msra.mxu0 %v3342
  %4069 = vmatprep.subr.bf16.mxu0 %v3341
  %4070 = vmatpush1.bf16.msra.mxu0 %v3340
  %4071 = vmatprep.subr.bf16.mxu0 %v3339
  %4072 = vmatpush1.bf16.msra.mxu0 %v3338
  %4073 = vmatprep.subr.bf16.mxu0 %v3337
  %4074 = vmatpush1.bf16.msra.mxu0 %v3336
  %4075 = vmatprep.subr.bf16.mxu0 %v3335
  %4076 = vmatpush1.bf16.msra.mxu0 %v3334
  %4077 = vmatprep.subr.bf16.mxu0 %v3333
  %4078 = vmatpush1.bf16.msra.mxu0 %v3332
  %4079 = vmatprep.subr.bf16.mxu0 %v3331
  %4080 = vmatpush1.bf16.msra.mxu0 %v3330
  %4081 = vmatprep.subr.bf16.mxu0 %v3329
  %4082 = vmatpush1.bf16.msra.mxu0 %v3328
  %4083 = vmatprep.subr.bf16.mxu0 %v3359
  %4084 = vmatpush2.bf16.msra.mxu0 %v3358
  %4085 = vmatprep.subr.bf16.mxu0 %v3357
  %4086 = vmatpush2.bf16.msra.mxu0 %v3356
  %4087 = vmatprep.subr.bf16.mxu0 %v3355
  %4088 = vmatpush2.bf16.msra.mxu0 %v3354
  %4089 = vmatprep.subr.bf16.mxu0 %v3353
  %4090 = vmatpush2.bf16.msra.mxu0 %v3352
  %4091 = vmatprep.subr.bf16.mxu0 %v3351
  %4092 = vmatpush2.bf16.msra.mxu0 %v3350
  %4093 = vmatprep.subr.bf16.mxu0 %v3349
  %4094 = vmatpush2.bf16.msra.mxu0 %v3348
  %4095 = vmatprep.subr.bf16.mxu0 %v3347
  %4096 = vmatpush2.bf16.msra.mxu0 %v3346
  %4097 = vmatprep.subr.bf16.mxu0 %v3345
  %4098 = vmatpush2.bf16.msra.mxu0 %v3344
  %4099 = vmatprep.mubr.bf16.mxu0 %v2587
  %4100 = vmatmul.mubr.bf16.gmra.mxu0 %v2586
  %v4101 = vpop.f32.mrf.mxu0
  %v4102 = vadd.f32 %v3909, %v4101
  %v4103 = vpop.f32.mrf.mxu0
  %v4104 = vadd.f32 %v3911, %v4103
  %v4105 = vpop.f32.mrf.mxu0
  %v4106 = vadd.f32 %v3913, %v4105
  %v4107 = vpop.f32.mrf.mxu0
  %v4108 = vadd.f32 %v3915, %v4107
  %4109 = vmatprep.mubr.bf16.mxu0 %v2595
  %4110 = vmatmul.mubr.bf16.gmra.mxu0 %v2594
  %v4111 = vpop.f32.mrf.mxu0
  %v4112 = vadd.f32 %v3919, %v4111
  %v4113 = vpop.f32.mrf.mxu0
  %v4114 = vadd.f32 %v3921, %v4113
  %v4115 = vpop.f32.mrf.mxu0
  %v4116 = vadd.f32 %v3923, %v4115
  %v4117 = vpop.f32.mrf.mxu0
  %v4118 = vadd.f32 %v3925, %v4117
  %4119 = vmatprep.mubr.bf16.mxu0 %v2603
  %4120 = vmatmul.mubr.bf16.gmra.mxu0 %v2602
  %v4121 = vpop.f32.mrf.mxu0
  %v4122 = vadd.f32 %v3929, %v4121
  %v4123 = vpop.f32.mrf.mxu0
  %v4124 = vadd.f32 %v3931, %v4123
  %v4125 = vpop.f32.mrf.mxu0
  %v4126 = vadd.f32 %v3933, %v4125
  %v4127 = vpop.f32.mrf.mxu0
  %v4128 = vadd.f32 %v3935, %v4127
  %4129 = vmatprep.mubr.bf16.mxu0 %v2611
  %4130 = vmatmul.mubr.bf16.gmra.mxu0 %v2610
  %v4131 = vpop.f32.mrf.mxu0
  %v4132 = vadd.f32 %v3939, %v4131
  %v4133 = vpop.f32.mrf.mxu0
  %v4134 = vadd.f32 %v3941, %v4133
  %v4135 = vpop.f32.mrf.mxu0
  %v4136 = vadd.f32 %v3943, %v4135
  %v4137 = vpop.f32.mrf.mxu0
  %v4138 = vadd.f32 %v3945, %v4137
  %4139 = vmatprep.mubr.bf16.mxu0 %v2619
  %4140 = vmatmul.mubr.bf16.gmra.mxu0 %v2618
  %v4141 = vpop.f32.mrf.mxu0
  %v4142 = vadd.f32 %v3949, %v4141
  %v4143 = vpop.f32.mrf.mxu0
  %v4144 = vadd.f32 %v3951, %v4143
  %v4145 = vpop.f32.mrf.mxu0
  %v4146 = vadd.f32 %v3953, %v4145
  %v4147 = vpop.f32.mrf.mxu0
  %v4148 = vadd.f32 %v3955, %v4147
  %4149 = vmatprep.mubr.bf16.mxu0 %v2627
  %4150 = vmatmul.mubr.bf16.gmra.mxu0 %v2626
  %v4151 = vpop.f32.mrf.mxu0
  %v4152 = vadd.f32 %v3959, %v4151
  %v4153 = vpop.f32.mrf.mxu0
  %v4154 = vadd.f32 %v3961, %v4153
  %v4155 = vpop.f32.mrf.mxu0
  %v4156 = vadd.f32 %v3963, %v4155
  %v4157 = vpop.f32.mrf.mxu0
  %v4158 = vadd.f32 %v3965, %v4157
  %4159 = vmatprep.mubr.bf16.mxu0 %v2635
  %4160 = vmatmul.mubr.bf16.gmra.mxu0 %v2634
  %v4161 = vpop.f32.mrf.mxu0
  %v4162 = vadd.f32 %v3969, %v4161
  %v4163 = vpop.f32.mrf.mxu0
  %v4164 = vadd.f32 %v3971, %v4163
  %v4165 = vpop.f32.mrf.mxu0
  %v4166 = vadd.f32 %v3973, %v4165
  %v4167 = vpop.f32.mrf.mxu0
  %v4168 = vadd.f32 %v3975, %v4167
  %4169 = vmatprep.mubr.bf16.mxu0 %v2643
  %4170 = vmatmul.mubr.bf16.gmra.mxu0 %v2642
  %v4171 = vpop.f32.mrf.mxu0
  %v4172 = vadd.f32 %v3979, %v4171
  %v4173 = vpop.f32.mrf.mxu0
  %v4174 = vadd.f32 %v3981, %v4173
  %v4175 = vpop.f32.mrf.mxu0
  %v4176 = vadd.f32 %v3983, %v4175
  %v4177 = vpop.f32.mrf.mxu0
  %v4178 = vadd.f32 %v3985, %v4177
  %4179 = vmatprep.mubr.bf16.mxu0 %v2651
  %4180 = vmatmul.mubr.bf16.gmra.mxu0 %v2650
  %v4181 = vpop.f32.mrf.mxu0
  %v4182 = vadd.f32 %v3989, %v4181
  %v4183 = vpop.f32.mrf.mxu0
  %v4184 = vadd.f32 %v3991, %v4183
  %v4185 = vpop.f32.mrf.mxu0
  %v4186 = vadd.f32 %v3993, %v4185
  %v4187 = vpop.f32.mrf.mxu0
  %v4188 = vadd.f32 %v3995, %v4187
  %4189 = vmatprep.mubr.bf16.mxu0 %v2659
  %4190 = vmatmul.mubr.bf16.gmra.mxu0 %v2658
  %v4191 = vpop.f32.mrf.mxu0
  %v4192 = vadd.f32 %v3999, %v4191
  %v4193 = vpop.f32.mrf.mxu0
  %v4194 = vadd.f32 %v4001, %v4193
  %v4195 = vpop.f32.mrf.mxu0
  %v4196 = vadd.f32 %v4003, %v4195
  %v4197 = vpop.f32.mrf.mxu0
  %v4198 = vadd.f32 %v4005, %v4197
  %4199 = vmatprep.mubr.bf16.mxu0 %v2667
  %4200 = vmatmul.mubr.bf16.gmra.mxu0 %v2666
  %v4201 = vpop.f32.mrf.mxu0
  %v4202 = vadd.f32 %v4009, %v4201
  %v4203 = vpop.f32.mrf.mxu0
  %v4204 = vadd.f32 %v4011, %v4203
  %v4205 = vpop.f32.mrf.mxu0
  %v4206 = vadd.f32 %v4013, %v4205
  %v4207 = vpop.f32.mrf.mxu0
  %v4208 = vadd.f32 %v4015, %v4207
  %4209 = vmatprep.mubr.bf16.mxu0 %v2675
  %4210 = vmatmul.mubr.bf16.gmra.mxu0 %v2674
  %v4211 = vpop.f32.mrf.mxu0
  %v4212 = vadd.f32 %v4019, %v4211
  %v4213 = vpop.f32.mrf.mxu0
  %v4214 = vadd.f32 %v4021, %v4213
  %v4215 = vpop.f32.mrf.mxu0
  %v4216 = vadd.f32 %v4023, %v4215
  %v4217 = vpop.f32.mrf.mxu0
  %v4218 = vadd.f32 %v4025, %v4217
  %4219 = vmatprep.mubr.bf16.mxu0 %v2683
  %4220 = vmatmul.mubr.bf16.gmra.mxu0 %v2682
  %v4221 = vpop.f32.mrf.mxu0
  %v4222 = vadd.f32 %v4029, %v4221
  %v4223 = vpop.f32.mrf.mxu0
  %v4224 = vadd.f32 %v4031, %v4223
  %v4225 = vpop.f32.mrf.mxu0
  %v4226 = vadd.f32 %v4033, %v4225
  %v4227 = vpop.f32.mrf.mxu0
  %v4228 = vadd.f32 %v4035, %v4227
  %4229 = vmatprep.mubr.bf16.mxu0 %v2691
  %4230 = vmatmul.mubr.bf16.gmra.mxu0 %v2690
  %v4231 = vpop.f32.mrf.mxu0
  %v4232 = vadd.f32 %v4039, %v4231
  %v4233 = vpop.f32.mrf.mxu0
  %v4234 = vadd.f32 %v4041, %v4233
  %v4235 = vpop.f32.mrf.mxu0
  %v4236 = vadd.f32 %v4043, %v4235
  %v4237 = vpop.f32.mrf.mxu0
  %v4238 = vadd.f32 %v4045, %v4237
  %4239 = vmatprep.mubr.bf16.mxu0 %v2699
  %4240 = vmatmul.mubr.bf16.gmra.mxu0 %v2698
  %v4241 = vpop.f32.mrf.mxu0
  %v4242 = vadd.f32 %v4049, %v4241
  %v4243 = vpop.f32.mrf.mxu0
  %v4244 = vadd.f32 %v4051, %v4243
  %v4245 = vpop.f32.mrf.mxu0
  %v4246 = vadd.f32 %v4053, %v4245
  %v4247 = vpop.f32.mrf.mxu0
  %v4248 = vadd.f32 %v4055, %v4247
  %4249 = vmatprep.mubr.bf16.mxu0 %v2707
  %4250 = vmatmul.mubr.bf16.gmra.mxu0 %v2706
  %v4251 = vpop.f32.mrf.mxu0
  %v4252 = vadd.f32 %v4059, %v4251
  %v4253 = vpop.f32.mrf.mxu0
  %v4254 = vadd.f32 %v4061, %v4253
  %v4255 = vpop.f32.mrf.mxu0
  %v4256 = vadd.f32 %v4063, %v4255
  %v4257 = vpop.f32.mrf.mxu0
  %v4258 = vadd.f32 %v4065, %v4257
  %4259 = vdwg.mxu0
  %v4260 = vmax.f32 %v4102, 0.0
  %v4261 = vmax.f32 %v4104, 0.0
  %v4262 = vmax.f32 %v4106, 0.0
  %v4263 = vmax.f32 %v4108, 0.0
  %v4264 = vmax.f32 %v4112, 0.0
  %v4265 = vmax.f32 %v4114, 0.0
  %v4266 = vmax.f32 %v4116, 0.0
  %v4267 = vmax.f32 %v4118, 0.0
  %v4268 = vmax.f32 %v4122, 0.0
  %v4269 = vmax.f32 %v4124, 0.0
  %v4270 = vmax.f32 %v4126, 0.0
  %v4271 = vmax.f32 %v4128, 0.0
  %v4272 = vmax.f32 %v4132, 0.0
  %v4273 = vmax.f32 %v4134, 0.0
  %v4274 = vmax.f32 %v4136, 0.0
  %v4275 = vmax.f32 %v4138, 0.0
  %v4276 = vmax.f32 %v4142, 0.0
  %v4277 = vmax.f32 %v4144, 0.0
  %v4278 = vmax.f32 %v4146, 0.0
  %v4279 = vmax.f32 %v4148, 0.0
  %v4280 = vmax.f32 %v4152, 0.0
  %v4281 = vmax.f32 %v4154, 0.0
  %v4282 = vmax.f32 %v4156, 0.0
  %v4283 = vmax.f32 %v4158, 0.0
  %v4284 = vmax.f32 %v4162, 0.0
  %v4285 = vmax.f32 %v4164, 0.0
  %v4286 = vmax.f32 %v4166, 0.0
  %v4287 = vmax.f32 %v4168, 0.0
  %v4288 = vmax.f32 %v4172, 0.0
  %v4289 = vmax.f32 %v4174, 0.0
  %v4290 = vmax.f32 %v4176, 0.0
  %v4291 = vmax.f32 %v4178, 0.0
  %v4292 = vmax.f32 %v4182, 0.0
  %v4293 = vmax.f32 %v4184, 0.0
  %v4294 = vmax.f32 %v4186, 0.0
  %v4295 = vmax.f32 %v4188, 0.0
  %v4296 = vmax.f32 %v4192, 0.0
  %v4297 = vmax.f32 %v4194, 0.0
  %v4298 = vmax.f32 %v4196, 0.0
  %v4299 = vmax.f32 %v4198, 0.0
  %v4300 = vmax.f32 %v4202, 0.0
  %v4301 = vmax.f32 %v4204, 0.0
  %v4302 = vmax.f32 %v4206, 0.0
  %v4303 = vmax.f32 %v4208, 0.0
  %v4304 = vmax.f32 %v4212, 0.0
  %v4305 = vmax.f32 %v4214, 0.0
  %v4306 = vmax.f32 %v4216, 0.0
  %v4307 = vmax.f32 %v4218, 0.0
  %v4308 = vmax.f32 %v4222, 0.0
  %v4309 = vmax.f32 %v4224, 0.0
  %v4310 = vmax.f32 %v4226, 0.0
  %v4311 = vmax.f32 %v4228, 0.0
  %v4312 = vmax.f32 %v4232, 0.0
  %v4313 = vmax.f32 %v4234, 0.0
  %v4314 = vmax.f32 %v4236, 0.0
  %v4315 = vmax.f32 %v4238, 0.0
  %v4316 = vmax.f32 %v4242, 0.0
  %v4317 = vmax.f32 %v4244, 0.0
  %v4318 = vmax.f32 %v4246, 0.0
  %v4319 = vmax.f32 %v4248, 0.0
  %v4320 = vmax.f32 %v4252, 0.0
  %v4321 = vmax.f32 %v4254, 0.0
  %v4322 = vmax.f32 %v4256, 0.0
  %v4323 = vmax.f32 %v4258, 0.0
  %v4324 = vpack.c.bf16 %v4262, %v4260
  %v4325 = vpack.c.bf16 %v4263, %v4261
  %v4326 = vpack.c.bf16 %v4266, %v4264
  %v4327 = vpack.c.bf16 %v4267, %v4265
  %v4328 = vpack.c.bf16 %v4270, %v4268
  %v4329 = vpack.c.bf16 %v4271, %v4269
  %v4330 = vpack.c.bf16 %v4274, %v4272
  %v4331 = vpack.c.bf16 %v4275, %v4273
  %v4332 = vpack.c.bf16 %v4278, %v4276
  %v4333 = vpack.c.bf16 %v4279, %v4277
  %v4334 = vpack.c.bf16 %v4282, %v4280
  %v4335 = vpack.c.bf16 %v4283, %v4281
  %v4336 = vpack.c.bf16 %v4286, %v4284
  %v4337 = vpack.c.bf16 %v4287, %v4285
  %v4338 = vpack.c.bf16 %v4290, %v4288
  %v4339 = vpack.c.bf16 %v4291, %v4289
  %v4340 = vpack.c.bf16 %v4294, %v4292
  %v4341 = vpack.c.bf16 %v4295, %v4293
  %v4342 = vpack.c.bf16 %v4298, %v4296
  %v4343 = vpack.c.bf16 %v4299, %v4297
  %v4344 = vpack.c.bf16 %v4302, %v4300
  %v4345 = vpack.c.bf16 %v4303, %v4301
  %v4346 = vpack.c.bf16 %v4306, %v4304
  %v4347 = vpack.c.bf16 %v4307, %v4305
  %v4348 = vpack.c.bf16 %v4310, %v4308
  %v4349 = vpack.c.bf16 %v4311, %v4309
  %v4350 = vpack.c.bf16 %v4314, %v4312
  %v4351 = vpack.c.bf16 %v4315, %v4313
  %v4352 = vpack.c.bf16 %v4318, %v4316
  %v4353 = vpack.c.bf16 %v4319, %v4317
  %v4354 = vpack.c.bf16 %v4322, %v4320
  %v4355 = vpack.c.bf16 %v4323, %v4321
  %v4356 = vld [vmem:[%s7] sm:$0xf]
  %v4357 = vld [vmem:[%s7 + $0x4] sm:$0xf]
  %v4358 = vld [vmem:[%s7 + $0x8] sm:$0xf]
  %v4359 = vld [vmem:[%s7 + $0xc] sm:$0xf]
  %v4360 = vld [vmem:[%s7 + $0x10] sm:$0xf]
  %v4361 = vld [vmem:[%s7 + $0x14] sm:$0xf]
  %v4362 = vld [vmem:[%s7 + $0x18] sm:$0xf]
  %v4363 = vld [vmem:[%s7 + $0x1c] sm:$0xf]
  %v4364 = vld [vmem:[%s7 + $0x20] sm:$0xf]
  %v4365 = vld [vmem:[%s7 + $0x24] sm:$0xf]
  %v4366 = vld [vmem:[%s7 + $0x28] sm:$0xf]
  %v4367 = vld [vmem:[%s7 + $0x2c] sm:$0xf]
  %v4368 = vld [vmem:[%s7 + $0x30] sm:$0xf]
  %v4369 = vld [vmem:[%s7 + $0x34] sm:$0xf]
  %v4370 = vld [vmem:[%s7 + $0x38] sm:$0xf]
  %v4371 = vld [vmem:[%s7 + $0x3c] sm:$0xf]
  %v4372 = vld [vmem:[%s7 + $0x40] sm:$0xf]
  %v4373 = vld [vmem:[%s7 + $0x44] sm:$0xf]
  %v4374 = vld [vmem:[%s7 + $0x48] sm:$0xf]
  %v4375 = vld [vmem:[%s7 + $0x4c] sm:$0xf]
  %v4376 = vld [vmem:[%s7 + $0x50] sm:$0xf]
  %v4377 = vld [vmem:[%s7 + $0x54] sm:$0xf]
  %v4378 = vld [vmem:[%s7 + $0x58] sm:$0xf]
  %v4379 = vld [vmem:[%s7 + $0x5c] sm:$0xf]
  %v4380 = vld [vmem:[%s7 + $0x60] sm:$0xf]
  %v4381 = vld [vmem:[%s7 + $0x64] sm:$0xf]
  %v4382 = vld [vmem:[%s7 + $0x68] sm:$0xf]
  %v4383 = vld [vmem:[%s7 + $0x6c] sm:$0xf]
  %v4384 = vld [vmem:[%s7 + $0x70] sm:$0xf]
  %v4385 = vld [vmem:[%s7 + $0x74] sm:$0xf]
  %v4386 = vld [vmem:[%s7 + $0x78] sm:$0xf]
  %v4387 = vld [vmem:[%s7 + $0x7c] sm:$0xf]
  %v4388 = vld [vmem:[%s8] sm:$0x1]
  %v4390 = vlaneseq
  %v4391 = vshrl.u32 %v4390, 7
  %v4392 = vsub.s32 0, %v4391
  %v4393 = vrot.slane %v4388, %v4392
  %v4427 = vunpack.c.l.b16 %v4356
  %v4428 = vunpack.c.l.b16 %v4357
  %v4429 = vunpack.c.l.b16 %v4358
  %v4430 = vunpack.c.l.b16 %v4359
  %v4431 = vunpack.c.l.b16 %v4360
  %v4432 = vunpack.c.l.b16 %v4361
  %v4433 = vunpack.c.l.b16 %v4362
  %v4434 = vunpack.c.l.b16 %v4363
  %v4435 = vunpack.c.l.b16 %v4364
  %v4436 = vunpack.c.l.b16 %v4365
  %v4437 = vunpack.c.l.b16 %v4366
  %v4438 = vunpack.c.l.b16 %v4367
  %v4439 = vunpack.c.l.b16 %v4368
  %v4440 = vunpack.c.l.b16 %v4369
  %v4441 = vunpack.c.l.b16 %v4370
  %v4442 = vunpack.c.l.b16 %v4371
  %v4443 = vunpack.c.l.b16 %v4372
  %v4444 = vunpack.c.l.b16 %v4373
  %v4445 = vunpack.c.l.b16 %v4374
  %v4446 = vunpack.c.l.b16 %v4375
  %v4447 = vunpack.c.l.b16 %v4376
  %v4448 = vunpack.c.l.b16 %v4377
  %v4449 = vunpack.c.l.b16 %v4378
  %v4450 = vunpack.c.l.b16 %v4379
  %v4451 = vunpack.c.l.b16 %v4380
  %v4452 = vunpack.c.l.b16 %v4381
  %v4453 = vunpack.c.l.b16 %v4382
  %v4454 = vunpack.c.l.b16 %v4383
  %v4455 = vunpack.c.l.b16 %v4384
  %v4456 = vunpack.c.l.b16 %v4385
  %v4457 = vunpack.c.l.b16 %v4386
  %v4458 = vunpack.c.l.b16 %v4387
  %v4459 = vpack.c.b16 %v4428, %v4427
  %v4460 = vpack.c.b16 %v4430, %v4429
  %v4461 = vpack.c.b16 %v4432, %v4431
  %v4462 = vpack.c.b16 %v4434, %v4433
  %v4463 = vpack.c.b16 %v4436, %v4435
  %v4464 = vpack.c.b16 %v4438, %v4437
  %v4465 = vpack.c.b16 %v4440, %v4439
  %v4466 = vpack.c.b16 %v4442, %v4441
  %v4467 = vpack.c.b16 %v4444, %v4443
  %v4468 = vpack.c.b16 %v4446, %v4445
  %v4469 = vpack.c.b16 %v4448, %v4447
  %v4470 = vpack.c.b16 %v4450, %v4449
  %v4471 = vpack.c.b16 %v4452, %v4451
  %v4472 = vpack.c.b16 %v4454, %v4453
  %v4473 = vpack.c.b16 %v4456, %v4455
  %v4474 = vpack.c.b16 %v4458, %v4457
  %4491 = vmatprep.subr.bf16.mxu0 0
  %4492 = vmatpush1.bf16.msra.mxu0 %v4466
  %4493 = vmatprep.subr.bf16.mxu0 0
  %4494 = vmatpush1.bf16.msra.mxu0 %v4465
  %4495 = vmatprep.subr.bf16.mxu0 0
  %4496 = vmatpush1.bf16.msra.mxu0 %v4464
  %4497 = vmatprep.subr.bf16.mxu0 0
  %4498 = vmatpush1.bf16.msra.mxu0 %v4463
  %4499 = vmatprep.subr.bf16.mxu0 0
  %4500 = vmatpush1.bf16.msra.mxu0 %v4462
  %4501 = vmatprep.subr.bf16.mxu0 0
  %4502 = vmatpush1.bf16.msra.mxu0 %v4461
  %4503 = vmatprep.subr.bf16.mxu0 0
  %4504 = vmatpush1.bf16.msra.mxu0 %v4460
  %4505 = vmatprep.subr.bf16.mxu0 0
  %4506 = vmatpush1.bf16.msra.mxu0 %v4459
  %4507 = vmatprep.subr.bf16.mxu0 0
  %4508 = vmatpush2.bf16.msra.mxu0 %v4474
  %4509 = vmatprep.subr.bf16.mxu0 0
  %4510 = vmatpush2.bf16.msra.mxu0 %v4473
  %4511 = vmatprep.subr.bf16.mxu0 0
  %4512 = vmatpush2.bf16.msra.mxu0 %v4472
  %4513 = vmatprep.subr.bf16.mxu0 0
  %4514 = vmatpush2.bf16.msra.mxu0 %v4471
  %4515 = vmatprep.subr.bf16.mxu0 0
  %4516 = vmatpush2.bf16.msra.mxu0 %v4470
  %4517 = vmatprep.subr.bf16.mxu0 0
  %4518 = vmatpush2.bf16.msra.mxu0 %v4469
  %4519 = vmatprep.subr.bf16.mxu0 0
  %4520 = vmatpush2.bf16.msra.mxu0 %v4468
  %4521 = vmatprep.subr.bf16.mxu0 0
  %4522 = vmatpush2.bf16.msra.mxu0 %v4467
  %4523 = vmatprep.mubr.bf16.mxu0 %v4325
  %4524 = vmatmul.mubr.bf16.gmra.mxu0 %v4324
  %v4525 = vpop.f32.mrf.mxu0
  %v4526 = vadd.f32 %v4393, %v4525
  %v4527 = vpop.f32.mrf.mxu0
  %v4528 = vpop.f32.mrf.mxu0
  %v4529 = vadd.f32 %v4393, %v4528
  %v4530 = vpop.f32.mrf.mxu0
  %4531 = vmatprep.mubr.bf16.mxu0 %v4327
  %4532 = vmatmul.mubr.bf16.gmra.mxu0 %v4326
  %v4533 = vpop.f32.mrf.mxu0
  %v4534 = vadd.f32 %v4393, %v4533
  %v4535 = vpop.f32.mrf.mxu0
  %v4536 = vpop.f32.mrf.mxu0
  %v4537 = vadd.f32 %v4393, %v4536
  %v4538 = vpop.f32.mrf.mxu0
  %4539 = vmatprep.mubr.bf16.mxu0 %v4329
  %4540 = vmatmul.mubr.bf16.gmra.mxu0 %v4328
  %v4541 = vpop.f32.mrf.mxu0
  %v4542 = vadd.f32 %v4393, %v4541
  %v4543 = vpop.f32.mrf.mxu0
  %v4544 = vpop.f32.mrf.mxu0
  %v4545 = vadd.f32 %v4393, %v4544
  %v4546 = vpop.f32.mrf.mxu0
  %4547 = vmatprep.mubr.bf16.mxu0 %v4331
  %4548 = vmatmul.mubr.bf16.gmra.mxu0 %v4330
  %v4549 = vpop.f32.mrf.mxu0
  %v4550 = vadd.f32 %v4393, %v4549
  %v4551 = vpop.f32.mrf.mxu0
  %v4552 = vpop.f32.mrf.mxu0
  %v4553 = vadd.f32 %v4393, %v4552
  %v4554 = vpop.f32.mrf.mxu0
  %4555 = vmatprep.mubr.bf16.mxu0 %v4333
  %4556 = vmatmul.mubr.bf16.gmra.mxu0 %v4332
  %v4557 = vpop.f32.mrf.mxu0
  %v4558 = vadd.f32 %v4393, %v4557
  %v4559 = vpop.f32.mrf.mxu0
  %v4560 = vpop.f32.mrf.mxu0
  %v4561 = vadd.f32 %v4393, %v4560
  %v4562 = vpop.f32.mrf.mxu0
  %4563 = vmatprep.mubr.bf16.mxu0 %v4335
  %4564 = vmatmul.mubr.bf16.gmra.mxu0 %v4334
  %v4565 = vpop.f32.mrf.mxu0
  %v4566 = vadd.f32 %v4393, %v4565
  %v4567 = vpop.f32.mrf.mxu0
  %v4568 = vpop.f32.mrf.mxu0
  %v4569 = vadd.f32 %v4393, %v4568
  %v4570 = vpop.f32.mrf.mxu0
  %4571 = vmatprep.mubr.bf16.mxu0 %v4337
  %4572 = vmatmul.mubr.bf16.gmra.mxu0 %v4336
  %v4573 = vpop.f32.mrf.mxu0
  %v4574 = vadd.f32 %v4393, %v4573
  %v4575 = vpop.f32.mrf.mxu0
  %v4576 = vpop.f32.mrf.mxu0
  %v4577 = vadd.f32 %v4393, %v4576
  %v4578 = vpop.f32.mrf.mxu0
  %4579 = vmatprep.mubr.bf16.mxu0 %v4339
  %4580 = vmatmul.mubr.bf16.gmra.mxu0 %v4338
  %v4581 = vpop.f32.mrf.mxu0
  %v4582 = vadd.f32 %v4393, %v4581
  %v4583 = vpop.f32.mrf.mxu0
  %v4584 = vpop.f32.mrf.mxu0
  %v4585 = vadd.f32 %v4393, %v4584
  %v4586 = vpop.f32.mrf.mxu0
  %4587 = vmatprep.mubr.bf16.mxu0 %v4341
  %4588 = vmatmul.mubr.bf16.gmra.mxu0 %v4340
  %v4589 = vpop.f32.mrf.mxu0
  %v4590 = vadd.f32 %v4393, %v4589
  %v4591 = vpop.f32.mrf.mxu0
  %v4592 = vpop.f32.mrf.mxu0
  %v4593 = vadd.f32 %v4393, %v4592
  %v4594 = vpop.f32.mrf.mxu0
  %4595 = vmatprep.mubr.bf16.mxu0 %v4343
  %4596 = vmatmul.mubr.bf16.gmra.mxu0 %v4342
  %v4597 = vpop.f32.mrf.mxu0
  %v4598 = vadd.f32 %v4393, %v4597
  %v4599 = vpop.f32.mrf.mxu0
  %v4600 = vpop.f32.mrf.mxu0
  %v4601 = vadd.f32 %v4393, %v4600
  %v4602 = vpop.f32.mrf.mxu0
  %4603 = vmatprep.mubr.bf16.mxu0 %v4345
  %4604 = vmatmul.mubr.bf16.gmra.mxu0 %v4344
  %v4605 = vpop.f32.mrf.mxu0
  %v4606 = vadd.f32 %v4393, %v4605
  %v4607 = vpop.f32.mrf.mxu0
  %v4608 = vpop.f32.mrf.mxu0
  %v4609 = vadd.f32 %v4393, %v4608
  %v4610 = vpop.f32.mrf.mxu0
  %4611 = vmatprep.mubr.bf16.mxu0 %v4347
  %4612 = vmatmul.mubr.bf16.gmra.mxu0 %v4346
  %v4613 = vpop.f32.mrf.mxu0
  %v4614 = vadd.f32 %v4393, %v4613
  %v4615 = vpop.f32.mrf.mxu0
  %v4616 = vpop.f32.mrf.mxu0
  %v4617 = vadd.f32 %v4393, %v4616
  %v4618 = vpop.f32.mrf.mxu0
  %4619 = vmatprep.mubr.bf16.mxu0 %v4349
  %4620 = vmatmul.mubr.bf16.gmra.mxu0 %v4348
  %v4621 = vpop.f32.mrf.mxu0
  %v4622 = vadd.f32 %v4393, %v4621
  %v4623 = vpop.f32.mrf.mxu0
  %v4624 = vpop.f32.mrf.mxu0
  %v4625 = vadd.f32 %v4393, %v4624
  %v4626 = vpop.f32.mrf.mxu0
  %4627 = vmatprep.mubr.bf16.mxu0 %v4351
  %4628 = vmatmul.mubr.bf16.gmra.mxu0 %v4350
  %v4629 = vpop.f32.mrf.mxu0
  %v4630 = vadd.f32 %v4393, %v4629
  %v4631 = vpop.f32.mrf.mxu0
  %v4632 = vpop.f32.mrf.mxu0
  %v4633 = vadd.f32 %v4393, %v4632
  %v4634 = vpop.f32.mrf.mxu0
  %4635 = vmatprep.mubr.bf16.mxu0 %v4353
  %4636 = vmatmul.mubr.bf16.gmra.mxu0 %v4352
  %v4637 = vpop.f32.mrf.mxu0
  %v4638 = vadd.f32 %v4393, %v4637
  %v4639 = vpop.f32.mrf.mxu0
  %v4640 = vpop.f32.mrf.mxu0
  %v4641 = vadd.f32 %v4393, %v4640
  %v4642 = vpop.f32.mrf.mxu0
  %4643 = vmatprep.mubr.bf16.mxu0 %v4355
  %4644 = vmatmul.mubr.bf16.gmra.mxu0 %v4354
  %v4645 = vpop.f32.mrf.mxu0
  %v4646 = vadd.f32 %v4393, %v4645
  %v4647 = vpop.f32.mrf.mxu0
  %v4648 = vpop.f32.mrf.mxu0
  %v4649 = vadd.f32 %v4393, %v4648
  %v4650 = vpop.f32.mrf.mxu0
  %4651 = vdwg.mxu0
  %4652 = vst [vmem:[%s9] sm:$0xff] %v4526
  %4653 = vst [vmem:[%s9 + $0x8] sm:$0xff] %v4529
  %4654 = vst [vmem:[%s9 + $0x10] sm:$0xff] %v4534
  %4655 = vst [vmem:[%s9 + $0x18] sm:$0xff] %v4537
  %4656 = vst [vmem:[%s9 + $0x20] sm:$0xff] %v4542
  %4657 = vst [vmem:[%s9 + $0x28] sm:$0xff] %v4545
  %4658 = vst [vmem:[%s9 + $0x30] sm:$0xff] %v4550
  %4659 = vst [vmem:[%s9 + $0x38] sm:$0xff] %v4553
  %4660 = vst [vmem:[%s9 + $0x40] sm:$0xff] %v4558
  %4661 = vst [vmem:[%s9 + $0x48] sm:$0xff] %v4561
  %4662 = vst [vmem:[%s9 + $0x50] sm:$0xff] %v4566
  %4663 = vst [vmem:[%s9 + $0x58] sm:$0xff] %v4569
  %4664 = vst [vmem:[%s9 + $0x60] sm:$0xff] %v4574
  %4665 = vst [vmem:[%s9 + $0x68] sm:$0xff] %v4577
  %4666 = vst [vmem:[%s9 + $0x70] sm:$0xff] %v4582
  %4667 = vst [vmem:[%s9 + $0x78] sm:$0xff] %v4585
  %4668 = vst [vmem:[%s9 + $0x80] sm:$0xff] %v4590
  %4669 = vst [vmem:[%s9 + $0x88] sm:$0xff] %v4593
  %4670 = vst [vmem:[%s9 + $0x90] sm:$0xff] %v4598
  %4671 = vst [vmem:[%s9 + $0x98] sm:$0xff] %v4601
  %4672 = vst [vmem:[%s9 + $0xa0] sm:$0xff] %v4606
  %4673 = vst [vmem:[%s9 + $0xa8] sm:$0xff] %v4609
  %4674 = vst [vmem:[%s9 + $0xb0] sm:$0xff] %v4614
  %4675 = vst [vmem:[%s9 + $0xb8] sm:$0xff] %v4617
  %4676 = vst [vmem:[%s9 + $0xc0] sm:$0xff] %v4622
  %4677 = vst [vmem:[%s9 + $0xc8] sm:$0xff] %v4625
  %4678 = vst [vmem:[%s9 + $0xd0] sm:$0xff] %v4630
  %4679 = vst [vmem:[%s9 + $0xd8] sm:$0xff] %v4633
  %4680 = vst [vmem:[%s9 + $0xe0] sm:$0xff] %v4638
  %4681 = vst [vmem:[%s9 + $0xe8] sm:$0xff] %v4641
  %4682 = vst [vmem:[%s9 + $0xf0] sm:$0xff] %v4646
  %4683 = vst [vmem:[%s9 + $0xf8] sm:$0xff] %v4649
  // Predicated region
  $region38: #{dora_net_forward.1} parent=0 // pred_check
    _
  $region39: #{dora_net_forward.1} parent=0 // pred_check_branch
    %4685 = sbr.rel (0) target = $region41
  $region40: #{dora_net_forward.1} parent=0 // pred_region
    _
  $region41: #{dora_net_forward.1} parent=0 // pred_fallthru
    _
  // Predicated region
  $region42: #{dora_net_forward.1} parent=0 // pred_check
    _
  $region43: #{dora_net_forward.1} parent=0 // pred_check_branch
    %4687 = sbr.rel (0) target = $region45
  $region44: #{dora_net_forward.1} parent=0 // pred_region
    _
  $region45: #{dora_net_forward.1} parent=0 // pred_fallthru
    _

</llo_original>
